<compile_context>
chip_gen: v5e
topology: v5e:2x2
jax: 0.10.0
libtpu: 0.0.40
codegen_flags: <defaults>
</compile_context>

<pallas_src>
import functools

import jax
import jax.numpy as jnp
from jax import lax
from jax.experimental import pallas as pl
from jax.experimental.pallas import tpu as pltpu

# ---------------------------------------------------------------------------
# Stand-ins for src/.../constants.py (deterministic, defined in-script).
# ---------------------------------------------------------------------------
N_AMINO_ACIDS = 20
N_TOKENS = N_AMINO_ACIDS + 1          # len(AMINO_ACID_VOCABULARY) + 1 = 21
PAD_TOKEN_VAL = 0
CLS_TOKEN_VAL = 21
MASK_TOKEN_VAL = 22
EMB_VOCAB = MASK_TOKEN_VAL + 1        # embedding rows needed (ids 0..22)

MASK_PROB = 0.15
RANDOM_MASK_PROB = 0.10
NO_CHANGE_MASK_PROB = 0.10

ENCODER_DIM = 32                      # D
V_PAD = 32                            # one-hot width; column V_PAD-1 = mask-bias flag
N_PAD = 128                           # lane-dense logits width (sliced to 21 outside)
MAX_ROWS_PER_STEP = 8192              # caps TILE_B*S (double-buffered f32 logits block)

# 24-bit integer Bernoulli thresholds (single hash draw per test, no float compare)
_MASK_THR = int(MASK_PROB * (1 << 24))
_KEEP_THR = int(NO_CHANGE_MASK_PROB * (1 << 24))
_RAND_THR = int(RANDOM_MASK_PROB * (1 << 24))

_GOLD = -1640531527     # 0x9E3779B9 as int32
_M1 = 0x7FEB352D
_M2 = -2073254261       # 0x846CA68B as int32


def _lsr(x, k):
    """Logical right shift on int32 (arithmetic shift + mask) — portable."""
    return jnp.bitwise_and(jnp.right_shift(x, k), jnp.int32((1 << (32 - k)) - 1))


def _mix32(x):
    """lowbias32 integer hash; pure int32 VPU ops (no TPU-only PRNG primitives)."""
    x = jnp.bitwise_xor(x, _lsr(x, 16))
    x = x * jnp.int32(_M1)
    x = jnp.bitwise_xor(x, _lsr(x, 15))
    x = x * jnp.int32(_M2)
    x = jnp.bitwise_xor(x, _lsr(x, 16))
    return x


# ---------------------------------------------------------------------------
# Single fused kernel: masking + (embedding ∘ encoder) via one-hot matmul + head.
# TODO(synk): encoder_model is an injected dependency in the original module; it
# is replaced by a deterministic single-layer tanh encoder that also consumes the
# mask (as an additive per-position bias), matching the (X, mask) -> seq_emb API.
# The encoder's input projection is folded into the embedding table at call time.
# ---------------------------------------------------------------------------
def _mlm_kernel(seed_ref, seq_ref, emb_enc_ref, b_enc_ref, w_out_ref, b_out_ref,
                logits_ref, label_ref, oh_ref, *, tile_b, seq_len):
    S = seq_len
    seq = seq_ref[0]                                         # (TILE_B, S) int32, lane-dense

    # ---- masking: hash of (seed, global flat token index), lane-dense vregs ----
    b_idx = lax.broadcasted_iota(jnp.int32, (tile_b, S), 0)
    s_idx = lax.broadcasted_iota(jnp.int32, (tile_b, S), 1)
    b_glob = pl.program_id(0) * tile_b + b_idx
    flat = b_glob * S + s_idx
    base = flat * 4 + seed_ref[0] * jnp.int32(_GOLD)
    u0 = _mix32(base)
    u1 = _mix32(base + 1)
    u2 = _mix32(base + 2)
    u3 = _mix32(base + 3)

    def bern(u, thr):
        return jnp.bitwise_and(u, jnp.int32(0x00FFFFFF)) < jnp.int32(thr)

    init_mask = bern(u0, _MASK_THR)
    init_mask = jnp.logical_and(init_mask, seq != PAD_TOKEN_VAL)
    init_mask = jnp.logical_and(init_mask, seq != CLS_TOKEN_VAL)
    unchanged = jnp.logical_and(init_mask, bern(u1, _KEEP_THR))
    random_m = jnp.logical_and(init_mask, bern(u2, _RAND_THR))

    # random replacement tokens, uniform in [1, N_TOKENS) == [1, 20]
    r24 = jnp.bitwise_and(u3, jnp.int32(0x00FFFFFF))
    rand_tok = jnp.right_shift(r24 * (N_TOKENS - 1), 24) + 1

    seq_m = jnp.where(random_m, rand_tok, seq)               # random wins (torch order)
    fill = jnp.logical_and(
        init_mask,
        jnp.logical_and(jnp.logical_not(random_m), jnp.logical_not(unchanged)))
    seq_m = jnp.where(fill, jnp.int32(MASK_TOKEN_VAL), seq_m)
    label_ref[0] = jnp.where(init_mask, seq, jnp.int32(PAD_TOKEN_VAL))  # lane-dense store

    # ---- build the (TILE_B*S, V_PAD) one-hot (mask flag in column V_PAD-1) ----
    # One small XLU transpose moves the token tile to row-per-token form; the loop
    # only fills the VMEM scratch (each iteration's temporaries die at the store),
    # so the two matmuls below run once per grid step with M = TILE_B*S.
    seq_t = jnp.transpose(seq_m)                             # (S, TILE_B) int32
    mask_t = jnp.transpose(init_mask.astype(jnp.float32))    # (S, TILE_B) f32
    vocab_iota = lax.broadcasted_iota(jnp.int32, (S, V_PAD), 1)
    is_bias_col = vocab_iota == jnp.int32(V_PAD - 1)
    for b in range(tile_b):                                  # static: scratch fill only
        oh = jnp.where(is_bias_col, mask_t[:, b:b + 1],
                       (seq_t[:, b:b + 1] == vocab_iota).astype(jnp.float32))
        oh_ref[b * S:(b + 1) * S, :] = oh.astype(jnp.bfloat16)

    # ---- batched (folded) encoder + output projection, bf16 MXU / f32 accum ----
    onehot = oh_ref[...]                                     # (TILE_B*S, V_PAD) bf16
    h = jnp.tanh(jnp.dot(onehot, emb_enc_ref[...],
                         preferred_element_type=jnp.float32) + b_enc_ref[...])
    logits = jnp.dot(h.astype(jnp.bfloat16), w_out_ref[...],
                     preferred_element_type=jnp.float32) + b_out_ref[...]
    logits_ref[...] = logits                                 # lane-dense (128-wide) store


# ---------------------------------------------------------------------------
# Wrapper
# ---------------------------------------------------------------------------
def _pick_tile_b(B, S):
    """Prefer 2 grid steps (keeps both v7x TensorCores busy; negligible overhead on
    single-core v5e/v6e), bounded so the double-buffered f32 logits block fits VMEM."""
    tb_cap = max(1, MAX_ROWS_PER_STEP // S)
    for g in (2, 1):
        if B % g == 0 and (B // g) <= tb_cap:
            return B // g
    for tb in range(min(tb_cap, B), 0, -1):
        if B % tb == 0:
            return tb
    return 1


@jax.jit
def masked_language_model_forward(X, params, seed):
    B, S = X.shape
    tb = _pick_tile_b(B, S)
    assert B % tb == 0, "batch must be divisible by the batch tile"
    G = B // tb
    D = params["w_enc"].shape[0]

    # Fold the encoder's input projection into the embedding table and put the
    # mask-bias row into the spare padded vocab slot (row V_PAD-1):
    #   tanh((emb[tok] + m*mb) @ W + b) == tanh(onehot_ext @ [emb@W ; mb@W] + b)
    # exact up to f32/bf16 matmul rounding since one-hot selects a single row and
    # the mask flag is {0,1}.
    emb_enc = jnp.dot(params["emb_table"], params["w_enc"])          # (V_PAD, D)
    mb_enc = jnp.dot(params["mask_bias"], params["w_enc"])           # (1, D)
    emb_enc = emb_enc.at[V_PAD - 1, :].set(mb_enc[0]).astype(jnp.bfloat16)
    w_out = params["w_out"].astype(jnp.bfloat16)

    Xg = X.reshape(G, tb, S).astype(jnp.int32)                        # free view, no transpose
    seed_arr = jnp.asarray(seed, jnp.int32).reshape((1,))

    rows = B * S
    cost = pl.CostEstimate(
        flops=2 * rows * (V_PAD * D + D * N_PAD),
        transcendentals=rows * D,
        bytes_accessed=rows * (4 + 4 + 4 * N_PAD)
        + 2 * (V_PAD * D + D * N_PAD) + 4 * (D + N_PAD),
    )

    kernel = functools.partial(_mlm_kernel, tile_b=tb, seq_len=S)

    # NOTE: logits are kept f32 to match nn.Linear output dtype; emitting bf16 (or
    # consuming the padded (B*S, 128) buffer directly in the loss) would halve the
    # dominant HBM writeback if downstream tolerates it.
    logits_pad, label_g = pl.pallas_call(
        kernel,
        out_shape=(
            jax.ShapeDtypeStruct((rows, N_PAD), jnp.float32),
            jax.ShapeDtypeStruct((G, tb, S), jnp.int32),
        ),
        grid_spec=pltpu.PrefetchScalarGridSpec(
            num_scalar_prefetch=0,
            grid=(G,),
            in_specs=[
                pl.BlockSpec(memory_space=pltpu.MemorySpace.SMEM),     # seed scalar
                pl.BlockSpec((1, tb, S), lambda i: (i, 0, 0)),         # tokens (lane-dense)
                pl.BlockSpec((V_PAD, D), lambda i: (0, 0)),            # folded emb (resident)
                pl.BlockSpec((1, D), lambda i: (0, 0)),                # b_enc
                pl.BlockSpec((D, N_PAD), lambda i: (0, 0)),            # w_out (padded)
                pl.BlockSpec((1, N_PAD), lambda i: (0, 0)),            # b_out (padded)
            ],
            out_specs=(
                pl.BlockSpec((tb * S, N_PAD), lambda i: (i, 0)),       # lane-dense logits
                pl.BlockSpec((1, tb, S), lambda i: (i, 0, 0)),         # labels (lane-dense)
            ),
            scratch_shapes=[pltpu.VMEM((tb * S, V_PAD), jnp.bfloat16)],  # one-hot staging
        ),
        compiler_params=pltpu.CompilerParams(
            dimension_semantics=("parallel",),        # shard batch tiles across v7x TCs
            vmem_limit_bytes=32 * 1024 * 1024,        # safe on v5e/v6e/v7x; usage ~2 MiB
        ),
        cost_estimate=cost,
    )(seed_arr, Xg, emb_enc, params["b_enc"], w_out, params["b_out"])

    label = label_g.reshape(B, S)
    masked_seq_logits = logits_pad[:, :N_TOKENS].reshape(B, S, N_TOKENS)
    return masked_seq_logits, label


def init_params(key, encoder_dim=ENCODER_DIM):
    ks = jax.random.split(key, 4)
    scale = 0.02
    emb = scale * jax.random.normal(ks[0], (EMB_VOCAB, encoder_dim), jnp.float32)
    emb_pad = jnp.zeros((V_PAD, encoder_dim), jnp.float32).at[:EMB_VOCAB, :].set(emb)
    w_out = scale * jax.random.normal(ks[3], (encoder_dim, N_TOKENS), jnp.float32)
    w_out_pad = jnp.zeros((encoder_dim, N_PAD), jnp.float32).at[:, :N_TOKENS].set(w_out)
    return {
        "emb_table": emb_pad,                                            # (V_PAD, D)
        "mask_bias": scale * jax.random.normal(ks[1], (1, encoder_dim), jnp.float32),
        "w_enc": scale * jax.random.normal(ks[2], (encoder_dim, encoder_dim), jnp.float32),
        "b_enc": jnp.zeros((1, encoder_dim), jnp.float32),
        # output_projection = nn.Linear(encoder_dim, n_tokens); stored lane-dense (D, 128)
        "w_out": w_out_pad,
        "b_out": jnp.zeros((1, N_PAD), jnp.float32),
    }


if __name__ == "__main__":
    key = jax.random.PRNGKey(0)
    k_tok, k_param = jax.random.split(key)

    B, S = 16, 128
    # tokens: amino acids 1..20, CLS at position 0, PAD at the tail
    X = jax.random.randint(k_tok, (B, S), 1, N_AMINO_ACIDS + 1, dtype=jnp.int32)
    X = X.at[:, 0].set(CLS_TOKEN_VAL)
    X = X.at[:, -4:].set(PAD_TOKEN_VAL)

    params = init_params(k_param)
    seed = jnp.array([0], dtype=jnp.int32)

    logits, label = masked_language_model_forward(X, params, seed)
    jax.block_until_ready((logits, label))

    assert logits.shape == (B, S, N_TOKENS)
    assert label.shape == (B, S)
    assert bool(jnp.all(jnp.isfinite(logits)))
    # CLS / PAD positions are never masked -> their label must be PAD (0)
    assert bool(jnp.all(label[:, 0] == PAD_TOKEN_VAL))
    assert bool(jnp.all(label[:, -4:] == PAD_TOKEN_VAL))
    # labels are either PAD or the original token
    assert bool(jnp.all((label == PAD_TOKEN_VAL) | (label == X)))
    # masked fraction roughly mask_prob (loose bounds, deterministic hash)
    frac = float(jnp.mean((label != PAD_TOKEN_VAL).astype(jnp.float32)))
    assert 0.05 < frac < 0.30
    print("KERNEL_OK")
</pallas_src>

<mosaic_0001>
module attributes {stable_mosaic.version = 11 : i64} {
  func.func @_mlm_kernel(%arg0: i32, %arg1: memref<1xi32, #tpu.memory_space<smem>>, %arg2: memref<1x8x128xi32, #tpu.memory_space<vmem>>, %arg3: memref<32x32xbf16, #tpu.memory_space<vmem>>, %arg4: memref<1x32xf32, #tpu.memory_space<vmem>>, %arg5: memref<32x128xbf16, #tpu.memory_space<vmem>>, %arg6: memref<1x128xf32, #tpu.memory_space<vmem>>, %arg7: memref<1024x128xf32, #tpu.memory_space<vmem>>, %arg8: memref<1x8x128xi32, #tpu.memory_space<vmem>>, %arg9: memref<1024x32xbf16, #tpu.memory_space<vmem>>) attributes {dimension_semantics = [#tpu.dimension_semantics<parallel>], iteration_bounds = array<i64: 2>, scalar_prefetch = 0 : i64, scratch_operands = 1 : i64, tpu.core_type = #tpu.core_type<tc>, window_params = [{transform_indices = @transform_0, window_bounds = array<i64: 1>}, {transform_indices = @transform_1, window_bounds = array<i64: 1, 8, 128>}, {pipeline_mode = #tpu.pipeline_mode<synchronous>, transform_indices = @transform_2, window_bounds = array<i64: 32, 32>}, {pipeline_mode = #tpu.pipeline_mode<synchronous>, transform_indices = @transform_3, window_bounds = array<i64: 1, 32>}, {pipeline_mode = #tpu.pipeline_mode<synchronous>, transform_indices = @transform_4, window_bounds = array<i64: 32, 128>}, {pipeline_mode = #tpu.pipeline_mode<synchronous>, transform_indices = @transform_5, window_bounds = array<i64: 1, 128>}, {transform_indices = @transform_6, window_bounds = array<i64: 1024, 128>}, {transform_indices = @transform_7, window_bounds = array<i64: 1, 8, 128>}]} {
    %c0 = arith.constant 0 : index
    %c0_0 = arith.constant 0 : index
    %c0_1 = arith.constant 0 : index
    %0 = vector.load %arg2[%c0, %c0_0, %c0_1] : memref<1x8x128xi32, #tpu.memory_space<vmem>>, vector<1x8x128xi32>
    %1 = vector.shape_cast %0 : vector<1x8x128xi32> to vector<8x128xi32>
    %2 = tpu.iota {dimensions = array<i32: 0>} : vector<8x128xi32>
    %3 = tpu.iota {dimensions = array<i32: 1>} : vector<8x128xi32>
    %c8_i32 = arith.constant 8 : i32
    %4 = arith.muli %arg0, %c8_i32 : i32
    %5 = vector.broadcast %4 : i32 to vector<8x128xi32>
    %6 = arith.addi %5, %2 : vector<8x128xi32>
    %c128_i32 = arith.constant 128 : i32
    %7 = vector.broadcast %c128_i32 : i32 to vector<8x128xi32>
    %8 = arith.muli %6, %7 : vector<8x128xi32>
    %9 = arith.addi %8, %3 : vector<8x128xi32>
    %c4_i32 = arith.constant 4 : i32
    %10 = vector.broadcast %c4_i32 : i32 to vector<8x128xi32>
    %11 = arith.muli %9, %10 : vector<8x128xi32>
    %c0_2 = arith.constant 0 : index
    %12 = memref.load %arg1[%c0_2] : memref<1xi32, #tpu.memory_space<smem>>
    %c-1640531527_i32 = arith.constant -1640531527 : i32
    %13 = arith.muli %12, %c-1640531527_i32 : i32
    %14 = vector.broadcast %13 : i32 to vector<8x128xi32>
    %15 = arith.addi %11, %14 : vector<8x128xi32>
    %c16_i32 = arith.constant 16 : i32
    %16 = vector.broadcast %c16_i32 : i32 to vector<8x128xi32>
    %17 = arith.shrsi %15, %16 : vector<8x128xi32>
    %c65535_i32 = arith.constant 65535 : i32
    %18 = vector.broadcast %c65535_i32 : i32 to vector<8x128xi32>
    %19 = arith.andi %17, %18 : vector<8x128xi32>
    %20 = arith.xori %15, %19 : vector<8x128xi32>
    %c2146121005_i32 = arith.constant 2146121005 : i32
    %21 = vector.broadcast %c2146121005_i32 : i32 to vector<8x128xi32>
    %22 = arith.muli %20, %21 : vector<8x128xi32>
    %c15_i32 = arith.constant 15 : i32
    %23 = vector.broadcast %c15_i32 : i32 to vector<8x128xi32>
    %24 = arith.shrsi %22, %23 : vector<8x128xi32>
    %c131071_i32 = arith.constant 131071 : i32
    %25 = vector.broadcast %c131071_i32 : i32 to vector<8x128xi32>
    %26 = arith.andi %24, %25 : vector<8x128xi32>
    %27 = arith.xori %22, %26 : vector<8x128xi32>
    %c-2073254261_i32 = arith.constant -2073254261 : i32
    %28 = vector.broadcast %c-2073254261_i32 : i32 to vector<8x128xi32>
    %29 = arith.muli %27, %28 : vector<8x128xi32>
    %c16_i32_3 = arith.constant 16 : i32
    %30 = vector.broadcast %c16_i32_3 : i32 to vector<8x128xi32>
    %31 = arith.shrsi %29, %30 : vector<8x128xi32>
    %c65535_i32_4 = arith.constant 65535 : i32
    %32 = vector.broadcast %c65535_i32_4 : i32 to vector<8x128xi32>
    %33 = arith.andi %31, %32 : vector<8x128xi32>
    %34 = arith.xori %29, %33 : vector<8x128xi32>
    %c1_i32 = arith.constant 1 : i32
    %35 = vector.broadcast %c1_i32 : i32 to vector<8x128xi32>
    %36 = arith.addi %15, %35 : vector<8x128xi32>
    %c16_i32_5 = arith.constant 16 : i32
    %37 = vector.broadcast %c16_i32_5 : i32 to vector<8x128xi32>
    %38 = arith.shrsi %36, %37 : vector<8x128xi32>
    %c65535_i32_6 = arith.constant 65535 : i32
    %39 = vector.broadcast %c65535_i32_6 : i32 to vector<8x128xi32>
    %40 = arith.andi %38, %39 : vector<8x128xi32>
    %41 = arith.xori %36, %40 : vector<8x128xi32>
    %c2146121005_i32_7 = arith.constant 2146121005 : i32
    %42 = vector.broadcast %c2146121005_i32_7 : i32 to vector<8x128xi32>
    %43 = arith.muli %41, %42 : vector<8x128xi32>
    %c15_i32_8 = arith.constant 15 : i32
    %44 = vector.broadcast %c15_i32_8 : i32 to vector<8x128xi32>
    %45 = arith.shrsi %43, %44 : vector<8x128xi32>
    %c131071_i32_9 = arith.constant 131071 : i32
    %46 = vector.broadcast %c131071_i32_9 : i32 to vector<8x128xi32>
    %47 = arith.andi %45, %46 : vector<8x128xi32>
    %48 = arith.xori %43, %47 : vector<8x128xi32>
    %c-2073254261_i32_10 = arith.constant -2073254261 : i32
    %49 = vector.broadcast %c-2073254261_i32_10 : i32 to vector<8x128xi32>
    %50 = arith.muli %48, %49 : vector<8x128xi32>
    %c16_i32_11 = arith.constant 16 : i32
    %51 = vector.broadcast %c16_i32_11 : i32 to vector<8x128xi32>
    %52 = arith.shrsi %50, %51 : vector<8x128xi32>
    %c65535_i32_12 = arith.constant 65535 : i32
    %53 = vector.broadcast %c65535_i32_12 : i32 to vector<8x128xi32>
    %54 = arith.andi %52, %53 : vector<8x128xi32>
    %55 = arith.xori %50, %54 : vector<8x128xi32>
    %c2_i32 = arith.constant 2 : i32
    %56 = vector.broadcast %c2_i32 : i32 to vector<8x128xi32>
    %57 = arith.addi %15, %56 : vector<8x128xi32>
    %c16_i32_13 = arith.constant 16 : i32
    %58 = vector.broadcast %c16_i32_13 : i32 to vector<8x128xi32>
    %59 = arith.shrsi %57, %58 : vector<8x128xi32>
    %c65535_i32_14 = arith.constant 65535 : i32
    %60 = vector.broadcast %c65535_i32_14 : i32 to vector<8x128xi32>
    %61 = arith.andi %59, %60 : vector<8x128xi32>
    %62 = arith.xori %57, %61 : vector<8x128xi32>
    %c2146121005_i32_15 = arith.constant 2146121005 : i32
    %63 = vector.broadcast %c2146121005_i32_15 : i32 to vector<8x128xi32>
    %64 = arith.muli %62, %63 : vector<8x128xi32>
    %c15_i32_16 = arith.constant 15 : i32
    %65 = vector.broadcast %c15_i32_16 : i32 to vector<8x128xi32>
    %66 = arith.shrsi %64, %65 : vector<8x128xi32>
    %c131071_i32_17 = arith.constant 131071 : i32
    %67 = vector.broadcast %c131071_i32_17 : i32 to vector<8x128xi32>
    %68 = arith.andi %66, %67 : vector<8x128xi32>
    %69 = arith.xori %64, %68 : vector<8x128xi32>
    %c-2073254261_i32_18 = arith.constant -2073254261 : i32
    %70 = vector.broadcast %c-2073254261_i32_18 : i32 to vector<8x128xi32>
    %71 = arith.muli %69, %70 : vector<8x128xi32>
    %c16_i32_19 = arith.constant 16 : i32
    %72 = vector.broadcast %c16_i32_19 : i32 to vector<8x128xi32>
    %73 = arith.shrsi %71, %72 : vector<8x128xi32>
    %c65535_i32_20 = arith.constant 65535 : i32
    %74 = vector.broadcast %c65535_i32_20 : i32 to vector<8x128xi32>
    %75 = arith.andi %73, %74 : vector<8x128xi32>
    %76 = arith.xori %71, %75 : vector<8x128xi32>
    %c3_i32 = arith.constant 3 : i32
    %77 = vector.broadcast %c3_i32 : i32 to vector<8x128xi32>
    %78 = arith.addi %15, %77 : vector<8x128xi32>
    %c16_i32_21 = arith.constant 16 : i32
    %79 = vector.broadcast %c16_i32_21 : i32 to vector<8x128xi32>
    %80 = arith.shrsi %78, %79 : vector<8x128xi32>
    %c65535_i32_22 = arith.constant 65535 : i32
    %81 = vector.broadcast %c65535_i32_22 : i32 to vector<8x128xi32>
    %82 = arith.andi %80, %81 : vector<8x128xi32>
    %83 = arith.xori %78, %82 : vector<8x128xi32>
    %c2146121005_i32_23 = arith.constant 2146121005 : i32
    %84 = vector.broadcast %c2146121005_i32_23 : i32 to vector<8x128xi32>
    %85 = arith.muli %83, %84 : vector<8x128xi32>
    %c15_i32_24 = arith.constant 15 : i32
    %86 = vector.broadcast %c15_i32_24 : i32 to vector<8x128xi32>
    %87 = arith.shrsi %85, %86 : vector<8x128xi32>
    %c131071_i32_25 = arith.constant 131071 : i32
    %88 = vector.broadcast %c131071_i32_25 : i32 to vector<8x128xi32>
    %89 = arith.andi %87, %88 : vector<8x128xi32>
    %90 = arith.xori %85, %89 : vector<8x128xi32>
    %c-2073254261_i32_26 = arith.constant -2073254261 : i32
    %91 = vector.broadcast %c-2073254261_i32_26 : i32 to vector<8x128xi32>
    %92 = arith.muli %90, %91 : vector<8x128xi32>
    %c16_i32_27 = arith.constant 16 : i32
    %93 = vector.broadcast %c16_i32_27 : i32 to vector<8x128xi32>
    %94 = arith.shrsi %92, %93 : vector<8x128xi32>
    %c65535_i32_28 = arith.constant 65535 : i32
    %95 = vector.broadcast %c65535_i32_28 : i32 to vector<8x128xi32>
    %96 = arith.andi %94, %95 : vector<8x128xi32>
    %97 = arith.xori %92, %96 : vector<8x128xi32>
    %c16777215_i32 = arith.constant 16777215 : i32
    %98 = vector.broadcast %c16777215_i32 : i32 to vector<8x128xi32>
    %99 = arith.andi %34, %98 : vector<8x128xi32>
    %c2516582_i32 = arith.constant 2516582 : i32
    %100 = vector.broadcast %c2516582_i32 : i32 to vector<8x128xi32>
    %101 = arith.cmpi slt, %99, %100 : vector<8x128xi32>
    %c0_i32 = arith.constant 0 : i32
    %102 = vector.broadcast %c0_i32 : i32 to vector<8x128xi32>
    %103 = arith.cmpi ne, %1, %102 : vector<8x128xi32>
    %104 = arith.andi %101, %103 : vector<8x128xi1>
    %c21_i32 = arith.constant 21 : i32
    %105 = vector.broadcast %c21_i32 : i32 to vector<8x128xi32>
    %106 = arith.cmpi ne, %1, %105 : vector<8x128xi32>
    %107 = arith.andi %104, %106 : vector<8x128xi1>
    %c16777215_i32_29 = arith.constant 16777215 : i32
    %108 = vector.broadcast %c16777215_i32_29 : i32 to vector<8x128xi32>
    %109 = arith.andi %55, %108 : vector<8x128xi32>
    %c1677721_i32 = arith.constant 1677721 : i32
    %110 = vector.broadcast %c1677721_i32 : i32 to vector<8x128xi32>
    %111 = arith.cmpi slt, %109, %110 : vector<8x128xi32>
    %112 = arith.andi %107, %111 : vector<8x128xi1>
    %c16777215_i32_30 = arith.constant 16777215 : i32
    %113 = vector.broadcast %c16777215_i32_30 : i32 to vector<8x128xi32>
    %114 = arith.andi %76, %113 : vector<8x128xi32>
    %c1677721_i32_31 = arith.constant 1677721 : i32
    %115 = vector.broadcast %c1677721_i32_31 : i32 to vector<8x128xi32>
    %116 = arith.cmpi slt, %114, %115 : vector<8x128xi32>
    %117 = arith.andi %107, %116 : vector<8x128xi1>
    %c16777215_i32_32 = arith.constant 16777215 : i32
    %118 = vector.broadcast %c16777215_i32_32 : i32 to vector<8x128xi32>
    %119 = arith.andi %97, %118 : vector<8x128xi32>
    %c20_i32 = arith.constant 20 : i32
    %120 = vector.broadcast %c20_i32 : i32 to vector<8x128xi32>
    %121 = arith.muli %119, %120 : vector<8x128xi32>
    %c24_i32 = arith.constant 24 : i32
    %122 = vector.broadcast %c24_i32 : i32 to vector<8x128xi32>
    %123 = arith.shrsi %121, %122 : vector<8x128xi32>
    %c1_i32_33 = arith.constant 1 : i32
    %124 = vector.broadcast %c1_i32_33 : i32 to vector<8x128xi32>
    %125 = arith.addi %123, %124 : vector<8x128xi32>
    %126 = arith.select %117, %125, %1 : vector<8x128xi1>, vector<8x128xi32>
    %cst = arith.constant dense<true> : vector<8x128xi1>
    %127 = arith.xori %117, %cst : vector<8x128xi1>
    %cst_34 = arith.constant dense<true> : vector<8x128xi1>
    %128 = arith.xori %112, %cst_34 : vector<8x128xi1>
    %129 = arith.andi %127, %128 : vector<8x128xi1>
    %130 = arith.andi %107, %129 : vector<8x128xi1>
    %c22_i32 = arith.constant 22 : i32
    %131 = vector.broadcast %c22_i32 : i32 to vector<8x128xi32>
    %132 = arith.select %130, %131, %126 : vector<8x128xi1>, vector<8x128xi32>
    %c0_i32_35 = arith.constant 0 : i32
    %133 = vector.broadcast %c0_i32_35 : i32 to vector<8x128xi32>
    %134 = arith.select %107, %1, %133 : vector<8x128xi1>, vector<8x128xi32>
    %c0_36 = arith.constant 0 : index
    %c0_37 = arith.constant 0 : index
    %c0_38 = arith.constant 0 : index
    %135 = vector.load %arg8[%c0_36, %c0_37, %c0_38] : memref<1x8x128xi32, #tpu.memory_space<vmem>>, vector<1x8x128xi32>
    %136 = vector.shape_cast %135 : vector<1x8x128xi32> to vector<8x128xi32>
    %137 = vector.shape_cast %134 : vector<8x128xi32> to vector<1x8x128xi32>
    tpu.vector_store %arg8[%c0_36, %c0_37, %c0_38], %137 {strides = array<i32>} : memref<1x8x128xi32, #tpu.memory_space<vmem>>, vector<1x8x128xi32>,
    %138 = tpu.transpose %132, [1, 0] : vector<8x128xi32> -> vector<128x8xi32>
    %139 = arith.extui %107 : vector<8x128xi1> to vector<8x128xi32>
    %140 = arith.sitofp %139 : vector<8x128xi32> to vector<8x128xf32>
    %141 = tpu.transpose %140, [1, 0] : vector<8x128xf32> -> vector<128x8xf32>
    %142 = tpu.iota {dimensions = array<i32: 1>} : vector<128x32xi32>
    %c31_i32 = arith.constant 31 : i32
    %143 = vector.broadcast %c31_i32 : i32 to vector<128x32xi32>
    %144 = arith.cmpi eq, %142, %143 : vector<128x32xi32>
    %145 = vector.extract_strided_slice %141 {offsets = [0, 0], sizes = [128, 1], strides = [1, 1]} : vector<128x8xf32> to vector<128x1xf32>
    %146 = vector.extract_strided_slice %138 {offsets = [0, 0], sizes = [128, 1], strides = [1, 1]} : vector<128x8xi32> to vector<128x1xi32>
    %147 = vector.broadcast %146 : vector<128x1xi32> to vector<128x32xi32>
    %148 = arith.cmpi eq, %147, %142 : vector<128x32xi32>
    %149 = arith.extui %148 : vector<128x32xi1> to vector<128x32xi32>
    %150 = arith.sitofp %149 : vector<128x32xi32> to vector<128x32xf32>
    %151 = vector.shape_cast %145 : vector<128x1xf32> to vector<128x1xf32>
    %152 = vector.broadcast %151 : vector<128x1xf32> to vector<128x32xf32>
    %153 = arith.select %144, %152, %150 : vector<128x32xi1>, vector<128x32xf32>
    %154 = arith.truncf %153 : vector<128x32xf32> to vector<128x32xbf16>
    %c0_39 = arith.constant 0 : index
    %c0_40 = arith.constant 0 : index
    %155 = vector.load %arg9[%c0_39, %c0_40] : memref<1024x32xbf16, #tpu.memory_space<vmem>>, vector<128x32xbf16>
    tpu.vector_store %arg9[%c0_39, %c0_40], %154 {strides = array<i32>} : memref<1024x32xbf16, #tpu.memory_space<vmem>>, vector<128x32xbf16>,
    %156 = vector.extract_strided_slice %141 {offsets = [0, 1], sizes = [128, 1], strides = [1, 1]} : vector<128x8xf32> to vector<128x1xf32>
    %157 = vector.extract_strided_slice %138 {offsets = [0, 1], sizes = [128, 1], strides = [1, 1]} : vector<128x8xi32> to vector<128x1xi32>
    %158 = vector.broadcast %157 : vector<128x1xi32> to vector<128x32xi32>
    %159 = arith.cmpi eq, %158, %142 : vector<128x32xi32>
    %160 = arith.extui %159 : vector<128x32xi1> to vector<128x32xi32>
    %161 = arith.sitofp %160 : vector<128x32xi32> to vector<128x32xf32>
    %162 = vector.shape_cast %156 : vector<128x1xf32> to vector<128x1xf32>
    %163 = vector.broadcast %162 : vector<128x1xf32> to vector<128x32xf32>
    %164 = arith.select %144, %163, %161 : vector<128x32xi1>, vector<128x32xf32>
    %165 = arith.truncf %164 : vector<128x32xf32> to vector<128x32xbf16>
    %c128 = arith.constant 128 : index
    %c0_41 = arith.constant 0 : index
    %166 = vector.load %arg9[%c128, %c0_41] : memref<1024x32xbf16, #tpu.memory_space<vmem>>, vector<128x32xbf16>
    tpu.vector_store %arg9[%c128, %c0_41], %165 {strides = array<i32>} : memref<1024x32xbf16, #tpu.memory_space<vmem>>, vector<128x32xbf16>,
    %167 = vector.extract_strided_slice %141 {offsets = [0, 2], sizes = [128, 1], strides = [1, 1]} : vector<128x8xf32> to vector<128x1xf32>
    %168 = vector.extract_strided_slice %138 {offsets = [0, 2], sizes = [128, 1], strides = [1, 1]} : vector<128x8xi32> to vector<128x1xi32>
    %169 = vector.broadcast %168 : vector<128x1xi32> to vector<128x32xi32>
    %170 = arith.cmpi eq, %169, %142 : vector<128x32xi32>
    %171 = arith.extui %170 : vector<128x32xi1> to vector<128x32xi32>
    %172 = arith.sitofp %171 : vector<128x32xi32> to vector<128x32xf32>
    %173 = vector.shape_cast %167 : vector<128x1xf32> to vector<128x1xf32>
    %174 = vector.broadcast %173 : vector<128x1xf32> to vector<128x32xf32>
    %175 = arith.select %144, %174, %172 : vector<128x32xi1>, vector<128x32xf32>
    %176 = arith.truncf %175 : vector<128x32xf32> to vector<128x32xbf16>
    %c256 = arith.constant 256 : index
    %c0_42 = arith.constant 0 : index
    %177 = vector.load %arg9[%c256, %c0_42] : memref<1024x32xbf16, #tpu.memory_space<vmem>>, vector<128x32xbf16>
    tpu.vector_store %arg9[%c256, %c0_42], %176 {strides = array<i32>} : memref<1024x32xbf16, #tpu.memory_space<vmem>>, vector<128x32xbf16>,
    %178 = vector.extract_strided_slice %141 {offsets = [0, 3], sizes = [128, 1], strides = [1, 1]} : vector<128x8xf32> to vector<128x1xf32>
    %179 = vector.extract_strided_slice %138 {offsets = [0, 3], sizes = [128, 1], strides = [1, 1]} : vector<128x8xi32> to vector<128x1xi32>
    %180 = vector.broadcast %179 : vector<128x1xi32> to vector<128x32xi32>
    %181 = arith.cmpi eq, %180, %142 : vector<128x32xi32>
    %182 = arith.extui %181 : vector<128x32xi1> to vector<128x32xi32>
    %183 = arith.sitofp %182 : vector<128x32xi32> to vector<128x32xf32>
    %184 = vector.shape_cast %178 : vector<128x1xf32> to vector<128x1xf32>
    %185 = vector.broadcast %184 : vector<128x1xf32> to vector<128x32xf32>
    %186 = arith.select %144, %185, %183 : vector<128x32xi1>, vector<128x32xf32>
    %187 = arith.truncf %186 : vector<128x32xf32> to vector<128x32xbf16>
    %c384 = arith.constant 384 : index
    %c0_43 = arith.constant 0 : index
    %188 = vector.load %arg9[%c384, %c0_43] : memref<1024x32xbf16, #tpu.memory_space<vmem>>, vector<128x32xbf16>
    tpu.vector_store %arg9[%c384, %c0_43], %187 {strides = array<i32>} : memref<1024x32xbf16, #tpu.memory_space<vmem>>, vector<128x32xbf16>,
    %189 = vector.extract_strided_slice %141 {offsets = [0, 4], sizes = [128, 1], strides = [1, 1]} : vector<128x8xf32> to vector<128x1xf32>
    %190 = vector.extract_strided_slice %138 {offsets = [0, 4], sizes = [128, 1], strides = [1, 1]} : vector<128x8xi32> to vector<128x1xi32>
    %191 = vector.broadcast %190 : vector<128x1xi32> to vector<128x32xi32>
    %192 = arith.cmpi eq, %191, %142 : vector<128x32xi32>
    %193 = arith.extui %192 : vector<128x32xi1> to vector<128x32xi32>
    %194 = arith.sitofp %193 : vector<128x32xi32> to vector<128x32xf32>
    %195 = vector.shape_cast %189 : vector<128x1xf32> to vector<128x1xf32>
    %196 = vector.broadcast %195 : vector<128x1xf32> to vector<128x32xf32>
    %197 = arith.select %144, %196, %194 : vector<128x32xi1>, vector<128x32xf32>
    %198 = arith.truncf %197 : vector<128x32xf32> to vector<128x32xbf16>
    %c512 = arith.constant 512 : index
    %c0_44 = arith.constant 0 : index
    %199 = vector.load %arg9[%c512, %c0_44] : memref<1024x32xbf16, #tpu.memory_space<vmem>>, vector<128x32xbf16>
    tpu.vector_store %arg9[%c512, %c0_44], %198 {strides = array<i32>} : memref<1024x32xbf16, #tpu.memory_space<vmem>>, vector<128x32xbf16>,
    %200 = vector.extract_strided_slice %141 {offsets = [0, 5], sizes = [128, 1], strides = [1, 1]} : vector<128x8xf32> to vector<128x1xf32>
    %201 = vector.extract_strided_slice %138 {offsets = [0, 5], sizes = [128, 1], strides = [1, 1]} : vector<128x8xi32> to vector<128x1xi32>
    %202 = vector.broadcast %201 : vector<128x1xi32> to vector<128x32xi32>
    %203 = arith.cmpi eq, %202, %142 : vector<128x32xi32>
    %204 = arith.extui %203 : vector<128x32xi1> to vector<128x32xi32>
    %205 = arith.sitofp %204 : vector<128x32xi32> to vector<128x32xf32>
    %206 = vector.shape_cast %200 : vector<128x1xf32> to vector<128x1xf32>
    %207 = vector.broadcast %206 : vector<128x1xf32> to vector<128x32xf32>
    %208 = arith.select %144, %207, %205 : vector<128x32xi1>, vector<128x32xf32>
    %209 = arith.truncf %208 : vector<128x32xf32> to vector<128x32xbf16>
    %c640 = arith.constant 640 : index
    %c0_45 = arith.constant 0 : index
    %210 = vector.load %arg9[%c640, %c0_45] : memref<1024x32xbf16, #tpu.memory_space<vmem>>, vector<128x32xbf16>
    tpu.vector_store %arg9[%c640, %c0_45], %209 {strides = array<i32>} : memref<1024x32xbf16, #tpu.memory_space<vmem>>, vector<128x32xbf16>,
    %211 = vector.extract_strided_slice %141 {offsets = [0, 6], sizes = [128, 1], strides = [1, 1]} : vector<128x8xf32> to vector<128x1xf32>
    %212 = vector.extract_strided_slice %138 {offsets = [0, 6], sizes = [128, 1], strides = [1, 1]} : vector<128x8xi32> to vector<128x1xi32>
    %213 = vector.broadcast %212 : vector<128x1xi32> to vector<128x32xi32>
    %214 = arith.cmpi eq, %213, %142 : vector<128x32xi32>
    %215 = arith.extui %214 : vector<128x32xi1> to vector<128x32xi32>
    %216 = arith.sitofp %215 : vector<128x32xi32> to vector<128x32xf32>
    %217 = vector.shape_cast %211 : vector<128x1xf32> to vector<128x1xf32>
    %218 = vector.broadcast %217 : vector<128x1xf32> to vector<128x32xf32>
    %219 = arith.select %144, %218, %216 : vector<128x32xi1>, vector<128x32xf32>
    %220 = arith.truncf %219 : vector<128x32xf32> to vector<128x32xbf16>
    %c768 = arith.constant 768 : index
    %c0_46 = arith.constant 0 : index
    %221 = vector.load %arg9[%c768, %c0_46] : memref<1024x32xbf16, #tpu.memory_space<vmem>>, vector<128x32xbf16>
    tpu.vector_store %arg9[%c768, %c0_46], %220 {strides = array<i32>} : memref<1024x32xbf16, #tpu.memory_space<vmem>>, vector<128x32xbf16>,
    %222 = vector.extract_strided_slice %141 {offsets = [0, 7], sizes = [128, 1], strides = [1, 1]} : vector<128x8xf32> to vector<128x1xf32>
    %223 = vector.extract_strided_slice %138 {offsets = [0, 7], sizes = [128, 1], strides = [1, 1]} : vector<128x8xi32> to vector<128x1xi32>
    %224 = vector.broadcast %223 : vector<128x1xi32> to vector<128x32xi32>
    %225 = arith.cmpi eq, %224, %142 : vector<128x32xi32>
    %226 = arith.extui %225 : vector<128x32xi1> to vector<128x32xi32>
    %227 = arith.sitofp %226 : vector<128x32xi32> to vector<128x32xf32>
    %228 = vector.shape_cast %222 : vector<128x1xf32> to vector<128x1xf32>
    %229 = vector.broadcast %228 : vector<128x1xf32> to vector<128x32xf32>
    %230 = arith.select %144, %229, %227 : vector<128x32xi1>, vector<128x32xf32>
    %231 = arith.truncf %230 : vector<128x32xf32> to vector<128x32xbf16>
    %c896 = arith.constant 896 : index
    %c0_47 = arith.constant 0 : index
    %232 = vector.load %arg9[%c896, %c0_47] : memref<1024x32xbf16, #tpu.memory_space<vmem>>, vector<128x32xbf16>
    tpu.vector_store %arg9[%c896, %c0_47], %231 {strides = array<i32>} : memref<1024x32xbf16, #tpu.memory_space<vmem>>, vector<128x32xbf16>,
    %c0_48 = arith.constant 0 : index
    %c0_49 = arith.constant 0 : index
    %233 = vector.load %arg9[%c0_48, %c0_49] : memref<1024x32xbf16, #tpu.memory_space<vmem>>, vector<1024x32xbf16>
    %c0_50 = arith.constant 0 : index
    %c0_51 = arith.constant 0 : index
    %234 = vector.load %arg3[%c0_50, %c0_51] : memref<32x32xbf16, #tpu.memory_space<vmem>>, vector<32x32xbf16>
    %cst_52 = arith.constant dense<0.000000e+00> : vector<1024x32xf32>
    %235 = tpu.matmul %233, %234, %cst_52 {dimension_numbers = #tpu.dot_dimension_numbers<[1], [0], [0], [1], [0, 0, 1, 1], [], []>} : vector<1024x32xbf16>, vector<32x32xbf16>, vector<1024x32xf32> -> vector<1024x32xf32>
    %c0_53 = arith.constant 0 : index
    %c0_54 = arith.constant 0 : index
    %236 = vector.load %arg4[%c0_53, %c0_54] : memref<1x32xf32, #tpu.memory_space<vmem>>, vector<1x32xf32>
    %237 = vector.broadcast %236 : vector<1x32xf32> to vector<1024x32xf32>
    %238 = arith.addf %235, %237 : vector<1024x32xf32>
    %239 = math.tanh %238 : vector<1024x32xf32>
    %240 = arith.truncf %239 : vector<1024x32xf32> to vector<1024x32xbf16>
    %c0_55 = arith.constant 0 : index
    %c0_56 = arith.constant 0 : index
    %241 = vector.load %arg5[%c0_55, %c0_56] : memref<32x128xbf16, #tpu.memory_space<vmem>>, vector<32x128xbf16>
    %cst_57 = arith.constant dense<0.000000e+00> : vector<1024x128xf32>
    %242 = tpu.matmul %240, %241, %cst_57 {dimension_numbers = #tpu.dot_dimension_numbers<[1], [0], [0], [1], [0, 0, 1, 1], [], []>} : vector<1024x32xbf16>, vector<32x128xbf16>, vector<1024x128xf32> -> vector<1024x128xf32>
    %c0_58 = arith.constant 0 : index
    %c0_59 = arith.constant 0 : index
    %243 = vector.load %arg6[%c0_58, %c0_59] : memref<1x128xf32, #tpu.memory_space<vmem>>, vector<1x128xf32>
    %244 = vector.broadcast %243 : vector<1x128xf32> to vector<1024x128xf32>
    %245 = arith.addf %242, %244 : vector<1024x128xf32>
    %c0_60 = arith.constant 0 : index
    %c0_61 = arith.constant 0 : index
    %246 = vector.load %arg7[%c0_60, %c0_61] : memref<1024x128xf32, #tpu.memory_space<vmem>>, vector<1024x128xf32>
    tpu.vector_store %arg7[%c0_60, %c0_61], %245 {strides = array<i32>} : memref<1024x128xf32, #tpu.memory_space<vmem>>, vector<1024x128xf32>,
    return
  }
  func.func @transform_0(%arg0: i32) -> i32 {
    %c0_i32 = arith.constant 0 : i32
    %c0_i32_0 = arith.constant 0 : i32
    return %c0_i32 : i32
  }
  func.func @transform_1(%arg0: i32) -> (i32, i32, i32) {
    %c0_i32 = arith.constant 0 : i32
    %c0_i32_0 = arith.constant 0 : i32
    %c0_i32_1 = arith.constant 0 : i32
    return %arg0, %c0_i32, %c0_i32_0 : i32, i32, i32
  }
  func.func @transform_2(%arg0: i32) -> (i32, i32) {
    %c0_i32 = arith.constant 0 : i32
    %c0_i32_0 = arith.constant 0 : i32
    %c0_i32_1 = arith.constant 0 : i32
    return %c0_i32, %c0_i32_0 : i32, i32
  }
  func.func @transform_3(%arg0: i32) -> (i32, i32) {
    %c0_i32 = arith.constant 0 : i32
    %c0_i32_0 = arith.constant 0 : i32
    %c0_i32_1 = arith.constant 0 : i32
    return %c0_i32, %c0_i32_0 : i32, i32
  }
  func.func @transform_4(%arg0: i32) -> (i32, i32) {
    %c0_i32 = arith.constant 0 : i32
    %c0_i32_0 = arith.constant 0 : i32
    %c0_i32_1 = arith.constant 0 : i32
    return %c0_i32, %c0_i32_0 : i32, i32
  }
  func.func @transform_5(%arg0: i32) -> (i32, i32) {
    %c0_i32 = arith.constant 0 : i32
    %c0_i32_0 = arith.constant 0 : i32
    %c0_i32_1 = arith.constant 0 : i32
    return %c0_i32, %c0_i32_0 : i32, i32
  }
  func.func @transform_6(%arg0: i32) -> (i32, i32) {
    %c0_i32 = arith.constant 0 : i32
    %c0_i32_0 = arith.constant 0 : i32
    return %arg0, %c0_i32 : i32, i32
  }
  func.func @transform_7(%arg0: i32) -> (i32, i32, i32) {
    %c0_i32 = arith.constant 0 : i32
    %c0_i32_0 = arith.constant 0 : i32
    %c0_i32_1 = arith.constant 0 : i32
    return %arg0, %c0_i32, %c0_i32_0 : i32, i32, i32
  }
}

</mosaic_0001>

<llo_original>
// kernel: masked_language_model_forward.1
$region0: #{masked_language_model_forward.1}
  #allocation0 [shape = 'u32[]', space=smem, size = 0x4, offset = 0x4, fixed_abs, tag = 'smem constant byte address 0x4 - core index']
  #allocation1 [shape = 'u32[72,128]{1,0:T(1,128)}', space=vmem, size = 0x9000, scoped, tag = 'internal scratch']
  #allocation2 [shape = 'bf16[1024,32]{1,0:T(8,128)(2,1)}', space=vmem, size = 0x40000, scoped, tag = 'scratch operand']
  #allocation3 [shape = 's32[1]{0:T(128)S(6)}', space=smem, size = 0x200, scoped, tag = 'scoped memory for masked_language_model_forward.1']
  %s0 = inlined_call_operand.<no memory space> [shape: s32[1], index: 0, kind: input, shape index: {}]
  %s1 = inlined_call_operand.vmem [shape: s32[2,8,128], index: 1, kind: input, shape index: {}]
  %s2 = inlined_call_operand.vmem [shape: bf16[32,32], index: 2, kind: input, shape index: {}]
  %s3 = inlined_call_operand.vmem [shape: f32[1,32], index: 3, kind: input, shape index: {}]
  %s4 = inlined_call_operand.vmem [shape: bf16[32,128], index: 4, kind: input, shape index: {}]
  %s5 = inlined_call_operand.vmem [shape: f32[1,128], index: 5, kind: input, shape index: {}]
  %s6 = inlined_call_operand.vmem [shape: f32[2048,128], index: 6, kind: output, shape index: {0}]
  %s7 = inlined_call_operand.hbm [shape: s32[2,8,128], index: 7, kind: output, shape index: {1}]
  %8 = xla_tuple %s6, %s7
  %s9 = sld [smem:[#allocation0]]
  $region65: #{masked_language_model_forward.1} parent=0
    _
  %s11 = ssub.s32 1, %s9
  %s12 = scalar_select 0, %s11, %s9
  %13 = sst [smem:[#allocation3]] %s0
  $region1: #{masked_language_model_forward.1} parent=0
    #allocation4 [shape = 'u8[8192]{0}', space=vmem, size = 0x2000, scoped, tag = 'output window, operand 1']
    #allocation5 [shape = 's32[2]{0}', space=sflag, size = 0x8, scoped, tag = 'scoped memory for masked_language_model_forward.1']
    %14 = vsyncpa [#allocation5], 0
    %s15 = scalar_lea.sflag [#allocation5], 1
    %16 = vsyncpa %s15, 0
    loop: start=0, step=1, limit=4
    $region2: #{masked_language_model_forward.1} parent=1 // loop_pre_header
      _
    $region3: #{masked_language_model_forward.1} parent=1 // loop_header
      %s18 = sphi 0, %s22
      %p19 = scmp.ge.s32.totalorder %s18, 4
      %s26 = sphi 0, %s26
      %s28 = sphi 0, %s26
      %s29 = sphi 0, %s28
      %s43 = sphi 0, %s29
      %s49 = sphi 0, %s51
      %s52 = sphi 0, %s49
      %s53 = sphi 0, %s52
      %s69 = sphi 0, %s53
      %s73 = sphi 0, %s73
      %s75 = sphi 0, %s73
      %s76 = sphi 0, %s75
      %s90 = sphi 0, %s76
      %s94 = sphi 0, %s94
      %s96 = sphi 0, %s94
      %s97 = sphi 0, %s96
      %s111 = sphi 0, %s97
      %s115 = sphi 0, %s115
      %s117 = sphi 0, %s115
      %s118 = sphi 0, %s117
      %s132 = sphi 0, %s118
      %s136 = sphi 0, %s136
      %s138 = sphi 0, %s136
      %s139 = sphi 0, %s138
      %s153 = sphi 0, %s139
      %s159 = sphi 0, %s161
      %s162 = sphi 0, %s159
      %s163 = sphi 0, %s162
      %s179 = sphi 0, %s163
      %s185 = sphi 0, %s187
      %s188 = sphi 0, %s185
      %s189 = sphi 0, %s188
      %s205 = sphi 0, %s189
    $region4: #{masked_language_model_forward.1} parent=1 // loop_header_branch
      %21 = sbr.rel (%p19) target = $region8
    $region5: #{masked_language_model_forward.1} parent=1 // loop_body
      %s23 = ssub.s32 %s18, 1
      %s24 = ssub.s32 %s18, 2
      %s25 = sadd.s32 %s18, 1
      %s27 = sadd.s32 %s26, 1
      %p30 = scmp.eq.s32.totalorder %s18, 1
      %p31 = scmp.ne.s32.totalorder %s26, %s28
      %p32 = scmp.eq.s32.totalorder %s18, 0
      %p33 = por %p31, %p32
      %p34 = scmp.ne.s32.totalorder %s26, %s28
      %p35 = scmp.eq.s32.totalorder %s23, 1
      %p36 = por %p34, %p35
      %p37 = scmp.ne.s32.totalorder %s28, %s29
      %p38 = scmp.eq.s32.totalorder %s23, 0
      %p39 = por %p37, %p38
      %p40 = scmp.ne.s32.totalorder %s28, %s29
      %p41 = scmp.eq.s32.totalorder %s24, 1
      %p42 = por %p40, %p41
      %p44 = scmp.ne.s32.totalorder %s29, %s43
      %p45 = scmp.eq.s32.totalorder %s24, 0
      %p46 = por %p44, %p45
      %s47 = ssub.s32 %s18, %s25
      %p48 = scmp.eq.s32.totalorder %s47, 0
      %s50 = sadd.s32 %s49, 1
      %s51 = scalar_select %p48, %s49, %s50
      %p54 = pneg %p48
      %p55 = scmp.eq.s32.totalorder %s18, 1
      %p56 = por %p54, %p55
      %p57 = scmp.ne.s32.totalorder %s49, %s52
      %p58 = scmp.eq.s32.totalorder %s18, 0
      %p59 = por %p57, %p58
      %p60 = scmp.ne.s32.totalorder %s49, %s52
      %p61 = scmp.eq.s32.totalorder %s23, 1
      %p62 = por %p60, %p61
      %p63 = scmp.ne.s32.totalorder %s52, %s53
      %p64 = scmp.eq.s32.totalorder %s23, 0
      %p65 = por %p63, %p64
      %p66 = scmp.ne.s32.totalorder %s52, %s53
      %p67 = scmp.eq.s32.totalorder %s24, 1
      %p68 = por %p66, %p67
      %p70 = scmp.ne.s32.totalorder %s53, %s69
      %p71 = scmp.eq.s32.totalorder %s24, 0
      %p72 = por %p70, %p71
      %s74 = sadd.s32 %s73, 1
      %p77 = scmp.eq.s32.totalorder %s18, 1
      %p78 = scmp.ne.s32.totalorder %s73, %s75
      %p79 = scmp.eq.s32.totalorder %s18, 0
      %p80 = por %p78, %p79
      %p81 = scmp.ne.s32.totalorder %s73, %s75
      %p82 = scmp.eq.s32.totalorder %s23, 1
      %p83 = por %p81, %p82
      %p84 = scmp.ne.s32.totalorder %s75, %s76
      %p85 = scmp.eq.s32.totalorder %s23, 0
      %p86 = por %p84, %p85
      %p87 = scmp.ne.s32.totalorder %s75, %s76
      %p88 = scmp.eq.s32.totalorder %s24, 1
      %p89 = por %p87, %p88
      %p91 = scmp.ne.s32.totalorder %s76, %s90
      %p92 = scmp.eq.s32.totalorder %s24, 0
      %p93 = por %p91, %p92
      %s95 = sadd.s32 %s94, 1
      %p98 = scmp.eq.s32.totalorder %s18, 1
      %p99 = scmp.ne.s32.totalorder %s94, %s96
      %p100 = scmp.eq.s32.totalorder %s18, 0
      %p101 = por %p99, %p100
      %p102 = scmp.ne.s32.totalorder %s94, %s96
      %p103 = scmp.eq.s32.totalorder %s23, 1
      %p104 = por %p102, %p103
      %p105 = scmp.ne.s32.totalorder %s96, %s97
      %p106 = scmp.eq.s32.totalorder %s23, 0
      %p107 = por %p105, %p106
      %p108 = scmp.ne.s32.totalorder %s96, %s97
      %p109 = scmp.eq.s32.totalorder %s24, 1
      %p110 = por %p108, %p109
      %p112 = scmp.ne.s32.totalorder %s97, %s111
      %p113 = scmp.eq.s32.totalorder %s24, 0
      %p114 = por %p112, %p113
      %s116 = sadd.s32 %s115, 1
      %p119 = scmp.eq.s32.totalorder %s18, 1
      %p120 = scmp.ne.s32.totalorder %s115, %s117
      %p121 = scmp.eq.s32.totalorder %s18, 0
      %p122 = por %p120, %p121
      %p123 = scmp.ne.s32.totalorder %s115, %s117
      %p124 = scmp.eq.s32.totalorder %s23, 1
      %p125 = por %p123, %p124
      %p126 = scmp.ne.s32.totalorder %s117, %s118
      %p127 = scmp.eq.s32.totalorder %s23, 0
      %p128 = por %p126, %p127
      %p129 = scmp.ne.s32.totalorder %s117, %s118
      %p130 = scmp.eq.s32.totalorder %s24, 1
      %p131 = por %p129, %p130
      %p133 = scmp.ne.s32.totalorder %s118, %s132
      %p134 = scmp.eq.s32.totalorder %s24, 0
      %p135 = por %p133, %p134
      %s137 = sadd.s32 %s136, 1
      %p140 = scmp.eq.s32.totalorder %s18, 1
      %p141 = scmp.ne.s32.totalorder %s136, %s138
      %p142 = scmp.eq.s32.totalorder %s18, 0
      %p143 = por %p141, %p142
      %p144 = scmp.ne.s32.totalorder %s136, %s138
      %p145 = scmp.eq.s32.totalorder %s23, 1
      %p146 = por %p144, %p145
      %p147 = scmp.ne.s32.totalorder %s138, %s139
      %p148 = scmp.eq.s32.totalorder %s23, 0
      %p149 = por %p147, %p148
      %p150 = scmp.ne.s32.totalorder %s138, %s139
      %p151 = scmp.eq.s32.totalorder %s24, 1
      %p152 = por %p150, %p151
      %p154 = scmp.ne.s32.totalorder %s139, %s153
      %p155 = scmp.eq.s32.totalorder %s24, 0
      %p156 = por %p154, %p155
      %s157 = ssub.s32 %s18, %s25
      %p158 = scmp.eq.s32.totalorder %s157, 0
      %s160 = sadd.s32 %s159, 1
      %s161 = scalar_select %p158, %s159, %s160
      %p164 = pneg %p158
      %p165 = scmp.eq.s32.totalorder %s18, 1
      %p166 = por %p164, %p165
      %p167 = scmp.ne.s32.totalorder %s159, %s162
      %p168 = scmp.eq.s32.totalorder %s18, 0
      %p169 = por %p167, %p168
      %p170 = scmp.ne.s32.totalorder %s159, %s162
      %p171 = scmp.eq.s32.totalorder %s23, 1
      %p172 = por %p170, %p171
      %p173 = scmp.ne.s32.totalorder %s162, %s163
      %p174 = scmp.eq.s32.totalorder %s23, 0
      %p175 = por %p173, %p174
      %p176 = scmp.ne.s32.totalorder %s162, %s163
      %p177 = scmp.eq.s32.totalorder %s24, 1
      %p178 = por %p176, %p177
      %p180 = scmp.ne.s32.totalorder %s163, %s179
      %p181 = scmp.eq.s32.totalorder %s24, 0
      %p182 = por %p180, %p181
      %s183 = ssub.s32 %s18, %s25
      %p184 = scmp.eq.s32.totalorder %s183, 0
      %s186 = sadd.s32 %s185, 1
      %s187 = scalar_select %p184, %s185, %s186
      %p190 = pneg %p184
      %p191 = scmp.eq.s32.totalorder %s18, 1
      %p192 = por %p190, %p191
      %p193 = scmp.ne.s32.totalorder %s185, %s188
      %p194 = scmp.eq.s32.totalorder %s18, 0
      %p195 = por %p193, %p194
      %p196 = scmp.ne.s32.totalorder %s185, %s188
      %p197 = scmp.eq.s32.totalorder %s23, 1
      %p198 = por %p196, %p197
      %p199 = scmp.ne.s32.totalorder %s188, %s189
      %p200 = scmp.eq.s32.totalorder %s23, 0
      %p201 = por %p199, %p200
      %p202 = scmp.ne.s32.totalorder %s188, %s189
      %p203 = scmp.eq.s32.totalorder %s24, 1
      %p204 = por %p202, %p203
      %p206 = scmp.ne.s32.totalorder %s189, %s205
      %p207 = scmp.eq.s32.totalorder %s24, 0
      %p208 = por %p206, %p207
      %p209 = scmp.le.s32.totalorder 1, %s18
      %p210 = scmp.lt.s32.totalorder %s18, 3
      %p211 = pnand %p209, %p210
      %p212 = pneg %p211
      // Predicated region
      $region9: #{masked_language_model_forward.1} parent=5 // pred_check
        _
      $region10: #{masked_language_model_forward.1} parent=5 // pred_check_branch
        %214 = sbr.rel (%p211) target = $region12
      $region11: #{masked_language_model_forward.1} parent=5 // pred_region
        %s215 = ssub.s32 %s18, 1
        // Predicated region
        $region13: #{masked_language_model_forward.1} parent=11 // pred_check
          %p216 = pneg %p39
        $region14: #{masked_language_model_forward.1} parent=11 // pred_check_branch
          %218 = sbr.rel (%p216) target = $region16
        $region15: #{masked_language_model_forward.1} parent=11 // pred_region
          _
        $region16: #{masked_language_model_forward.1} parent=11 // pred_fallthru
          _
        // Predicated region
        $region17: #{masked_language_model_forward.1} parent=11 // pred_check
          %p219 = pneg %p86
        $region18: #{masked_language_model_forward.1} parent=11 // pred_check_branch
          %221 = sbr.rel (%p219) target = $region20
        $region19: #{masked_language_model_forward.1} parent=11 // pred_region
          _
        $region20: #{masked_language_model_forward.1} parent=11 // pred_fallthru
          _
        // Predicated region
        $region21: #{masked_language_model_forward.1} parent=11 // pred_check
          %p222 = pneg %p107
        $region22: #{masked_language_model_forward.1} parent=11 // pred_check_branch
          %224 = sbr.rel (%p222) target = $region24
        $region23: #{masked_language_model_forward.1} parent=11 // pred_region
          _
        $region24: #{masked_language_model_forward.1} parent=11 // pred_fallthru
          _
        // Predicated region
        $region25: #{masked_language_model_forward.1} parent=11 // pred_check
          %p225 = pneg %p128
        $region26: #{masked_language_model_forward.1} parent=11 // pred_check_branch
          %227 = sbr.rel (%p225) target = $region28
        $region27: #{masked_language_model_forward.1} parent=11 // pred_region
          _
        $region28: #{masked_language_model_forward.1} parent=11 // pred_fallthru
          _
        // Predicated region
        $region29: #{masked_language_model_forward.1} parent=11 // pred_check
          %p228 = pneg %p149
        $region30: #{masked_language_model_forward.1} parent=11 // pred_check_branch
          %230 = sbr.rel (%p228) target = $region32
        $region31: #{masked_language_model_forward.1} parent=11 // pred_region
          _
        $region32: #{masked_language_model_forward.1} parent=11 // pred_fallthru
          _
      $region12: #{masked_language_model_forward.1} parent=5 // pred_fallthru
        _
      %p231 = scmp.lt.s32.totalorder %s18, 2
      // Predicated region
      $region33: #{masked_language_model_forward.1} parent=5 // pred_check
        %p232 = pneg %p231
      $region34: #{masked_language_model_forward.1} parent=5 // pred_check_branch
        %234 = sbr.rel (%p232) target = $region36
      $region35: #{masked_language_model_forward.1} parent=5 // pred_region
        // Predicated region
        $region37: #{masked_language_model_forward.1} parent=35 // pred_check
          %p235 = pneg %p59
        $region38: #{masked_language_model_forward.1} parent=35 // pred_check_branch
          %237 = sbr.rel (%p235) target = $region40
        $region39: #{masked_language_model_forward.1} parent=35 // pred_region
          %p238 = scmp.lt.s32.totalorder %s18, 1
          %s239 = scalar_select %p238, %s18, 1
          %s240 = smul.addr %s239, 8
          %s241 = scalar_lea.vmem %s1, %s240
        $region40: #{masked_language_model_forward.1} parent=35 // pred_fallthru
          _
      $region36: #{masked_language_model_forward.1} parent=5 // pred_fallthru
        _
      %p242 = scmp.le.s32.totalorder 1, %s18
      %p243 = scmp.lt.s32.totalorder %s18, 3
      %p244 = pnand %p242, %p243
      %p245 = pneg %p244
      // Predicated region
      $region41: #{masked_language_model_forward.1} parent=5 // pred_check
        _
      $region42: #{masked_language_model_forward.1} parent=5 // pred_check_branch
        %247 = sbr.rel (%p244) target = $region44
      $region43: #{masked_language_model_forward.1} parent=5 // pred_region
        %s248 = ssub.s32 %s18, 1
        %p249 = pneg %p39
        %p250 = pneg %p36
        %p251 = scmp.lt.s32.totalorder %s23, 1
        %s252 = scalar_select %p251, %s23, 1
        %s253 = smul.addr %s252, 8
        %s254 = scalar_lea.vmem %s1, %s253
        %p255 = pneg %p65
        %p256 = pneg %p62
        %p257 = pneg %p86
        %p258 = pneg %p83
        %p259 = pneg %p107
        %p260 = pneg %p104
        %p261 = pneg %p128
        %p262 = pneg %p125
        %p263 = pneg %p149
        %p264 = pneg %p146
        %p265 = pneg %p175
        %p266 = pneg %p172
        %s267 = smul.u32 128, %s23
        %p268 = scmp.lt.s32.totalorder %s267, 255
        %s269 = scalar_select %p268, %s267, 255
        %s270 = smul.addr %s269, 8
        %s271 = scalar_lea.vmem %s6, %s270
        %p272 = pneg %p201
        %p273 = pneg %p198
        %s274 = sand.u32 %s188, 1
        %s275 = scalar_lea.sflag [#allocation5], %s274
        %s276 = sand.u32 %s188, 1
        %s277 = smul.addr %s276, 8
        %s278 = scalar_lea.vmem [#allocation4], %s277
        %p279 = scmp.lt.s32.totalorder %s23, 1
        %s280 = scalar_select %p279, %s23, 1
        %s281 = smul.addr %s280, 8
        %s282 = scalar_lea.vmem %s1, %s281
        %s283 = smul.u32 128, %s23
        %p284 = scmp.lt.s32.totalorder %s283, 255
        %s285 = scalar_select %p284, %s283, 255
        %s286 = smul.addr %s285, 8
        %s287 = scalar_lea.vmem %s6, %s286
        %s288 = smul.u32 128, %s23
        %v290 = vld [vmem:[%s282] sm:$0xff]
        %v291 = vlaneseq
        %v292 = vshrl.u32 %v291, 7
        %v293 = vlaneseq
        %v294 = vand.u32 %v293, 127
        %s295 = smul.u32 %s23, 8
        %v296 = vstv %s295
        %v297 = vadd.s32 %v296, %v292
        %v298 = vmul.u32 %v297, 128
        %v299 = vadd.s32 %v298, %v294
        %v300 = vmul.u32 %v299, 4
        %s301 = sld [smem:[#allocation3]]
        %s302 = smul.u32 %s301, 2654435769
        %v303 = vstv %s302
        %v304 = vadd.s32 %v300, %v303
        %v305 = vshra.s32 %v304, 16
        %v306 = vand.u32 %v305, 65535
        %v307 = vxor.u32 %v304, %v306
        %v308 = vmul.u32 %v307, 2146121005
        %v309 = vshra.s32 %v308, 15
        %v310 = vand.u32 %v309, 131071
        %v311 = vxor.u32 %v308, %v310
        %v312 = vmul.u32 %v311, 2221713035
        %v313 = vshra.s32 %v312, 16
        %v314 = vand.u32 %v313, 65535
        %v315 = vxor.u32 %v312, %v314
        %v316 = vadd.s32 %v304, 1
        %v317 = vshra.s32 %v316, 16
        %v318 = vand.u32 %v317, 65535
        %v319 = vxor.u32 %v316, %v318
        %v320 = vmul.u32 %v319, 2146121005
        %v321 = vshra.s32 %v320, 15
        %v322 = vand.u32 %v321, 131071
        %v323 = vxor.u32 %v320, %v322
        %v324 = vmul.u32 %v323, 2221713035
        %v325 = vshra.s32 %v324, 16
        %v326 = vand.u32 %v325, 65535
        %v327 = vxor.u32 %v324, %v326
        %v328 = vadd.s32 %v304, 2
        %v329 = vshra.s32 %v328, 16
        %v330 = vand.u32 %v329, 65535
        %v331 = vxor.u32 %v328, %v330
        %v332 = vmul.u32 %v331, 2146121005
        %v333 = vshra.s32 %v332, 15
        %v334 = vand.u32 %v333, 131071
        %v335 = vxor.u32 %v332, %v334
        %v336 = vmul.u32 %v335, 2221713035
        %v337 = vshra.s32 %v336, 16
        %v338 = vand.u32 %v337, 65535
        %v339 = vxor.u32 %v336, %v338
        %v340 = vadd.s32 %v304, 3
        %v341 = vshra.s32 %v340, 16
        %v342 = vand.u32 %v341, 65535
        %v343 = vxor.u32 %v340, %v342
        %v344 = vmul.u32 %v343, 2146121005
        %v345 = vshra.s32 %v344, 15
        %v346 = vand.u32 %v345, 131071
        %v347 = vxor.u32 %v344, %v346
        %v348 = vmul.u32 %v347, 2221713035
        %v349 = vshra.s32 %v348, 16
        %v350 = vand.u32 %v349, 65535
        %v351 = vxor.u32 %v348, %v350
        %v352 = vand.u32 %v315, 16777215
        %vm353 = vcmp.lt.s32.totalorder %v352, 2516582
        %vm354 = vcmp.ne.s32.totalorder %v290, 0
        %vm355 = vmand %vm353, %vm354
        %vm356 = vcmp.ne.s32.totalorder %v290, 21
        %vm357 = vmand %vm355, %vm356
        %v358 = vand.u32 %v327, 16777215
        %vm359 = vcmp.lt.s32.totalorder %v358, 1677721
        %vm360 = vmand %vm357, %vm359
        %v361 = vand.u32 %v339, 16777215
        %vm362 = vcmp.lt.s32.totalorder %v361, 1677721
        %vm363 = vmand %vm357, %vm362
        %v364 = vand.u32 %v351, 16777215
        %v365 = vmul.u32 %v364, 20
        %v366 = vshra.s32 %v365, 24
        %v367 = vadd.s32 %v366, 1
        %v368 = vsel %vm363, %v367, %v290
        %vm369 = vmxor %vm363, 1
        %vm370 = vmxor %vm360, 1
        %vm371 = vmand %vm369, %vm370
        %vm372 = vmand %vm357, %vm371
        %v373 = vsel %vm372, 22, %v368
        %v374 = vsel %vm357, %v290, 0
        %375 = vst [vmem:[%s278] sm:$0xff] %v374
        %376 = vxpose.xlu0.b32.start [1/16] %v373, 128
        %377 = vxpose.xlu0.b32.cont [2/16] 0, 128
        %378 = vxpose.xlu0.b32.cont [3/16] 0, 128
        %379 = vxpose.xlu0.b32.cont [4/16] 0, 128
        %380 = vxpose.xlu0.b32.cont [5/16] 0, 128
        %381 = vxpose.xlu0.b32.cont [6/16] 0, 128
        %382 = vxpose.xlu0.b32.cont [7/16] 0, 128
        %383 = vxpose.xlu0.b32.cont [8/16] 0, 128
        %384 = vxpose.xlu0.b32.cont [9/16] 0, 128
        %385 = vxpose.xlu0.b32.cont [10/16] 0, 128
        %386 = vxpose.xlu0.b32.cont [11/16] 0, 128
        %387 = vxpose.xlu0.b32.cont [12/16] 0, 128
        %388 = vxpose.xlu0.b32.cont [13/16] 0, 128
        %389 = vxpose.xlu0.b32.cont [14/16] 0, 128
        %390 = vxpose.xlu0.b32.cont [15/16] 0, 128
        %391 = vxpose.xlu0.b32.end [16/16] 0, 128
        %v392 = vpop.trf.xlu0
        %v393 = vpop.trf.xlu0
        %v394 = vpop.trf.xlu0
        %v395 = vpop.trf.xlu0
        %v396 = vpop.trf.xlu0
        %v397 = vpop.trf.xlu0
        %v398 = vpop.trf.xlu0
        %v399 = vpop.trf.xlu0
        %v400 = vpop.trf.xlu0
        %v401 = vpop.trf.xlu0
        %v402 = vpop.trf.xlu0
        %v403 = vpop.trf.xlu0
        %v404 = vpop.trf.xlu0
        %v405 = vpop.trf.xlu0
        %v406 = vpop.trf.xlu0
        %v407 = vpop.trf.xlu0
        %v408 = vsel %vm357, 1, 0
        %v409 = vcvt.s32.f32 %v408
        %410 = vxpose.xlu0.b32.start [1/16] %v409, 128
        %411 = vxpose.xlu0.b32.cont [2/16] 0.0, 128
        %412 = vxpose.xlu0.b32.cont [3/16] 0.0, 128
        %413 = vxpose.xlu0.b32.cont [4/16] 0.0, 128
        %414 = vxpose.xlu0.b32.cont [5/16] 0.0, 128
        %415 = vxpose.xlu0.b32.cont [6/16] 0.0, 128
        %416 = vxpose.xlu0.b32.cont [7/16] 0.0, 128
        %417 = vxpose.xlu0.b32.cont [8/16] 0.0, 128
        %418 = vxpose.xlu0.b32.cont [9/16] 0.0, 128
        %419 = vxpose.xlu0.b32.cont [10/16] 0.0, 128
        %420 = vxpose.xlu0.b32.cont [11/16] 0.0, 128
        %421 = vxpose.xlu0.b32.cont [12/16] 0.0, 128
        %422 = vxpose.xlu0.b32.cont [13/16] 0.0, 128
        %423 = vxpose.xlu0.b32.cont [14/16] 0.0, 128
        %424 = vxpose.xlu0.b32.cont [15/16] 0.0, 128
        %425 = vxpose.xlu0.b32.end [16/16] 0.0, 128
        %v426 = vpop.trf.xlu0
        %v427 = vpop.trf.xlu0
        %v428 = vpop.trf.xlu0
        %v429 = vpop.trf.xlu0
        %v430 = vpop.trf.xlu0
        %v431 = vpop.trf.xlu0
        %v432 = vpop.trf.xlu0
        %v433 = vpop.trf.xlu0
        %v434 = vpop.trf.xlu0
        %v435 = vpop.trf.xlu0
        %v436 = vpop.trf.xlu0
        %v437 = vpop.trf.xlu0
        %v438 = vpop.trf.xlu0
        %v439 = vpop.trf.xlu0
        %v440 = vpop.trf.xlu0
        %v441 = vpop.trf.xlu0
        %vm442 = vcmp.eq.s32.totalorder %v294, 31
        %443 = vset.pattern.permute.xlu0 0
        %444 = vperm.xlu0 %443, %v392
        %v445 = vpop.permute.xlu0 %444
        %446 = vset.pattern.permute.xlu0 0
        %447 = vperm.xlu0 %446, %v393
        %v448 = vpop.permute.xlu0 %447
        %449 = vset.pattern.permute.xlu0 0
        %450 = vperm.xlu0 %449, %v394
        %v451 = vpop.permute.xlu0 %450
        %452 = vset.pattern.permute.xlu0 0
        %453 = vperm.xlu0 %452, %v395
        %v454 = vpop.permute.xlu0 %453
        %455 = vset.pattern.permute.xlu0 0
        %456 = vperm.xlu0 %455, %v396
        %v457 = vpop.permute.xlu0 %456
        %458 = vset.pattern.permute.xlu0 0
        %459 = vperm.xlu0 %458, %v397
        %v460 = vpop.permute.xlu0 %459
        %461 = vset.pattern.permute.xlu0 0
        %462 = vperm.xlu0 %461, %v398
        %v463 = vpop.permute.xlu0 %462
        %464 = vset.pattern.permute.xlu0 0
        %465 = vperm.xlu0 %464, %v399
        %v466 = vpop.permute.xlu0 %465
        %467 = vset.pattern.permute.xlu0 0
        %468 = vperm.xlu0 %467, %v400
        %v469 = vpop.permute.xlu0 %468
        %470 = vset.pattern.permute.xlu0 0
        %471 = vperm.xlu0 %470, %v401
        %v472 = vpop.permute.xlu0 %471
        %473 = vset.pattern.permute.xlu0 0
        %474 = vperm.xlu0 %473, %v402
        %v475 = vpop.permute.xlu0 %474
        %476 = vset.pattern.permute.xlu0 0
        %477 = vperm.xlu0 %476, %v403
        %v478 = vpop.permute.xlu0 %477
        %479 = vset.pattern.permute.xlu0 0
        %480 = vperm.xlu0 %479, %v404
        %v481 = vpop.permute.xlu0 %480
        %482 = vset.pattern.permute.xlu0 0
        %483 = vperm.xlu0 %482, %v405
        %v484 = vpop.permute.xlu0 %483
        %485 = vset.pattern.permute.xlu0 0
        %486 = vperm.xlu0 %485, %v406
        %v487 = vpop.permute.xlu0 %486
        %488 = vset.pattern.permute.xlu0 0
        %489 = vperm.xlu0 %488, %v407
        %v490 = vpop.permute.xlu0 %489
        %vm491 = vcmp.eq.s32.totalorder %v445, %v294
        %vm492 = vcmp.eq.s32.totalorder %v448, %v294
        %vm493 = vcmp.eq.s32.totalorder %v451, %v294
        %vm494 = vcmp.eq.s32.totalorder %v454, %v294
        %vm495 = vcmp.eq.s32.totalorder %v457, %v294
        %vm496 = vcmp.eq.s32.totalorder %v460, %v294
        %vm497 = vcmp.eq.s32.totalorder %v463, %v294
        %vm498 = vcmp.eq.s32.totalorder %v466, %v294
        %vm499 = vcmp.eq.s32.totalorder %v469, %v294
        %vm500 = vcmp.eq.s32.totalorder %v472, %v294
        %vm501 = vcmp.eq.s32.totalorder %v475, %v294
        %vm502 = vcmp.eq.s32.totalorder %v478, %v294
        %vm503 = vcmp.eq.s32.totalorder %v481, %v294
        %vm504 = vcmp.eq.s32.totalorder %v484, %v294
        %vm505 = vcmp.eq.s32.totalorder %v487, %v294
        %vm506 = vcmp.eq.s32.totalorder %v490, %v294
        %v507 = vsel %vm491, 1, 0
        %v508 = vsel %vm492, 1, 0
        %v509 = vsel %vm493, 1, 0
        %v510 = vsel %vm494, 1, 0
        %v511 = vsel %vm495, 1, 0
        %v512 = vsel %vm496, 1, 0
        %v513 = vsel %vm497, 1, 0
        %v514 = vsel %vm498, 1, 0
        %v515 = vsel %vm499, 1, 0
        %v516 = vsel %vm500, 1, 0
        %v517 = vsel %vm501, 1, 0
        %v518 = vsel %vm502, 1, 0
        %v519 = vsel %vm503, 1, 0
        %v520 = vsel %vm504, 1, 0
        %v521 = vsel %vm505, 1, 0
        %v522 = vsel %vm506, 1, 0
        %v523 = vcvt.s32.f32 %v507
        %v524 = vcvt.s32.f32 %v508
        %v525 = vcvt.s32.f32 %v509
        %v526 = vcvt.s32.f32 %v510
        %v527 = vcvt.s32.f32 %v511
        %v528 = vcvt.s32.f32 %v512
        %v529 = vcvt.s32.f32 %v513
        %v530 = vcvt.s32.f32 %v514
        %v531 = vcvt.s32.f32 %v515
        %v532 = vcvt.s32.f32 %v516
        %v533 = vcvt.s32.f32 %v517
        %v534 = vcvt.s32.f32 %v518
        %v535 = vcvt.s32.f32 %v519
        %v536 = vcvt.s32.f32 %v520
        %v537 = vcvt.s32.f32 %v521
        %v538 = vcvt.s32.f32 %v522
        %540 = vset.pattern.permute.xlu0 0
        %541 = vperm.xlu0 %540, %v426
        %v542 = vpop.permute.xlu0 %541
        %545 = vset.pattern.permute.xlu0 0
        %546 = vperm.xlu0 %545, %v427
        %v547 = vpop.permute.xlu0 %546
        %550 = vset.pattern.permute.xlu0 0
        %551 = vperm.xlu0 %550, %v428
        %v552 = vpop.permute.xlu0 %551
        %555 = vset.pattern.permute.xlu0 0
        %556 = vperm.xlu0 %555, %v429
        %v557 = vpop.permute.xlu0 %556
        %560 = vset.pattern.permute.xlu0 0
        %561 = vperm.xlu0 %560, %v430
        %v562 = vpop.permute.xlu0 %561
        %565 = vset.pattern.permute.xlu0 0
        %566 = vperm.xlu0 %565, %v431
        %v567 = vpop.permute.xlu0 %566
        %570 = vset.pattern.permute.xlu0 0
        %571 = vperm.xlu0 %570, %v432
        %v572 = vpop.permute.xlu0 %571
        %575 = vset.pattern.permute.xlu0 0
        %576 = vperm.xlu0 %575, %v433
        %v577 = vpop.permute.xlu0 %576
        %580 = vset.pattern.permute.xlu0 0
        %581 = vperm.xlu0 %580, %v434
        %v582 = vpop.permute.xlu0 %581
        %585 = vset.pattern.permute.xlu0 0
        %586 = vperm.xlu0 %585, %v435
        %v587 = vpop.permute.xlu0 %586
        %590 = vset.pattern.permute.xlu0 0
        %591 = vperm.xlu0 %590, %v436
        %v592 = vpop.permute.xlu0 %591
        %595 = vset.pattern.permute.xlu0 0
        %596 = vperm.xlu0 %595, %v437
        %v597 = vpop.permute.xlu0 %596
        %600 = vset.pattern.permute.xlu0 0
        %601 = vperm.xlu0 %600, %v438
        %v602 = vpop.permute.xlu0 %601
        %605 = vset.pattern.permute.xlu0 0
        %606 = vperm.xlu0 %605, %v439
        %v607 = vpop.permute.xlu0 %606
        %610 = vset.pattern.permute.xlu0 0
        %611 = vperm.xlu0 %610, %v440
        %v612 = vpop.permute.xlu0 %611
        %615 = vset.pattern.permute.xlu0 0
        %616 = vperm.xlu0 %615, %v441
        %v617 = vpop.permute.xlu0 %616
        %v619 = vsel %vm442, %v542, %v523
        %v620 = vsel %vm442, %v547, %v524
        %v621 = vsel %vm442, %v552, %v525
        %v622 = vsel %vm442, %v557, %v526
        %v623 = vsel %vm442, %v562, %v527
        %v624 = vsel %vm442, %v567, %v528
        %v625 = vsel %vm442, %v572, %v529
        %v626 = vsel %vm442, %v577, %v530
        %v627 = vsel %vm442, %v582, %v531
        %v628 = vsel %vm442, %v587, %v532
        %v629 = vsel %vm442, %v592, %v533
        %v630 = vsel %vm442, %v597, %v534
        %v631 = vsel %vm442, %v602, %v535
        %v632 = vsel %vm442, %v607, %v536
        %v633 = vsel %vm442, %v612, %v537
        %v634 = vsel %vm442, %v617, %v538
        %v635 = vpack.c.bf16 %v619, %v619
        %v636 = vpack.c.bf16 %v620, %v620
        %v637 = vpack.c.bf16 %v621, %v621
        %v638 = vpack.c.bf16 %v622, %v622
        %v639 = vpack.c.bf16 %v623, %v623
        %v640 = vpack.c.bf16 %v624, %v624
        %v641 = vpack.c.bf16 %v625, %v625
        %v642 = vpack.c.bf16 %v626, %v626
        %v643 = vpack.c.bf16 %v627, %v627
        %v644 = vpack.c.bf16 %v628, %v628
        %v645 = vpack.c.bf16 %v629, %v629
        %v646 = vpack.c.bf16 %v630, %v630
        %v647 = vpack.c.bf16 %v631, %v631
        %v648 = vpack.c.bf16 %v632, %v632
        %v649 = vpack.c.bf16 %v633, %v633
        %v650 = vpack.c.bf16 %v634, %v634
        %vm651 = vcmask 257024
        %652 = vst.msk [vmem:[#allocation2] sm:$0xf] %vm651, %v635
        %653 = vst.msk [vmem:[#allocation2 + $0x4] sm:$0xf] %vm651, %v636
        %654 = vst.msk [vmem:[#allocation2 + $0x8] sm:$0xf] %vm651, %v637
        %655 = vst.msk [vmem:[#allocation2 + $0xc] sm:$0xf] %vm651, %v638
        %656 = vst.msk [vmem:[#allocation2 + $0x10] sm:$0xf] %vm651, %v639
        %657 = vst.msk [vmem:[#allocation2 + $0x14] sm:$0xf] %vm651, %v640
        %658 = vst.msk [vmem:[#allocation2 + $0x18] sm:$0xf] %vm651, %v641
        %659 = vst.msk [vmem:[#allocation2 + $0x1c] sm:$0xf] %vm651, %v642
        %660 = vst.msk [vmem:[#allocation2 + $0x20] sm:$0xf] %vm651, %v643
        %661 = vst.msk [vmem:[#allocation2 + $0x24] sm:$0xf] %vm651, %v644
        %662 = vst.msk [vmem:[#allocation2 + $0x28] sm:$0xf] %vm651, %v645
        %663 = vst.msk [vmem:[#allocation2 + $0x2c] sm:$0xf] %vm651, %v646
        %664 = vst.msk [vmem:[#allocation2 + $0x30] sm:$0xf] %vm651, %v647
        %665 = vst.msk [vmem:[#allocation2 + $0x34] sm:$0xf] %vm651, %v648
        %666 = vst.msk [vmem:[#allocation2 + $0x38] sm:$0xf] %vm651, %v649
        %667 = vst.msk [vmem:[#allocation2 + $0x3c] sm:$0xf] %vm651, %v650
        %668 = vset.pattern.permute.xlu0 1
        %669 = vperm.xlu0 %668, %v392
        %v670 = vpop.permute.xlu0 %669
        %671 = vset.pattern.permute.xlu0 1
        %672 = vperm.xlu0 %671, %v393
        %v673 = vpop.permute.xlu0 %672
        %674 = vset.pattern.permute.xlu0 1
        %675 = vperm.xlu0 %674, %v394
        %v676 = vpop.permute.xlu0 %675
        %677 = vset.pattern.permute.xlu0 1
        %678 = vperm.xlu0 %677, %v395
        %v679 = vpop.permute.xlu0 %678
        %680 = vset.pattern.permute.xlu0 1
        %681 = vperm.xlu0 %680, %v396
        %v682 = vpop.permute.xlu0 %681
        %683 = vset.pattern.permute.xlu0 1
        %684 = vperm.xlu0 %683, %v397
        %v685 = vpop.permute.xlu0 %684
        %686 = vset.pattern.permute.xlu0 1
        %687 = vperm.xlu0 %686, %v398
        %v688 = vpop.permute.xlu0 %687
        %689 = vset.pattern.permute.xlu0 1
        %690 = vperm.xlu0 %689, %v399
        %v691 = vpop.permute.xlu0 %690
        %692 = vset.pattern.permute.xlu0 1
        %693 = vperm.xlu0 %692, %v400
        %v694 = vpop.permute.xlu0 %693
        %695 = vset.pattern.permute.xlu0 1
        %696 = vperm.xlu0 %695, %v401
        %v697 = vpop.permute.xlu0 %696
        %698 = vset.pattern.permute.xlu0 1
        %699 = vperm.xlu0 %698, %v402
        %v700 = vpop.permute.xlu0 %699
        %701 = vset.pattern.permute.xlu0 1
        %702 = vperm.xlu0 %701, %v403
        %v703 = vpop.permute.xlu0 %702
        %704 = vset.pattern.permute.xlu0 1
        %705 = vperm.xlu0 %704, %v404
        %v706 = vpop.permute.xlu0 %705
        %707 = vset.pattern.permute.xlu0 1
        %708 = vperm.xlu0 %707, %v405
        %v709 = vpop.permute.xlu0 %708
        %710 = vset.pattern.permute.xlu0 1
        %711 = vperm.xlu0 %710, %v406
        %v712 = vpop.permute.xlu0 %711
        %713 = vset.pattern.permute.xlu0 1
        %714 = vperm.xlu0 %713, %v407
        %v715 = vpop.permute.xlu0 %714
        %vm716 = vcmp.eq.s32.totalorder %v670, %v294
        %vm717 = vcmp.eq.s32.totalorder %v673, %v294
        %vm718 = vcmp.eq.s32.totalorder %v676, %v294
        %vm719 = vcmp.eq.s32.totalorder %v679, %v294
        %vm720 = vcmp.eq.s32.totalorder %v682, %v294
        %vm721 = vcmp.eq.s32.totalorder %v685, %v294
        %vm722 = vcmp.eq.s32.totalorder %v688, %v294
        %vm723 = vcmp.eq.s32.totalorder %v691, %v294
        %vm724 = vcmp.eq.s32.totalorder %v694, %v294
        %vm725 = vcmp.eq.s32.totalorder %v697, %v294
        %vm726 = vcmp.eq.s32.totalorder %v700, %v294
        %vm727 = vcmp.eq.s32.totalorder %v703, %v294
        %vm728 = vcmp.eq.s32.totalorder %v706, %v294
        %vm729 = vcmp.eq.s32.totalorder %v709, %v294
        %vm730 = vcmp.eq.s32.totalorder %v712, %v294
        %vm731 = vcmp.eq.s32.totalorder %v715, %v294
        %v732 = vsel %vm716, 1, 0
        %v733 = vsel %vm717, 1, 0
        %v734 = vsel %vm718, 1, 0
        %v735 = vsel %vm719, 1, 0
        %v736 = vsel %vm720, 1, 0
        %v737 = vsel %vm721, 1, 0
        %v738 = vsel %vm722, 1, 0
        %v739 = vsel %vm723, 1, 0
        %v740 = vsel %vm724, 1, 0
        %v741 = vsel %vm725, 1, 0
        %v742 = vsel %vm726, 1, 0
        %v743 = vsel %vm727, 1, 0
        %v744 = vsel %vm728, 1, 0
        %v745 = vsel %vm729, 1, 0
        %v746 = vsel %vm730, 1, 0
        %v747 = vsel %vm731, 1, 0
        %v748 = vcvt.s32.f32 %v732
        %v749 = vcvt.s32.f32 %v733
        %v750 = vcvt.s32.f32 %v734
        %v751 = vcvt.s32.f32 %v735
        %v752 = vcvt.s32.f32 %v736
        %v753 = vcvt.s32.f32 %v737
        %v754 = vcvt.s32.f32 %v738
        %v755 = vcvt.s32.f32 %v739
        %v756 = vcvt.s32.f32 %v740
        %v757 = vcvt.s32.f32 %v741
        %v758 = vcvt.s32.f32 %v742
        %v759 = vcvt.s32.f32 %v743
        %v760 = vcvt.s32.f32 %v744
        %v761 = vcvt.s32.f32 %v745
        %v762 = vcvt.s32.f32 %v746
        %v763 = vcvt.s32.f32 %v747
        %764 = vset.pattern.permute.xlu0 1
        %765 = vperm.xlu0 %764, %v426
        %v766 = vpop.permute.xlu0 %765
        %768 = vset.pattern.permute.xlu0 1
        %769 = vperm.xlu0 %768, %v427
        %v770 = vpop.permute.xlu0 %769
        %772 = vset.pattern.permute.xlu0 1
        %773 = vperm.xlu0 %772, %v428
        %v774 = vpop.permute.xlu0 %773
        %776 = vset.pattern.permute.xlu0 1
        %777 = vperm.xlu0 %776, %v429
        %v778 = vpop.permute.xlu0 %777
        %780 = vset.pattern.permute.xlu0 1
        %781 = vperm.xlu0 %780, %v430
        %v782 = vpop.permute.xlu0 %781
        %784 = vset.pattern.permute.xlu0 1
        %785 = vperm.xlu0 %784, %v431
        %v786 = vpop.permute.xlu0 %785
        %788 = vset.pattern.permute.xlu0 1
        %789 = vperm.xlu0 %788, %v432
        %v790 = vpop.permute.xlu0 %789
        %792 = vset.pattern.permute.xlu0 1
        %793 = vperm.xlu0 %792, %v433
        %v794 = vpop.permute.xlu0 %793
        %796 = vset.pattern.permute.xlu0 1
        %797 = vperm.xlu0 %796, %v434
        %v798 = vpop.permute.xlu0 %797
        %800 = vset.pattern.permute.xlu0 1
        %801 = vperm.xlu0 %800, %v435
        %v802 = vpop.permute.xlu0 %801
        %804 = vset.pattern.permute.xlu0 1
        %805 = vperm.xlu0 %804, %v436
        %v806 = vpop.permute.xlu0 %805
        %808 = vset.pattern.permute.xlu0 1
        %809 = vperm.xlu0 %808, %v437
        %v810 = vpop.permute.xlu0 %809
        %812 = vset.pattern.permute.xlu0 1
        %813 = vperm.xlu0 %812, %v438
        %v814 = vpop.permute.xlu0 %813
        %816 = vset.pattern.permute.xlu0 1
        %817 = vperm.xlu0 %816, %v439
        %v818 = vpop.permute.xlu0 %817
        %820 = vset.pattern.permute.xlu0 1
        %821 = vperm.xlu0 %820, %v440
        %v822 = vpop.permute.xlu0 %821
        %824 = vset.pattern.permute.xlu0 1
        %825 = vperm.xlu0 %824, %v441
        %v826 = vpop.permute.xlu0 %825
        %v828 = vsel %vm442, %v766, %v748
        %v829 = vsel %vm442, %v770, %v749
        %v830 = vsel %vm442, %v774, %v750
        %v831 = vsel %vm442, %v778, %v751
        %v832 = vsel %vm442, %v782, %v752
        %v833 = vsel %vm442, %v786, %v753
        %v834 = vsel %vm442, %v790, %v754
        %v835 = vsel %vm442, %v794, %v755
        %v836 = vsel %vm442, %v798, %v756
        %v837 = vsel %vm442, %v802, %v757
        %v838 = vsel %vm442, %v806, %v758
        %v839 = vsel %vm442, %v810, %v759
        %v840 = vsel %vm442, %v814, %v760
        %v841 = vsel %vm442, %v818, %v761
        %v842 = vsel %vm442, %v822, %v762
        %v843 = vsel %vm442, %v826, %v763
        %v844 = vpack.c.bf16 %v828, %v828
        %v845 = vpack.c.bf16 %v829, %v829
        %v846 = vpack.c.bf16 %v830, %v830
        %v847 = vpack.c.bf16 %v831, %v831
        %v848 = vpack.c.bf16 %v832, %v832
        %v849 = vpack.c.bf16 %v833, %v833
        %v850 = vpack.c.bf16 %v834, %v834
        %v851 = vpack.c.bf16 %v835, %v835
        %v852 = vpack.c.bf16 %v836, %v836
        %v853 = vpack.c.bf16 %v837, %v837
        %v854 = vpack.c.bf16 %v838, %v838
        %v855 = vpack.c.bf16 %v839, %v839
        %v856 = vpack.c.bf16 %v840, %v840
        %v857 = vpack.c.bf16 %v841, %v841
        %v858 = vpack.c.bf16 %v842, %v842
        %v859 = vpack.c.bf16 %v843, %v843
        %860 = vst.msk [vmem:[#allocation2 + $0x40] sm:$0xf] %vm651, %v844
        %861 = vst.msk [vmem:[#allocation2 + $0x44] sm:$0xf] %vm651, %v845
        %862 = vst.msk [vmem:[#allocation2 + $0x48] sm:$0xf] %vm651, %v846
        %863 = vst.msk [vmem:[#allocation2 + $0x4c] sm:$0xf] %vm651, %v847
        %864 = vst.msk [vmem:[#allocation2 + $0x50] sm:$0xf] %vm651, %v848
        %865 = vst.msk [vmem:[#allocation2 + $0x54] sm:$0xf] %vm651, %v849
        %866 = vst.msk [vmem:[#allocation2 + $0x58] sm:$0xf] %vm651, %v850
        %867 = vst.msk [vmem:[#allocation2 + $0x5c] sm:$0xf] %vm651, %v851
        %868 = vst.msk [vmem:[#allocation2 + $0x60] sm:$0xf] %vm651, %v852
        %869 = vst.msk [vmem:[#allocation2 + $0x64] sm:$0xf] %vm651, %v853
        %870 = vst.msk [vmem:[#allocation2 + $0x68] sm:$0xf] %vm651, %v854
        %871 = vst.msk [vmem:[#allocation2 + $0x6c] sm:$0xf] %vm651, %v855
        %872 = vst.msk [vmem:[#allocation2 + $0x70] sm:$0xf] %vm651, %v856
        %873 = vst.msk [vmem:[#allocation2 + $0x74] sm:$0xf] %vm651, %v857
        %874 = vst.msk [vmem:[#allocation2 + $0x78] sm:$0xf] %vm651, %v858
        %875 = vst.msk [vmem:[#allocation2 + $0x7c] sm:$0xf] %vm651, %v859
        %876 = vset.pattern.permute.xlu0 2
        %877 = vperm.xlu0 %876, %v392
        %v878 = vpop.permute.xlu0 %877
        %879 = vset.pattern.permute.xlu0 2
        %880 = vperm.xlu0 %879, %v393
        %v881 = vpop.permute.xlu0 %880
        %882 = vset.pattern.permute.xlu0 2
        %883 = vperm.xlu0 %882, %v394
        %v884 = vpop.permute.xlu0 %883
        %885 = vset.pattern.permute.xlu0 2
        %886 = vperm.xlu0 %885, %v395
        %v887 = vpop.permute.xlu0 %886
        %888 = vset.pattern.permute.xlu0 2
        %889 = vperm.xlu0 %888, %v396
        %v890 = vpop.permute.xlu0 %889
        %891 = vset.pattern.permute.xlu0 2
        %892 = vperm.xlu0 %891, %v397
        %v893 = vpop.permute.xlu0 %892
        %894 = vset.pattern.permute.xlu0 2
        %895 = vperm.xlu0 %894, %v398
        %v896 = vpop.permute.xlu0 %895
        %897 = vset.pattern.permute.xlu0 2
        %898 = vperm.xlu0 %897, %v399
        %v899 = vpop.permute.xlu0 %898
        %900 = vset.pattern.permute.xlu0 2
        %901 = vperm.xlu0 %900, %v400
        %v902 = vpop.permute.xlu0 %901
        %903 = vset.pattern.permute.xlu0 2
        %904 = vperm.xlu0 %903, %v401
        %v905 = vpop.permute.xlu0 %904
        %906 = vset.pattern.permute.xlu0 2
        %907 = vperm.xlu0 %906, %v402
        %v908 = vpop.permute.xlu0 %907
        %909 = vset.pattern.permute.xlu0 2
        %910 = vperm.xlu0 %909, %v403
        %v911 = vpop.permute.xlu0 %910
        %912 = vset.pattern.permute.xlu0 2
        %913 = vperm.xlu0 %912, %v404
        %v914 = vpop.permute.xlu0 %913
        %915 = vset.pattern.permute.xlu0 2
        %916 = vperm.xlu0 %915, %v405
        %v917 = vpop.permute.xlu0 %916
        %918 = vset.pattern.permute.xlu0 2
        %919 = vperm.xlu0 %918, %v406
        %v920 = vpop.permute.xlu0 %919
        %921 = vset.pattern.permute.xlu0 2
        %922 = vperm.xlu0 %921, %v407
        %v923 = vpop.permute.xlu0 %922
        %vm924 = vcmp.eq.s32.totalorder %v878, %v294
        %vm925 = vcmp.eq.s32.totalorder %v881, %v294
        %vm926 = vcmp.eq.s32.totalorder %v884, %v294
        %vm927 = vcmp.eq.s32.totalorder %v887, %v294
        %vm928 = vcmp.eq.s32.totalorder %v890, %v294
        %vm929 = vcmp.eq.s32.totalorder %v893, %v294
        %vm930 = vcmp.eq.s32.totalorder %v896, %v294
        %vm931 = vcmp.eq.s32.totalorder %v899, %v294
        %vm932 = vcmp.eq.s32.totalorder %v902, %v294
        %vm933 = vcmp.eq.s32.totalorder %v905, %v294
        %vm934 = vcmp.eq.s32.totalorder %v908, %v294
        %vm935 = vcmp.eq.s32.totalorder %v911, %v294
        %vm936 = vcmp.eq.s32.totalorder %v914, %v294
        %vm937 = vcmp.eq.s32.totalorder %v917, %v294
        %vm938 = vcmp.eq.s32.totalorder %v920, %v294
        %vm939 = vcmp.eq.s32.totalorder %v923, %v294
        %v940 = vsel %vm924, 1, 0
        %v941 = vsel %vm925, 1, 0
        %v942 = vsel %vm926, 1, 0
        %v943 = vsel %vm927, 1, 0
        %v944 = vsel %vm928, 1, 0
        %v945 = vsel %vm929, 1, 0
        %v946 = vsel %vm930, 1, 0
        %v947 = vsel %vm931, 1, 0
        %v948 = vsel %vm932, 1, 0
        %v949 = vsel %vm933, 1, 0
        %v950 = vsel %vm934, 1, 0
        %v951 = vsel %vm935, 1, 0
        %v952 = vsel %vm936, 1, 0
        %v953 = vsel %vm937, 1, 0
        %v954 = vsel %vm938, 1, 0
        %v955 = vsel %vm939, 1, 0
        %v956 = vcvt.s32.f32 %v940
        %v957 = vcvt.s32.f32 %v941
        %v958 = vcvt.s32.f32 %v942
        %v959 = vcvt.s32.f32 %v943
        %v960 = vcvt.s32.f32 %v944
        %v961 = vcvt.s32.f32 %v945
        %v962 = vcvt.s32.f32 %v946
        %v963 = vcvt.s32.f32 %v947
        %v964 = vcvt.s32.f32 %v948
        %v965 = vcvt.s32.f32 %v949
        %v966 = vcvt.s32.f32 %v950
        %v967 = vcvt.s32.f32 %v951
        %v968 = vcvt.s32.f32 %v952
        %v969 = vcvt.s32.f32 %v953
        %v970 = vcvt.s32.f32 %v954
        %v971 = vcvt.s32.f32 %v955
        %972 = vset.pattern.permute.xlu0 2
        %973 = vperm.xlu0 %972, %v426
        %v974 = vpop.permute.xlu0 %973
        %976 = vset.pattern.permute.xlu0 2
        %977 = vperm.xlu0 %976, %v427
        %v978 = vpop.permute.xlu0 %977
        %980 = vset.pattern.permute.xlu0 2
        %981 = vperm.xlu0 %980, %v428
        %v982 = vpop.permute.xlu0 %981
        %984 = vset.pattern.permute.xlu0 2
        %985 = vperm.xlu0 %984, %v429
        %v986 = vpop.permute.xlu0 %985
        %988 = vset.pattern.permute.xlu0 2
        %989 = vperm.xlu0 %988, %v430
        %v990 = vpop.permute.xlu0 %989
        %992 = vset.pattern.permute.xlu0 2
        %993 = vperm.xlu0 %992, %v431
        %v994 = vpop.permute.xlu0 %993
        %996 = vset.pattern.permute.xlu0 2
        %997 = vperm.xlu0 %996, %v432
        %v998 = vpop.permute.xlu0 %997
        %1000 = vset.pattern.permute.xlu0 2
        %1001 = vperm.xlu0 %1000, %v433
        %v1002 = vpop.permute.xlu0 %1001
        %1004 = vset.pattern.permute.xlu0 2
        %1005 = vperm.xlu0 %1004, %v434
        %v1006 = vpop.permute.xlu0 %1005
        %1008 = vset.pattern.permute.xlu0 2
        %1009 = vperm.xlu0 %1008, %v435
        %v1010 = vpop.permute.xlu0 %1009
        %1012 = vset.pattern.permute.xlu0 2
        %1013 = vperm.xlu0 %1012, %v436
        %v1014 = vpop.permute.xlu0 %1013
        %1016 = vset.pattern.permute.xlu0 2
        %1017 = vperm.xlu0 %1016, %v437
        %v1018 = vpop.permute.xlu0 %1017
        %1020 = vset.pattern.permute.xlu0 2
        %1021 = vperm.xlu0 %1020, %v438
        %v1022 = vpop.permute.xlu0 %1021
        %1024 = vset.pattern.permute.xlu0 2
        %1025 = vperm.xlu0 %1024, %v439
        %v1026 = vpop.permute.xlu0 %1025
        %1028 = vset.pattern.permute.xlu0 2
        %1029 = vperm.xlu0 %1028, %v440
        %v1030 = vpop.permute.xlu0 %1029
        %1032 = vset.pattern.permute.xlu0 2
        %1033 = vperm.xlu0 %1032, %v441
        %v1034 = vpop.permute.xlu0 %1033
        %v1036 = vsel %vm442, %v974, %v956
        %v1037 = vsel %vm442, %v978, %v957
        %v1038 = vsel %vm442, %v982, %v958
        %v1039 = vsel %vm442, %v986, %v959
        %v1040 = vsel %vm442, %v990, %v960
        %v1041 = vsel %vm442, %v994, %v961
        %v1042 = vsel %vm442, %v998, %v962
        %v1043 = vsel %vm442, %v1002, %v963
        %v1044 = vsel %vm442, %v1006, %v964
        %v1045 = vsel %vm442, %v1010, %v965
        %v1046 = vsel %vm442, %v1014, %v966
        %v1047 = vsel %vm442, %v1018, %v967
        %v1048 = vsel %vm442, %v1022, %v968
        %v1049 = vsel %vm442, %v1026, %v969
        %v1050 = vsel %vm442, %v1030, %v970
        %v1051 = vsel %vm442, %v1034, %v971
        %v1052 = vpack.c.bf16 %v1036, %v1036
        %v1053 = vpack.c.bf16 %v1037, %v1037
        %v1054 = vpack.c.bf16 %v1038, %v1038
        %v1055 = vpack.c.bf16 %v1039, %v1039
        %v1056 = vpack.c.bf16 %v1040, %v1040
        %v1057 = vpack.c.bf16 %v1041, %v1041
        %v1058 = vpack.c.bf16 %v1042, %v1042
        %v1059 = vpack.c.bf16 %v1043, %v1043
        %v1060 = vpack.c.bf16 %v1044, %v1044
        %v1061 = vpack.c.bf16 %v1045, %v1045
        %v1062 = vpack.c.bf16 %v1046, %v1046
        %v1063 = vpack.c.bf16 %v1047, %v1047
        %v1064 = vpack.c.bf16 %v1048, %v1048
        %v1065 = vpack.c.bf16 %v1049, %v1049
        %v1066 = vpack.c.bf16 %v1050, %v1050
        %v1067 = vpack.c.bf16 %v1051, %v1051
        %1068 = vst.msk [vmem:[#allocation2 + $0x80] sm:$0xf] %vm651, %v1052
        %1069 = vst.msk [vmem:[#allocation2 + $0x84] sm:$0xf] %vm651, %v1053
        %1070 = vst.msk [vmem:[#allocation2 + $0x88] sm:$0xf] %vm651, %v1054
        %1071 = vst.msk [vmem:[#allocation2 + $0x8c] sm:$0xf] %vm651, %v1055
        %1072 = vst.msk [vmem:[#allocation2 + $0x90] sm:$0xf] %vm651, %v1056
        %1073 = vst.msk [vmem:[#allocation2 + $0x94] sm:$0xf] %vm651, %v1057
        %1074 = vst.msk [vmem:[#allocation2 + $0x98] sm:$0xf] %vm651, %v1058
        %1075 = vst.msk [vmem:[#allocation2 + $0x9c] sm:$0xf] %vm651, %v1059
        %1076 = vst.msk [vmem:[#allocation2 + $0xa0] sm:$0xf] %vm651, %v1060
        %1077 = vst.msk [vmem:[#allocation2 + $0xa4] sm:$0xf] %vm651, %v1061
        %1078 = vst.msk [vmem:[#allocation2 + $0xa8] sm:$0xf] %vm651, %v1062
        %1079 = vst.msk [vmem:[#allocation2 + $0xac] sm:$0xf] %vm651, %v1063
        %1080 = vst.msk [vmem:[#allocation2 + $0xb0] sm:$0xf] %vm651, %v1064
        %1081 = vst.msk [vmem:[#allocation2 + $0xb4] sm:$0xf] %vm651, %v1065
        %1082 = vst.msk [vmem:[#allocation2 + $0xb8] sm:$0xf] %vm651, %v1066
        %1083 = vst.msk [vmem:[#allocation2 + $0xbc] sm:$0xf] %vm651, %v1067
        %1084 = vset.pattern.permute.xlu0 3
        %1085 = vperm.xlu0 %1084, %v392
        %v1086 = vpop.permute.xlu0 %1085
        %1087 = vset.pattern.permute.xlu0 3
        %1088 = vperm.xlu0 %1087, %v393
        %v1089 = vpop.permute.xlu0 %1088
        %1090 = vset.pattern.permute.xlu0 3
        %1091 = vperm.xlu0 %1090, %v394
        %v1092 = vpop.permute.xlu0 %1091
        %1093 = vset.pattern.permute.xlu0 3
        %1094 = vperm.xlu0 %1093, %v395
        %v1095 = vpop.permute.xlu0 %1094
        %1096 = vset.pattern.permute.xlu0 3
        %1097 = vperm.xlu0 %1096, %v396
        %v1098 = vpop.permute.xlu0 %1097
        %1099 = vset.pattern.permute.xlu0 3
        %1100 = vperm.xlu0 %1099, %v397
        %v1101 = vpop.permute.xlu0 %1100
        %1102 = vset.pattern.permute.xlu0 3
        %1103 = vperm.xlu0 %1102, %v398
        %v1104 = vpop.permute.xlu0 %1103
        %1105 = vset.pattern.permute.xlu0 3
        %1106 = vperm.xlu0 %1105, %v399
        %v1107 = vpop.permute.xlu0 %1106
        %1108 = vset.pattern.permute.xlu0 3
        %1109 = vperm.xlu0 %1108, %v400
        %v1110 = vpop.permute.xlu0 %1109
        %1111 = vset.pattern.permute.xlu0 3
        %1112 = vperm.xlu0 %1111, %v401
        %v1113 = vpop.permute.xlu0 %1112
        %1114 = vset.pattern.permute.xlu0 3
        %1115 = vperm.xlu0 %1114, %v402
        %v1116 = vpop.permute.xlu0 %1115
        %1117 = vset.pattern.permute.xlu0 3
        %1118 = vperm.xlu0 %1117, %v403
        %v1119 = vpop.permute.xlu0 %1118
        %1120 = vset.pattern.permute.xlu0 3
        %1121 = vperm.xlu0 %1120, %v404
        %v1122 = vpop.permute.xlu0 %1121
        %1123 = vset.pattern.permute.xlu0 3
        %1124 = vperm.xlu0 %1123, %v405
        %v1125 = vpop.permute.xlu0 %1124
        %1126 = vset.pattern.permute.xlu0 3
        %1127 = vperm.xlu0 %1126, %v406
        %v1128 = vpop.permute.xlu0 %1127
        %1129 = vset.pattern.permute.xlu0 3
        %1130 = vperm.xlu0 %1129, %v407
        %v1131 = vpop.permute.xlu0 %1130
        %vm1132 = vcmp.eq.s32.totalorder %v1086, %v294
        %vm1133 = vcmp.eq.s32.totalorder %v1089, %v294
        %vm1134 = vcmp.eq.s32.totalorder %v1092, %v294
        %vm1135 = vcmp.eq.s32.totalorder %v1095, %v294
        %vm1136 = vcmp.eq.s32.totalorder %v1098, %v294
        %vm1137 = vcmp.eq.s32.totalorder %v1101, %v294
        %vm1138 = vcmp.eq.s32.totalorder %v1104, %v294
        %vm1139 = vcmp.eq.s32.totalorder %v1107, %v294
        %vm1140 = vcmp.eq.s32.totalorder %v1110, %v294
        %vm1141 = vcmp.eq.s32.totalorder %v1113, %v294
        %vm1142 = vcmp.eq.s32.totalorder %v1116, %v294
        %vm1143 = vcmp.eq.s32.totalorder %v1119, %v294
        %vm1144 = vcmp.eq.s32.totalorder %v1122, %v294
        %vm1145 = vcmp.eq.s32.totalorder %v1125, %v294
        %vm1146 = vcmp.eq.s32.totalorder %v1128, %v294
        %vm1147 = vcmp.eq.s32.totalorder %v1131, %v294
        %v1148 = vsel %vm1132, 1, 0
        %v1149 = vsel %vm1133, 1, 0
        %v1150 = vsel %vm1134, 1, 0
        %v1151 = vsel %vm1135, 1, 0
        %v1152 = vsel %vm1136, 1, 0
        %v1153 = vsel %vm1137, 1, 0
        %v1154 = vsel %vm1138, 1, 0
        %v1155 = vsel %vm1139, 1, 0
        %v1156 = vsel %vm1140, 1, 0
        %v1157 = vsel %vm1141, 1, 0
        %v1158 = vsel %vm1142, 1, 0
        %v1159 = vsel %vm1143, 1, 0
        %v1160 = vsel %vm1144, 1, 0
        %v1161 = vsel %vm1145, 1, 0
        %v1162 = vsel %vm1146, 1, 0
        %v1163 = vsel %vm1147, 1, 0
        %v1164 = vcvt.s32.f32 %v1148
        %v1165 = vcvt.s32.f32 %v1149
        %v1166 = vcvt.s32.f32 %v1150
        %v1167 = vcvt.s32.f32 %v1151
        %v1168 = vcvt.s32.f32 %v1152
        %v1169 = vcvt.s32.f32 %v1153
        %v1170 = vcvt.s32.f32 %v1154
        %v1171 = vcvt.s32.f32 %v1155
        %v1172 = vcvt.s32.f32 %v1156
        %v1173 = vcvt.s32.f32 %v1157
        %v1174 = vcvt.s32.f32 %v1158
        %v1175 = vcvt.s32.f32 %v1159
        %v1176 = vcvt.s32.f32 %v1160
        %v1177 = vcvt.s32.f32 %v1161
        %v1178 = vcvt.s32.f32 %v1162
        %v1179 = vcvt.s32.f32 %v1163
        %1180 = vset.pattern.permute.xlu0 3
        %1181 = vperm.xlu0 %1180, %v426
        %v1182 = vpop.permute.xlu0 %1181
        %1184 = vset.pattern.permute.xlu0 3
        %1185 = vperm.xlu0 %1184, %v427
        %v1186 = vpop.permute.xlu0 %1185
        %1188 = vset.pattern.permute.xlu0 3
        %1189 = vperm.xlu0 %1188, %v428
        %v1190 = vpop.permute.xlu0 %1189
        %1192 = vset.pattern.permute.xlu0 3
        %1193 = vperm.xlu0 %1192, %v429
        %v1194 = vpop.permute.xlu0 %1193
        %1196 = vset.pattern.permute.xlu0 3
        %1197 = vperm.xlu0 %1196, %v430
        %v1198 = vpop.permute.xlu0 %1197
        %1200 = vset.pattern.permute.xlu0 3
        %1201 = vperm.xlu0 %1200, %v431
        %v1202 = vpop.permute.xlu0 %1201
        %1204 = vset.pattern.permute.xlu0 3
        %1205 = vperm.xlu0 %1204, %v432
        %v1206 = vpop.permute.xlu0 %1205
        %1208 = vset.pattern.permute.xlu0 3
        %1209 = vperm.xlu0 %1208, %v433
        %v1210 = vpop.permute.xlu0 %1209
        %1212 = vset.pattern.permute.xlu0 3
        %1213 = vperm.xlu0 %1212, %v434
        %v1214 = vpop.permute.xlu0 %1213
        %1216 = vset.pattern.permute.xlu0 3
        %1217 = vperm.xlu0 %1216, %v435
        %v1218 = vpop.permute.xlu0 %1217
        %1220 = vset.pattern.permute.xlu0 3
        %1221 = vperm.xlu0 %1220, %v436
        %v1222 = vpop.permute.xlu0 %1221
        %1224 = vset.pattern.permute.xlu0 3
        %1225 = vperm.xlu0 %1224, %v437
        %v1226 = vpop.permute.xlu0 %1225
        %1228 = vset.pattern.permute.xlu0 3
        %1229 = vperm.xlu0 %1228, %v438
        %v1230 = vpop.permute.xlu0 %1229
        %1232 = vset.pattern.permute.xlu0 3
        %1233 = vperm.xlu0 %1232, %v439
        %v1234 = vpop.permute.xlu0 %1233
        %1236 = vset.pattern.permute.xlu0 3
        %1237 = vperm.xlu0 %1236, %v440
        %v1238 = vpop.permute.xlu0 %1237
        %1240 = vset.pattern.permute.xlu0 3
        %1241 = vperm.xlu0 %1240, %v441
        %v1242 = vpop.permute.xlu0 %1241
        %v1244 = vsel %vm442, %v1182, %v1164
        %v1245 = vsel %vm442, %v1186, %v1165
        %v1246 = vsel %vm442, %v1190, %v1166
        %v1247 = vsel %vm442, %v1194, %v1167
        %v1248 = vsel %vm442, %v1198, %v1168
        %v1249 = vsel %vm442, %v1202, %v1169
        %v1250 = vsel %vm442, %v1206, %v1170
        %v1251 = vsel %vm442, %v1210, %v1171
        %v1252 = vsel %vm442, %v1214, %v1172
        %v1253 = vsel %vm442, %v1218, %v1173
        %v1254 = vsel %vm442, %v1222, %v1174
        %v1255 = vsel %vm442, %v1226, %v1175
        %v1256 = vsel %vm442, %v1230, %v1176
        %v1257 = vsel %vm442, %v1234, %v1177
        %v1258 = vsel %vm442, %v1238, %v1178
        %v1259 = vsel %vm442, %v1242, %v1179
        %v1260 = vpack.c.bf16 %v1244, %v1244
        %v1261 = vpack.c.bf16 %v1245, %v1245
        %v1262 = vpack.c.bf16 %v1246, %v1246
        %v1263 = vpack.c.bf16 %v1247, %v1247
        %v1264 = vpack.c.bf16 %v1248, %v1248
        %v1265 = vpack.c.bf16 %v1249, %v1249
        %v1266 = vpack.c.bf16 %v1250, %v1250
        %v1267 = vpack.c.bf16 %v1251, %v1251
        %v1268 = vpack.c.bf16 %v1252, %v1252
        %v1269 = vpack.c.bf16 %v1253, %v1253
        %v1270 = vpack.c.bf16 %v1254, %v1254
        %v1271 = vpack.c.bf16 %v1255, %v1255
        %v1272 = vpack.c.bf16 %v1256, %v1256
        %v1273 = vpack.c.bf16 %v1257, %v1257
        %v1274 = vpack.c.bf16 %v1258, %v1258
        %v1275 = vpack.c.bf16 %v1259, %v1259
        %1276 = vst.msk [vmem:[#allocation2 + $0xc0] sm:$0xf] %vm651, %v1260
        %1277 = vst.msk [vmem:[#allocation2 + $0xc4] sm:$0xf] %vm651, %v1261
        %1278 = vst.msk [vmem:[#allocation2 + $0xc8] sm:$0xf] %vm651, %v1262
        %1279 = vst.msk [vmem:[#allocation2 + $0xcc] sm:$0xf] %vm651, %v1263
        %1280 = vst.msk [vmem:[#allocation2 + $0xd0] sm:$0xf] %vm651, %v1264
        %1281 = vst.msk [vmem:[#allocation2 + $0xd4] sm:$0xf] %vm651, %v1265
        %1282 = vst.msk [vmem:[#allocation2 + $0xd8] sm:$0xf] %vm651, %v1266
        %1283 = vst.msk [vmem:[#allocation2 + $0xdc] sm:$0xf] %vm651, %v1267
        %1284 = vst.msk [vmem:[#allocation2 + $0xe0] sm:$0xf] %vm651, %v1268
        %1285 = vst.msk [vmem:[#allocation2 + $0xe4] sm:$0xf] %vm651, %v1269
        %1286 = vst.msk [vmem:[#allocation2 + $0xe8] sm:$0xf] %vm651, %v1270
        %1287 = vst.msk [vmem:[#allocation2 + $0xec] sm:$0xf] %vm651, %v1271
        %1288 = vst.msk [vmem:[#allocation2 + $0xf0] sm:$0xf] %vm651, %v1272
        %1289 = vst.msk [vmem:[#allocation2 + $0xf4] sm:$0xf] %vm651, %v1273
        %1290 = vst.msk [vmem:[#allocation2 + $0xf8] sm:$0xf] %vm651, %v1274
        %1291 = vst.msk [vmem:[#allocation2 + $0xfc] sm:$0xf] %vm651, %v1275
        %1292 = vset.pattern.permute.xlu0 4
        %1293 = vperm.xlu0 %1292, %v392
        %v1294 = vpop.permute.xlu0 %1293
        %1295 = vset.pattern.permute.xlu0 4
        %1296 = vperm.xlu0 %1295, %v393
        %v1297 = vpop.permute.xlu0 %1296
        %1298 = vset.pattern.permute.xlu0 4
        %1299 = vperm.xlu0 %1298, %v394
        %v1300 = vpop.permute.xlu0 %1299
        %1301 = vset.pattern.permute.xlu0 4
        %1302 = vperm.xlu0 %1301, %v395
        %v1303 = vpop.permute.xlu0 %1302
        %1304 = vset.pattern.permute.xlu0 4
        %1305 = vperm.xlu0 %1304, %v396
        %v1306 = vpop.permute.xlu0 %1305
        %1307 = vset.pattern.permute.xlu0 4
        %1308 = vperm.xlu0 %1307, %v397
        %v1309 = vpop.permute.xlu0 %1308
        %1310 = vset.pattern.permute.xlu0 4
        %1311 = vperm.xlu0 %1310, %v398
        %v1312 = vpop.permute.xlu0 %1311
        %1313 = vset.pattern.permute.xlu0 4
        %1314 = vperm.xlu0 %1313, %v399
        %v1315 = vpop.permute.xlu0 %1314
        %1316 = vset.pattern.permute.xlu0 4
        %1317 = vperm.xlu0 %1316, %v400
        %v1318 = vpop.permute.xlu0 %1317
        %1319 = vset.pattern.permute.xlu0 4
        %1320 = vperm.xlu0 %1319, %v401
        %v1321 = vpop.permute.xlu0 %1320
        %1322 = vset.pattern.permute.xlu0 4
        %1323 = vperm.xlu0 %1322, %v402
        %v1324 = vpop.permute.xlu0 %1323
        %1325 = vset.pattern.permute.xlu0 4
        %1326 = vperm.xlu0 %1325, %v403
        %v1327 = vpop.permute.xlu0 %1326
        %1328 = vset.pattern.permute.xlu0 4
        %1329 = vperm.xlu0 %1328, %v404
        %v1330 = vpop.permute.xlu0 %1329
        %1331 = vset.pattern.permute.xlu0 4
        %1332 = vperm.xlu0 %1331, %v405
        %v1333 = vpop.permute.xlu0 %1332
        %1334 = vset.pattern.permute.xlu0 4
        %1335 = vperm.xlu0 %1334, %v406
        %v1336 = vpop.permute.xlu0 %1335
        %1337 = vset.pattern.permute.xlu0 4
        %1338 = vperm.xlu0 %1337, %v407
        %v1339 = vpop.permute.xlu0 %1338
        %vm1340 = vcmp.eq.s32.totalorder %v1294, %v294
        %vm1341 = vcmp.eq.s32.totalorder %v1297, %v294
        %vm1342 = vcmp.eq.s32.totalorder %v1300, %v294
        %vm1343 = vcmp.eq.s32.totalorder %v1303, %v294
        %vm1344 = vcmp.eq.s32.totalorder %v1306, %v294
        %vm1345 = vcmp.eq.s32.totalorder %v1309, %v294
        %vm1346 = vcmp.eq.s32.totalorder %v1312, %v294
        %vm1347 = vcmp.eq.s32.totalorder %v1315, %v294
        %vm1348 = vcmp.eq.s32.totalorder %v1318, %v294
        %vm1349 = vcmp.eq.s32.totalorder %v1321, %v294
        %vm1350 = vcmp.eq.s32.totalorder %v1324, %v294
        %vm1351 = vcmp.eq.s32.totalorder %v1327, %v294
        %vm1352 = vcmp.eq.s32.totalorder %v1330, %v294
        %vm1353 = vcmp.eq.s32.totalorder %v1333, %v294
        %vm1354 = vcmp.eq.s32.totalorder %v1336, %v294
        %vm1355 = vcmp.eq.s32.totalorder %v1339, %v294
        %v1356 = vsel %vm1340, 1, 0
        %v1357 = vsel %vm1341, 1, 0
        %v1358 = vsel %vm1342, 1, 0
        %v1359 = vsel %vm1343, 1, 0
        %v1360 = vsel %vm1344, 1, 0
        %v1361 = vsel %vm1345, 1, 0
        %v1362 = vsel %vm1346, 1, 0
        %v1363 = vsel %vm1347, 1, 0
        %v1364 = vsel %vm1348, 1, 0
        %v1365 = vsel %vm1349, 1, 0
        %v1366 = vsel %vm1350, 1, 0
        %v1367 = vsel %vm1351, 1, 0
        %v1368 = vsel %vm1352, 1, 0
        %v1369 = vsel %vm1353, 1, 0
        %v1370 = vsel %vm1354, 1, 0
        %v1371 = vsel %vm1355, 1, 0
        %v1372 = vcvt.s32.f32 %v1356
        %v1373 = vcvt.s32.f32 %v1357
        %v1374 = vcvt.s32.f32 %v1358
        %v1375 = vcvt.s32.f32 %v1359
        %v1376 = vcvt.s32.f32 %v1360
        %v1377 = vcvt.s32.f32 %v1361
        %v1378 = vcvt.s32.f32 %v1362
        %v1379 = vcvt.s32.f32 %v1363
        %v1380 = vcvt.s32.f32 %v1364
        %v1381 = vcvt.s32.f32 %v1365
        %v1382 = vcvt.s32.f32 %v1366
        %v1383 = vcvt.s32.f32 %v1367
        %v1384 = vcvt.s32.f32 %v1368
        %v1385 = vcvt.s32.f32 %v1369
        %v1386 = vcvt.s32.f32 %v1370
        %v1387 = vcvt.s32.f32 %v1371
        %1388 = vset.pattern.permute.xlu0 4
        %1389 = vperm.xlu0 %1388, %v426
        %v1390 = vpop.permute.xlu0 %1389
        %1392 = vset.pattern.permute.xlu0 4
        %1393 = vperm.xlu0 %1392, %v427
        %v1394 = vpop.permute.xlu0 %1393
        %1396 = vset.pattern.permute.xlu0 4
        %1397 = vperm.xlu0 %1396, %v428
        %v1398 = vpop.permute.xlu0 %1397
        %1400 = vset.pattern.permute.xlu0 4
        %1401 = vperm.xlu0 %1400, %v429
        %v1402 = vpop.permute.xlu0 %1401
        %1404 = vset.pattern.permute.xlu0 4
        %1405 = vperm.xlu0 %1404, %v430
        %v1406 = vpop.permute.xlu0 %1405
        %1408 = vset.pattern.permute.xlu0 4
        %1409 = vperm.xlu0 %1408, %v431
        %v1410 = vpop.permute.xlu0 %1409
        %1412 = vset.pattern.permute.xlu0 4
        %1413 = vperm.xlu0 %1412, %v432
        %v1414 = vpop.permute.xlu0 %1413
        %1416 = vset.pattern.permute.xlu0 4
        %1417 = vperm.xlu0 %1416, %v433
        %v1418 = vpop.permute.xlu0 %1417
        %1420 = vset.pattern.permute.xlu0 4
        %1421 = vperm.xlu0 %1420, %v434
        %v1422 = vpop.permute.xlu0 %1421
        %1424 = vset.pattern.permute.xlu0 4
        %1425 = vperm.xlu0 %1424, %v435
        %v1426 = vpop.permute.xlu0 %1425
        %1428 = vset.pattern.permute.xlu0 4
        %1429 = vperm.xlu0 %1428, %v436
        %v1430 = vpop.permute.xlu0 %1429
        %1432 = vset.pattern.permute.xlu0 4
        %1433 = vperm.xlu0 %1432, %v437
        %v1434 = vpop.permute.xlu0 %1433
        %1436 = vset.pattern.permute.xlu0 4
        %1437 = vperm.xlu0 %1436, %v438
        %v1438 = vpop.permute.xlu0 %1437
        %1440 = vset.pattern.permute.xlu0 4
        %1441 = vperm.xlu0 %1440, %v439
        %v1442 = vpop.permute.xlu0 %1441
        %1444 = vset.pattern.permute.xlu0 4
        %1445 = vperm.xlu0 %1444, %v440
        %v1446 = vpop.permute.xlu0 %1445
        %1448 = vset.pattern.permute.xlu0 4
        %1449 = vperm.xlu0 %1448, %v441
        %v1450 = vpop.permute.xlu0 %1449
        %v1452 = vsel %vm442, %v1390, %v1372
        %v1453 = vsel %vm442, %v1394, %v1373
        %v1454 = vsel %vm442, %v1398, %v1374
        %v1455 = vsel %vm442, %v1402, %v1375
        %v1456 = vsel %vm442, %v1406, %v1376
        %v1457 = vsel %vm442, %v1410, %v1377
        %v1458 = vsel %vm442, %v1414, %v1378
        %v1459 = vsel %vm442, %v1418, %v1379
        %v1460 = vsel %vm442, %v1422, %v1380
        %v1461 = vsel %vm442, %v1426, %v1381
        %v1462 = vsel %vm442, %v1430, %v1382
        %v1463 = vsel %vm442, %v1434, %v1383
        %v1464 = vsel %vm442, %v1438, %v1384
        %v1465 = vsel %vm442, %v1442, %v1385
        %v1466 = vsel %vm442, %v1446, %v1386
        %v1467 = vsel %vm442, %v1450, %v1387
        %v1468 = vpack.c.bf16 %v1452, %v1452
        %v1469 = vpack.c.bf16 %v1453, %v1453
        %v1470 = vpack.c.bf16 %v1454, %v1454
        %v1471 = vpack.c.bf16 %v1455, %v1455
        %v1472 = vpack.c.bf16 %v1456, %v1456
        %v1473 = vpack.c.bf16 %v1457, %v1457
        %v1474 = vpack.c.bf16 %v1458, %v1458
        %v1475 = vpack.c.bf16 %v1459, %v1459
        %v1476 = vpack.c.bf16 %v1460, %v1460
        %v1477 = vpack.c.bf16 %v1461, %v1461
        %v1478 = vpack.c.bf16 %v1462, %v1462
        %v1479 = vpack.c.bf16 %v1463, %v1463
        %v1480 = vpack.c.bf16 %v1464, %v1464
        %v1481 = vpack.c.bf16 %v1465, %v1465
        %v1482 = vpack.c.bf16 %v1466, %v1466
        %v1483 = vpack.c.bf16 %v1467, %v1467
        %1484 = vst.msk [vmem:[#allocation2 + $0x100] sm:$0xf] %vm651, %v1468
        %1485 = vst.msk [vmem:[#allocation2 + $0x104] sm:$0xf] %vm651, %v1469
        %1486 = vst.msk [vmem:[#allocation2 + $0x108] sm:$0xf] %vm651, %v1470
        %1487 = vst.msk [vmem:[#allocation2 + $0x10c] sm:$0xf] %vm651, %v1471
        %1488 = vst.msk [vmem:[#allocation2 + $0x110] sm:$0xf] %vm651, %v1472
        %1489 = vst.msk [vmem:[#allocation2 + $0x114] sm:$0xf] %vm651, %v1473
        %1490 = vst.msk [vmem:[#allocation2 + $0x118] sm:$0xf] %vm651, %v1474
        %1491 = vst.msk [vmem:[#allocation2 + $0x11c] sm:$0xf] %vm651, %v1475
        %1492 = vst.msk [vmem:[#allocation2 + $0x120] sm:$0xf] %vm651, %v1476
        %1493 = vst.msk [vmem:[#allocation2 + $0x124] sm:$0xf] %vm651, %v1477
        %1494 = vst.msk [vmem:[#allocation2 + $0x128] sm:$0xf] %vm651, %v1478
        %1495 = vst.msk [vmem:[#allocation2 + $0x12c] sm:$0xf] %vm651, %v1479
        %1496 = vst.msk [vmem:[#allocation2 + $0x130] sm:$0xf] %vm651, %v1480
        %1497 = vst.msk [vmem:[#allocation2 + $0x134] sm:$0xf] %vm651, %v1481
        %1498 = vst.msk [vmem:[#allocation2 + $0x138] sm:$0xf] %vm651, %v1482
        %1499 = vst.msk [vmem:[#allocation2 + $0x13c] sm:$0xf] %vm651, %v1483
        %1500 = vset.pattern.permute.xlu0 5
        %1501 = vperm.xlu0 %1500, %v392
        %v1502 = vpop.permute.xlu0 %1501
        %1503 = vset.pattern.permute.xlu0 5
        %1504 = vperm.xlu0 %1503, %v393
        %v1505 = vpop.permute.xlu0 %1504
        %1506 = vset.pattern.permute.xlu0 5
        %1507 = vperm.xlu0 %1506, %v394
        %v1508 = vpop.permute.xlu0 %1507
        %1509 = vset.pattern.permute.xlu0 5
        %1510 = vperm.xlu0 %1509, %v395
        %v1511 = vpop.permute.xlu0 %1510
        %1512 = vset.pattern.permute.xlu0 5
        %1513 = vperm.xlu0 %1512, %v396
        %v1514 = vpop.permute.xlu0 %1513
        %1515 = vset.pattern.permute.xlu0 5
        %1516 = vperm.xlu0 %1515, %v397
        %v1517 = vpop.permute.xlu0 %1516
        %1518 = vset.pattern.permute.xlu0 5
        %1519 = vperm.xlu0 %1518, %v398
        %v1520 = vpop.permute.xlu0 %1519
        %1521 = vset.pattern.permute.xlu0 5
        %1522 = vperm.xlu0 %1521, %v399
        %v1523 = vpop.permute.xlu0 %1522
        %1524 = vset.pattern.permute.xlu0 5
        %1525 = vperm.xlu0 %1524, %v400
        %v1526 = vpop.permute.xlu0 %1525
        %1527 = vset.pattern.permute.xlu0 5
        %1528 = vperm.xlu0 %1527, %v401
        %v1529 = vpop.permute.xlu0 %1528
        %1530 = vset.pattern.permute.xlu0 5
        %1531 = vperm.xlu0 %1530, %v402
        %v1532 = vpop.permute.xlu0 %1531
        %1533 = vset.pattern.permute.xlu0 5
        %1534 = vperm.xlu0 %1533, %v403
        %v1535 = vpop.permute.xlu0 %1534
        %1536 = vset.pattern.permute.xlu0 5
        %1537 = vperm.xlu0 %1536, %v404
        %v1538 = vpop.permute.xlu0 %1537
        %1539 = vset.pattern.permute.xlu0 5
        %1540 = vperm.xlu0 %1539, %v405
        %v1541 = vpop.permute.xlu0 %1540
        %1542 = vset.pattern.permute.xlu0 5
        %1543 = vperm.xlu0 %1542, %v406
        %v1544 = vpop.permute.xlu0 %1543
        %1545 = vset.pattern.permute.xlu0 5
        %1546 = vperm.xlu0 %1545, %v407
        %v1547 = vpop.permute.xlu0 %1546
        %vm1548 = vcmp.eq.s32.totalorder %v1502, %v294
        %vm1549 = vcmp.eq.s32.totalorder %v1505, %v294
        %vm1550 = vcmp.eq.s32.totalorder %v1508, %v294
        %vm1551 = vcmp.eq.s32.totalorder %v1511, %v294
        %vm1552 = vcmp.eq.s32.totalorder %v1514, %v294
        %vm1553 = vcmp.eq.s32.totalorder %v1517, %v294
        %vm1554 = vcmp.eq.s32.totalorder %v1520, %v294
        %vm1555 = vcmp.eq.s32.totalorder %v1523, %v294
        %vm1556 = vcmp.eq.s32.totalorder %v1526, %v294
        %vm1557 = vcmp.eq.s32.totalorder %v1529, %v294
        %vm1558 = vcmp.eq.s32.totalorder %v1532, %v294
        %vm1559 = vcmp.eq.s32.totalorder %v1535, %v294
        %vm1560 = vcmp.eq.s32.totalorder %v1538, %v294
        %vm1561 = vcmp.eq.s32.totalorder %v1541, %v294
        %vm1562 = vcmp.eq.s32.totalorder %v1544, %v294
        %vm1563 = vcmp.eq.s32.totalorder %v1547, %v294
        %v1564 = vsel %vm1548, 1, 0
        %v1565 = vsel %vm1549, 1, 0
        %v1566 = vsel %vm1550, 1, 0
        %v1567 = vsel %vm1551, 1, 0
        %v1568 = vsel %vm1552, 1, 0
        %v1569 = vsel %vm1553, 1, 0
        %v1570 = vsel %vm1554, 1, 0
        %v1571 = vsel %vm1555, 1, 0
        %v1572 = vsel %vm1556, 1, 0
        %v1573 = vsel %vm1557, 1, 0
        %v1574 = vsel %vm1558, 1, 0
        %v1575 = vsel %vm1559, 1, 0
        %v1576 = vsel %vm1560, 1, 0
        %v1577 = vsel %vm1561, 1, 0
        %v1578 = vsel %vm1562, 1, 0
        %v1579 = vsel %vm1563, 1, 0
        %v1580 = vcvt.s32.f32 %v1564
        %v1581 = vcvt.s32.f32 %v1565
        %v1582 = vcvt.s32.f32 %v1566
        %v1583 = vcvt.s32.f32 %v1567
        %v1584 = vcvt.s32.f32 %v1568
        %v1585 = vcvt.s32.f32 %v1569
        %v1586 = vcvt.s32.f32 %v1570
        %v1587 = vcvt.s32.f32 %v1571
        %v1588 = vcvt.s32.f32 %v1572
        %v1589 = vcvt.s32.f32 %v1573
        %v1590 = vcvt.s32.f32 %v1574
        %v1591 = vcvt.s32.f32 %v1575
        %v1592 = vcvt.s32.f32 %v1576
        %v1593 = vcvt.s32.f32 %v1577
        %v1594 = vcvt.s32.f32 %v1578
        %v1595 = vcvt.s32.f32 %v1579
        %1596 = vset.pattern.permute.xlu0 5
        %1597 = vperm.xlu0 %1596, %v426
        %v1598 = vpop.permute.xlu0 %1597
        %1600 = vset.pattern.permute.xlu0 5
        %1601 = vperm.xlu0 %1600, %v427
        %v1602 = vpop.permute.xlu0 %1601
        %1604 = vset.pattern.permute.xlu0 5
        %1605 = vperm.xlu0 %1604, %v428
        %v1606 = vpop.permute.xlu0 %1605
        %1608 = vset.pattern.permute.xlu0 5
        %1609 = vperm.xlu0 %1608, %v429
        %v1610 = vpop.permute.xlu0 %1609
        %1612 = vset.pattern.permute.xlu0 5
        %1613 = vperm.xlu0 %1612, %v430
        %v1614 = vpop.permute.xlu0 %1613
        %1616 = vset.pattern.permute.xlu0 5
        %1617 = vperm.xlu0 %1616, %v431
        %v1618 = vpop.permute.xlu0 %1617
        %1620 = vset.pattern.permute.xlu0 5
        %1621 = vperm.xlu0 %1620, %v432
        %v1622 = vpop.permute.xlu0 %1621
        %1624 = vset.pattern.permute.xlu0 5
        %1625 = vperm.xlu0 %1624, %v433
        %v1626 = vpop.permute.xlu0 %1625
        %1628 = vset.pattern.permute.xlu0 5
        %1629 = vperm.xlu0 %1628, %v434
        %v1630 = vpop.permute.xlu0 %1629
        %1632 = vset.pattern.permute.xlu0 5
        %1633 = vperm.xlu0 %1632, %v435
        %v1634 = vpop.permute.xlu0 %1633
        %1636 = vset.pattern.permute.xlu0 5
        %1637 = vperm.xlu0 %1636, %v436
        %v1638 = vpop.permute.xlu0 %1637
        %1640 = vset.pattern.permute.xlu0 5
        %1641 = vperm.xlu0 %1640, %v437
        %v1642 = vpop.permute.xlu0 %1641
        %1644 = vset.pattern.permute.xlu0 5
        %1645 = vperm.xlu0 %1644, %v438
        %v1646 = vpop.permute.xlu0 %1645
        %1648 = vset.pattern.permute.xlu0 5
        %1649 = vperm.xlu0 %1648, %v439
        %v1650 = vpop.permute.xlu0 %1649
        %1652 = vset.pattern.permute.xlu0 5
        %1653 = vperm.xlu0 %1652, %v440
        %v1654 = vpop.permute.xlu0 %1653
        %1656 = vset.pattern.permute.xlu0 5
        %1657 = vperm.xlu0 %1656, %v441
        %v1658 = vpop.permute.xlu0 %1657
        %v1660 = vsel %vm442, %v1598, %v1580
        %v1661 = vsel %vm442, %v1602, %v1581
        %v1662 = vsel %vm442, %v1606, %v1582
        %v1663 = vsel %vm442, %v1610, %v1583
        %v1664 = vsel %vm442, %v1614, %v1584
        %v1665 = vsel %vm442, %v1618, %v1585
        %v1666 = vsel %vm442, %v1622, %v1586
        %v1667 = vsel %vm442, %v1626, %v1587
        %v1668 = vsel %vm442, %v1630, %v1588
        %v1669 = vsel %vm442, %v1634, %v1589
        %v1670 = vsel %vm442, %v1638, %v1590
        %v1671 = vsel %vm442, %v1642, %v1591
        %v1672 = vsel %vm442, %v1646, %v1592
        %v1673 = vsel %vm442, %v1650, %v1593
        %v1674 = vsel %vm442, %v1654, %v1594
        %v1675 = vsel %vm442, %v1658, %v1595
        %v1676 = vpack.c.bf16 %v1660, %v1660
        %v1677 = vpack.c.bf16 %v1661, %v1661
        %v1678 = vpack.c.bf16 %v1662, %v1662
        %v1679 = vpack.c.bf16 %v1663, %v1663
        %v1680 = vpack.c.bf16 %v1664, %v1664
        %v1681 = vpack.c.bf16 %v1665, %v1665
        %v1682 = vpack.c.bf16 %v1666, %v1666
        %v1683 = vpack.c.bf16 %v1667, %v1667
        %v1684 = vpack.c.bf16 %v1668, %v1668
        %v1685 = vpack.c.bf16 %v1669, %v1669
        %v1686 = vpack.c.bf16 %v1670, %v1670
        %v1687 = vpack.c.bf16 %v1671, %v1671
        %v1688 = vpack.c.bf16 %v1672, %v1672
        %v1689 = vpack.c.bf16 %v1673, %v1673
        %v1690 = vpack.c.bf16 %v1674, %v1674
        %v1691 = vpack.c.bf16 %v1675, %v1675
        %1692 = vst.msk [vmem:[#allocation2 + $0x140] sm:$0xf] %vm651, %v1676
        %1693 = vst.msk [vmem:[#allocation2 + $0x144] sm:$0xf] %vm651, %v1677
        %1694 = vst.msk [vmem:[#allocation2 + $0x148] sm:$0xf] %vm651, %v1678
        %1695 = vst.msk [vmem:[#allocation2 + $0x14c] sm:$0xf] %vm651, %v1679
        %1696 = vst.msk [vmem:[#allocation2 + $0x150] sm:$0xf] %vm651, %v1680
        %1697 = vst.msk [vmem:[#allocation2 + $0x154] sm:$0xf] %vm651, %v1681
        %1698 = vst.msk [vmem:[#allocation2 + $0x158] sm:$0xf] %vm651, %v1682
        %1699 = vst.msk [vmem:[#allocation2 + $0x15c] sm:$0xf] %vm651, %v1683
        %1700 = vst.msk [vmem:[#allocation2 + $0x160] sm:$0xf] %vm651, %v1684
        %1701 = vst.msk [vmem:[#allocation2 + $0x164] sm:$0xf] %vm651, %v1685
        %1702 = vst.msk [vmem:[#allocation2 + $0x168] sm:$0xf] %vm651, %v1686
        %1703 = vst.msk [vmem:[#allocation2 + $0x16c] sm:$0xf] %vm651, %v1687
        %1704 = vst.msk [vmem:[#allocation2 + $0x170] sm:$0xf] %vm651, %v1688
        %1705 = vst.msk [vmem:[#allocation2 + $0x174] sm:$0xf] %vm651, %v1689
        %1706 = vst.msk [vmem:[#allocation2 + $0x178] sm:$0xf] %vm651, %v1690
        %1707 = vst.msk [vmem:[#allocation2 + $0x17c] sm:$0xf] %vm651, %v1691
        %1708 = vset.pattern.permute.xlu0 6
        %1709 = vperm.xlu0 %1708, %v392
        %v1710 = vpop.permute.xlu0 %1709
        %1711 = vset.pattern.permute.xlu0 6
        %1712 = vperm.xlu0 %1711, %v393
        %v1713 = vpop.permute.xlu0 %1712
        %1714 = vset.pattern.permute.xlu0 6
        %1715 = vperm.xlu0 %1714, %v394
        %v1716 = vpop.permute.xlu0 %1715
        %1717 = vset.pattern.permute.xlu0 6
        %1718 = vperm.xlu0 %1717, %v395
        %v1719 = vpop.permute.xlu0 %1718
        %1720 = vset.pattern.permute.xlu0 6
        %1721 = vperm.xlu0 %1720, %v396
        %v1722 = vpop.permute.xlu0 %1721
        %1723 = vset.pattern.permute.xlu0 6
        %1724 = vperm.xlu0 %1723, %v397
        %v1725 = vpop.permute.xlu0 %1724
        %1726 = vset.pattern.permute.xlu0 6
        %1727 = vperm.xlu0 %1726, %v398
        %v1728 = vpop.permute.xlu0 %1727
        %1729 = vset.pattern.permute.xlu0 6
        %1730 = vperm.xlu0 %1729, %v399
        %v1731 = vpop.permute.xlu0 %1730
        %1732 = vset.pattern.permute.xlu0 6
        %1733 = vperm.xlu0 %1732, %v400
        %v1734 = vpop.permute.xlu0 %1733
        %1735 = vset.pattern.permute.xlu0 6
        %1736 = vperm.xlu0 %1735, %v401
        %v1737 = vpop.permute.xlu0 %1736
        %1738 = vset.pattern.permute.xlu0 6
        %1739 = vperm.xlu0 %1738, %v402
        %v1740 = vpop.permute.xlu0 %1739
        %1741 = vset.pattern.permute.xlu0 6
        %1742 = vperm.xlu0 %1741, %v403
        %v1743 = vpop.permute.xlu0 %1742
        %1744 = vset.pattern.permute.xlu0 6
        %1745 = vperm.xlu0 %1744, %v404
        %v1746 = vpop.permute.xlu0 %1745
        %1747 = vset.pattern.permute.xlu0 6
        %1748 = vperm.xlu0 %1747, %v405
        %v1749 = vpop.permute.xlu0 %1748
        %1750 = vset.pattern.permute.xlu0 6
        %1751 = vperm.xlu0 %1750, %v406
        %v1752 = vpop.permute.xlu0 %1751
        %1753 = vset.pattern.permute.xlu0 6
        %1754 = vperm.xlu0 %1753, %v407
        %v1755 = vpop.permute.xlu0 %1754
        %vm1756 = vcmp.eq.s32.totalorder %v1710, %v294
        %vm1757 = vcmp.eq.s32.totalorder %v1713, %v294
        %vm1758 = vcmp.eq.s32.totalorder %v1716, %v294
        %vm1759 = vcmp.eq.s32.totalorder %v1719, %v294
        %vm1760 = vcmp.eq.s32.totalorder %v1722, %v294
        %vm1761 = vcmp.eq.s32.totalorder %v1725, %v294
        %vm1762 = vcmp.eq.s32.totalorder %v1728, %v294
        %vm1763 = vcmp.eq.s32.totalorder %v1731, %v294
        %vm1764 = vcmp.eq.s32.totalorder %v1734, %v294
        %vm1765 = vcmp.eq.s32.totalorder %v1737, %v294
        %vm1766 = vcmp.eq.s32.totalorder %v1740, %v294
        %vm1767 = vcmp.eq.s32.totalorder %v1743, %v294
        %vm1768 = vcmp.eq.s32.totalorder %v1746, %v294
        %vm1769 = vcmp.eq.s32.totalorder %v1749, %v294
        %vm1770 = vcmp.eq.s32.totalorder %v1752, %v294
        %vm1771 = vcmp.eq.s32.totalorder %v1755, %v294
        %v1772 = vsel %vm1756, 1, 0
        %v1773 = vsel %vm1757, 1, 0
        %v1774 = vsel %vm1758, 1, 0
        %v1775 = vsel %vm1759, 1, 0
        %v1776 = vsel %vm1760, 1, 0
        %v1777 = vsel %vm1761, 1, 0
        %v1778 = vsel %vm1762, 1, 0
        %v1779 = vsel %vm1763, 1, 0
        %v1780 = vsel %vm1764, 1, 0
        %v1781 = vsel %vm1765, 1, 0
        %v1782 = vsel %vm1766, 1, 0
        %v1783 = vsel %vm1767, 1, 0
        %v1784 = vsel %vm1768, 1, 0
        %v1785 = vsel %vm1769, 1, 0
        %v1786 = vsel %vm1770, 1, 0
        %v1787 = vsel %vm1771, 1, 0
        %v1788 = vcvt.s32.f32 %v1772
        %v1789 = vcvt.s32.f32 %v1773
        %v1790 = vcvt.s32.f32 %v1774
        %v1791 = vcvt.s32.f32 %v1775
        %v1792 = vcvt.s32.f32 %v1776
        %v1793 = vcvt.s32.f32 %v1777
        %v1794 = vcvt.s32.f32 %v1778
        %v1795 = vcvt.s32.f32 %v1779
        %v1796 = vcvt.s32.f32 %v1780
        %v1797 = vcvt.s32.f32 %v1781
        %v1798 = vcvt.s32.f32 %v1782
        %v1799 = vcvt.s32.f32 %v1783
        %v1800 = vcvt.s32.f32 %v1784
        %v1801 = vcvt.s32.f32 %v1785
        %v1802 = vcvt.s32.f32 %v1786
        %v1803 = vcvt.s32.f32 %v1787
        %1804 = vset.pattern.permute.xlu0 6
        %1805 = vperm.xlu0 %1804, %v426
        %v1806 = vpop.permute.xlu0 %1805
        %1808 = vset.pattern.permute.xlu0 6
        %1809 = vperm.xlu0 %1808, %v427
        %v1810 = vpop.permute.xlu0 %1809
        %1812 = vset.pattern.permute.xlu0 6
        %1813 = vperm.xlu0 %1812, %v428
        %v1814 = vpop.permute.xlu0 %1813
        %1816 = vset.pattern.permute.xlu0 6
        %1817 = vperm.xlu0 %1816, %v429
        %v1818 = vpop.permute.xlu0 %1817
        %1820 = vset.pattern.permute.xlu0 6
        %1821 = vperm.xlu0 %1820, %v430
        %v1822 = vpop.permute.xlu0 %1821
        %1824 = vset.pattern.permute.xlu0 6
        %1825 = vperm.xlu0 %1824, %v431
        %v1826 = vpop.permute.xlu0 %1825
        %1828 = vset.pattern.permute.xlu0 6
        %1829 = vperm.xlu0 %1828, %v432
        %v1830 = vpop.permute.xlu0 %1829
        %1832 = vset.pattern.permute.xlu0 6
        %1833 = vperm.xlu0 %1832, %v433
        %v1834 = vpop.permute.xlu0 %1833
        %1836 = vset.pattern.permute.xlu0 6
        %1837 = vperm.xlu0 %1836, %v434
        %v1838 = vpop.permute.xlu0 %1837
        %1840 = vset.pattern.permute.xlu0 6
        %1841 = vperm.xlu0 %1840, %v435
        %v1842 = vpop.permute.xlu0 %1841
        %1844 = vset.pattern.permute.xlu0 6
        %1845 = vperm.xlu0 %1844, %v436
        %v1846 = vpop.permute.xlu0 %1845
        %1848 = vset.pattern.permute.xlu0 6
        %1849 = vperm.xlu0 %1848, %v437
        %v1850 = vpop.permute.xlu0 %1849
        %1852 = vset.pattern.permute.xlu0 6
        %1853 = vperm.xlu0 %1852, %v438
        %v1854 = vpop.permute.xlu0 %1853
        %1856 = vset.pattern.permute.xlu0 6
        %1857 = vperm.xlu0 %1856, %v439
        %v1858 = vpop.permute.xlu0 %1857
        %1860 = vset.pattern.permute.xlu0 6
        %1861 = vperm.xlu0 %1860, %v440
        %v1862 = vpop.permute.xlu0 %1861
        %1864 = vset.pattern.permute.xlu0 6
        %1865 = vperm.xlu0 %1864, %v441
        %v1866 = vpop.permute.xlu0 %1865
        %v1868 = vsel %vm442, %v1806, %v1788
        %v1869 = vsel %vm442, %v1810, %v1789
        %v1870 = vsel %vm442, %v1814, %v1790
        %v1871 = vsel %vm442, %v1818, %v1791
        %v1872 = vsel %vm442, %v1822, %v1792
        %v1873 = vsel %vm442, %v1826, %v1793
        %v1874 = vsel %vm442, %v1830, %v1794
        %v1875 = vsel %vm442, %v1834, %v1795
        %v1876 = vsel %vm442, %v1838, %v1796
        %v1877 = vsel %vm442, %v1842, %v1797
        %v1878 = vsel %vm442, %v1846, %v1798
        %v1879 = vsel %vm442, %v1850, %v1799
        %v1880 = vsel %vm442, %v1854, %v1800
        %v1881 = vsel %vm442, %v1858, %v1801
        %v1882 = vsel %vm442, %v1862, %v1802
        %v1883 = vsel %vm442, %v1866, %v1803
        %v1884 = vpack.c.bf16 %v1868, %v1868
        %v1885 = vpack.c.bf16 %v1869, %v1869
        %v1886 = vpack.c.bf16 %v1870, %v1870
        %v1887 = vpack.c.bf16 %v1871, %v1871
        %v1888 = vpack.c.bf16 %v1872, %v1872
        %v1889 = vpack.c.bf16 %v1873, %v1873
        %v1890 = vpack.c.bf16 %v1874, %v1874
        %v1891 = vpack.c.bf16 %v1875, %v1875
        %v1892 = vpack.c.bf16 %v1876, %v1876
        %v1893 = vpack.c.bf16 %v1877, %v1877
        %v1894 = vpack.c.bf16 %v1878, %v1878
        %v1895 = vpack.c.bf16 %v1879, %v1879
        %v1896 = vpack.c.bf16 %v1880, %v1880
        %v1897 = vpack.c.bf16 %v1881, %v1881
        %v1898 = vpack.c.bf16 %v1882, %v1882
        %v1899 = vpack.c.bf16 %v1883, %v1883
        %1900 = vst.msk [vmem:[#allocation2 + $0x180] sm:$0xf] %vm651, %v1884
        %1901 = vst.msk [vmem:[#allocation2 + $0x184] sm:$0xf] %vm651, %v1885
        %1902 = vst.msk [vmem:[#allocation2 + $0x188] sm:$0xf] %vm651, %v1886
        %1903 = vst.msk [vmem:[#allocation2 + $0x18c] sm:$0xf] %vm651, %v1887
        %1904 = vst.msk [vmem:[#allocation2 + $0x190] sm:$0xf] %vm651, %v1888
        %1905 = vst.msk [vmem:[#allocation2 + $0x194] sm:$0xf] %vm651, %v1889
        %1906 = vst.msk [vmem:[#allocation2 + $0x198] sm:$0xf] %vm651, %v1890
        %1907 = vst.msk [vmem:[#allocation2 + $0x19c] sm:$0xf] %vm651, %v1891
        %1908 = vst.msk [vmem:[#allocation2 + $0x1a0] sm:$0xf] %vm651, %v1892
        %1909 = vst.msk [vmem:[#allocation2 + $0x1a4] sm:$0xf] %vm651, %v1893
        %1910 = vst.msk [vmem:[#allocation2 + $0x1a8] sm:$0xf] %vm651, %v1894
        %1911 = vst.msk [vmem:[#allocation2 + $0x1ac] sm:$0xf] %vm651, %v1895
        %1912 = vst.msk [vmem:[#allocation2 + $0x1b0] sm:$0xf] %vm651, %v1896
        %1913 = vst.msk [vmem:[#allocation2 + $0x1b4] sm:$0xf] %vm651, %v1897
        %1914 = vst.msk [vmem:[#allocation2 + $0x1b8] sm:$0xf] %vm651, %v1898
        %1915 = vst.msk [vmem:[#allocation2 + $0x1bc] sm:$0xf] %vm651, %v1899
        %1916 = vset.pattern.permute.xlu0 7
        %1917 = vperm.xlu0 %1916, %v392
        %v1918 = vpop.permute.xlu0 %1917
        %1919 = vset.pattern.permute.xlu0 7
        %1920 = vperm.xlu0 %1919, %v393
        %v1921 = vpop.permute.xlu0 %1920
        %1922 = vset.pattern.permute.xlu0 7
        %1923 = vperm.xlu0 %1922, %v394
        %v1924 = vpop.permute.xlu0 %1923
        %1925 = vset.pattern.permute.xlu0 7
        %1926 = vperm.xlu0 %1925, %v395
        %v1927 = vpop.permute.xlu0 %1926
        %1928 = vset.pattern.permute.xlu0 7
        %1929 = vperm.xlu0 %1928, %v396
        %v1930 = vpop.permute.xlu0 %1929
        %1931 = vset.pattern.permute.xlu0 7
        %1932 = vperm.xlu0 %1931, %v397
        %v1933 = vpop.permute.xlu0 %1932
        %1934 = vset.pattern.permute.xlu0 7
        %1935 = vperm.xlu0 %1934, %v398
        %v1936 = vpop.permute.xlu0 %1935
        %1937 = vset.pattern.permute.xlu0 7
        %1938 = vperm.xlu0 %1937, %v399
        %v1939 = vpop.permute.xlu0 %1938
        %1940 = vset.pattern.permute.xlu0 7
        %1941 = vperm.xlu0 %1940, %v400
        %v1942 = vpop.permute.xlu0 %1941
        %1943 = vset.pattern.permute.xlu0 7
        %1944 = vperm.xlu0 %1943, %v401
        %v1945 = vpop.permute.xlu0 %1944
        %1946 = vset.pattern.permute.xlu0 7
        %1947 = vperm.xlu0 %1946, %v402
        %v1948 = vpop.permute.xlu0 %1947
        %1949 = vset.pattern.permute.xlu0 7
        %1950 = vperm.xlu0 %1949, %v403
        %v1951 = vpop.permute.xlu0 %1950
        %1952 = vset.pattern.permute.xlu0 7
        %1953 = vperm.xlu0 %1952, %v404
        %v1954 = vpop.permute.xlu0 %1953
        %1955 = vset.pattern.permute.xlu0 7
        %1956 = vperm.xlu0 %1955, %v405
        %v1957 = vpop.permute.xlu0 %1956
        %1958 = vset.pattern.permute.xlu0 7
        %1959 = vperm.xlu0 %1958, %v406
        %v1960 = vpop.permute.xlu0 %1959
        %1961 = vset.pattern.permute.xlu0 7
        %1962 = vperm.xlu0 %1961, %v407
        %v1963 = vpop.permute.xlu0 %1962
        %vm1964 = vcmp.eq.s32.totalorder %v1918, %v294
        %vm1965 = vcmp.eq.s32.totalorder %v1921, %v294
        %vm1966 = vcmp.eq.s32.totalorder %v1924, %v294
        %vm1967 = vcmp.eq.s32.totalorder %v1927, %v294
        %vm1968 = vcmp.eq.s32.totalorder %v1930, %v294
        %vm1969 = vcmp.eq.s32.totalorder %v1933, %v294
        %vm1970 = vcmp.eq.s32.totalorder %v1936, %v294
        %vm1971 = vcmp.eq.s32.totalorder %v1939, %v294
        %vm1972 = vcmp.eq.s32.totalorder %v1942, %v294
        %vm1973 = vcmp.eq.s32.totalorder %v1945, %v294
        %vm1974 = vcmp.eq.s32.totalorder %v1948, %v294
        %vm1975 = vcmp.eq.s32.totalorder %v1951, %v294
        %vm1976 = vcmp.eq.s32.totalorder %v1954, %v294
        %vm1977 = vcmp.eq.s32.totalorder %v1957, %v294
        %vm1978 = vcmp.eq.s32.totalorder %v1960, %v294
        %vm1979 = vcmp.eq.s32.totalorder %v1963, %v294
        %v1980 = vsel %vm1964, 1, 0
        %v1981 = vsel %vm1965, 1, 0
        %v1982 = vsel %vm1966, 1, 0
        %v1983 = vsel %vm1967, 1, 0
        %v1984 = vsel %vm1968, 1, 0
        %v1985 = vsel %vm1969, 1, 0
        %v1986 = vsel %vm1970, 1, 0
        %v1987 = vsel %vm1971, 1, 0
        %v1988 = vsel %vm1972, 1, 0
        %v1989 = vsel %vm1973, 1, 0
        %v1990 = vsel %vm1974, 1, 0
        %v1991 = vsel %vm1975, 1, 0
        %v1992 = vsel %vm1976, 1, 0
        %v1993 = vsel %vm1977, 1, 0
        %v1994 = vsel %vm1978, 1, 0
        %v1995 = vsel %vm1979, 1, 0
        %v1996 = vcvt.s32.f32 %v1980
        %v1997 = vcvt.s32.f32 %v1981
        %v1998 = vcvt.s32.f32 %v1982
        %v1999 = vcvt.s32.f32 %v1983
        %v2000 = vcvt.s32.f32 %v1984
        %v2001 = vcvt.s32.f32 %v1985
        %v2002 = vcvt.s32.f32 %v1986
        %v2003 = vcvt.s32.f32 %v1987
        %v2004 = vcvt.s32.f32 %v1988
        %v2005 = vcvt.s32.f32 %v1989
        %v2006 = vcvt.s32.f32 %v1990
        %v2007 = vcvt.s32.f32 %v1991
        %v2008 = vcvt.s32.f32 %v1992
        %v2009 = vcvt.s32.f32 %v1993
        %v2010 = vcvt.s32.f32 %v1994
        %v2011 = vcvt.s32.f32 %v1995
        %2012 = vset.pattern.permute.xlu0 7
        %2013 = vperm.xlu0 %2012, %v426
        %v2014 = vpop.permute.xlu0 %2013
        %2016 = vset.pattern.permute.xlu0 7
        %2017 = vperm.xlu0 %2016, %v427
        %v2018 = vpop.permute.xlu0 %2017
        %2020 = vset.pattern.permute.xlu0 7
        %2021 = vperm.xlu0 %2020, %v428
        %v2022 = vpop.permute.xlu0 %2021
        %2024 = vset.pattern.permute.xlu0 7
        %2025 = vperm.xlu0 %2024, %v429
        %v2026 = vpop.permute.xlu0 %2025
        %2028 = vset.pattern.permute.xlu0 7
        %2029 = vperm.xlu0 %2028, %v430
        %v2030 = vpop.permute.xlu0 %2029
        %2032 = vset.pattern.permute.xlu0 7
        %2033 = vperm.xlu0 %2032, %v431
        %v2034 = vpop.permute.xlu0 %2033
        %2036 = vset.pattern.permute.xlu0 7
        %2037 = vperm.xlu0 %2036, %v432
        %v2038 = vpop.permute.xlu0 %2037
        %2040 = vset.pattern.permute.xlu0 7
        %2041 = vperm.xlu0 %2040, %v433
        %v2042 = vpop.permute.xlu0 %2041
        %2044 = vset.pattern.permute.xlu0 7
        %2045 = vperm.xlu0 %2044, %v434
        %v2046 = vpop.permute.xlu0 %2045
        %2048 = vset.pattern.permute.xlu0 7
        %2049 = vperm.xlu0 %2048, %v435
        %v2050 = vpop.permute.xlu0 %2049
        %2052 = vset.pattern.permute.xlu0 7
        %2053 = vperm.xlu0 %2052, %v436
        %v2054 = vpop.permute.xlu0 %2053
        %2056 = vset.pattern.permute.xlu0 7
        %2057 = vperm.xlu0 %2056, %v437
        %v2058 = vpop.permute.xlu0 %2057
        %2060 = vset.pattern.permute.xlu0 7
        %2061 = vperm.xlu0 %2060, %v438
        %v2062 = vpop.permute.xlu0 %2061
        %2064 = vset.pattern.permute.xlu0 7
        %2065 = vperm.xlu0 %2064, %v439
        %v2066 = vpop.permute.xlu0 %2065
        %2068 = vset.pattern.permute.xlu0 7
        %2069 = vperm.xlu0 %2068, %v440
        %v2070 = vpop.permute.xlu0 %2069
        %2072 = vset.pattern.permute.xlu0 7
        %2073 = vperm.xlu0 %2072, %v441
        %v2074 = vpop.permute.xlu0 %2073
        %v2076 = vsel %vm442, %v2014, %v1996
        %v2077 = vsel %vm442, %v2018, %v1997
        %v2078 = vsel %vm442, %v2022, %v1998
        %v2079 = vsel %vm442, %v2026, %v1999
        %v2080 = vsel %vm442, %v2030, %v2000
        %v2081 = vsel %vm442, %v2034, %v2001
        %v2082 = vsel %vm442, %v2038, %v2002
        %v2083 = vsel %vm442, %v2042, %v2003
        %v2084 = vsel %vm442, %v2046, %v2004
        %v2085 = vsel %vm442, %v2050, %v2005
        %v2086 = vsel %vm442, %v2054, %v2006
        %v2087 = vsel %vm442, %v2058, %v2007
        %v2088 = vsel %vm442, %v2062, %v2008
        %v2089 = vsel %vm442, %v2066, %v2009
        %v2090 = vsel %vm442, %v2070, %v2010
        %v2091 = vsel %vm442, %v2074, %v2011
        %v2092 = vpack.c.bf16 %v2076, %v2076
        %v2093 = vpack.c.bf16 %v2077, %v2077
        %v2094 = vpack.c.bf16 %v2078, %v2078
        %v2095 = vpack.c.bf16 %v2079, %v2079
        %v2096 = vpack.c.bf16 %v2080, %v2080
        %v2097 = vpack.c.bf16 %v2081, %v2081
        %v2098 = vpack.c.bf16 %v2082, %v2082
        %v2099 = vpack.c.bf16 %v2083, %v2083
        %v2100 = vpack.c.bf16 %v2084, %v2084
        %v2101 = vpack.c.bf16 %v2085, %v2085
        %v2102 = vpack.c.bf16 %v2086, %v2086
        %v2103 = vpack.c.bf16 %v2087, %v2087
        %v2104 = vpack.c.bf16 %v2088, %v2088
        %v2105 = vpack.c.bf16 %v2089, %v2089
        %v2106 = vpack.c.bf16 %v2090, %v2090
        %v2107 = vpack.c.bf16 %v2091, %v2091
        %2108 = vst.msk [vmem:[#allocation2 + $0x1c0] sm:$0xf] %vm651, %v2092
        %2109 = vst.msk [vmem:[#allocation2 + $0x1c4] sm:$0xf] %vm651, %v2093
        %2110 = vst.msk [vmem:[#allocation2 + $0x1c8] sm:$0xf] %vm651, %v2094
        %2111 = vst.msk [vmem:[#allocation2 + $0x1cc] sm:$0xf] %vm651, %v2095
        %2112 = vst.msk [vmem:[#allocation2 + $0x1d0] sm:$0xf] %vm651, %v2096
        %2113 = vst.msk [vmem:[#allocation2 + $0x1d4] sm:$0xf] %vm651, %v2097
        %2114 = vst.msk [vmem:[#allocation2 + $0x1d8] sm:$0xf] %vm651, %v2098
        %2115 = vst.msk [vmem:[#allocation2 + $0x1dc] sm:$0xf] %vm651, %v2099
        %2116 = vst.msk [vmem:[#allocation2 + $0x1e0] sm:$0xf] %vm651, %v2100
        %2117 = vst.msk [vmem:[#allocation2 + $0x1e4] sm:$0xf] %vm651, %v2101
        %2118 = vst.msk [vmem:[#allocation2 + $0x1e8] sm:$0xf] %vm651, %v2102
        %2119 = vst.msk [vmem:[#allocation2 + $0x1ec] sm:$0xf] %vm651, %v2103
        %2120 = vst.msk [vmem:[#allocation2 + $0x1f0] sm:$0xf] %vm651, %v2104
        %2121 = vst.msk [vmem:[#allocation2 + $0x1f4] sm:$0xf] %vm651, %v2105
        %2122 = vst.msk [vmem:[#allocation2 + $0x1f8] sm:$0xf] %vm651, %v2106
        %2123 = vst.msk [vmem:[#allocation2 + $0x1fc] sm:$0xf] %vm651, %v2107
        %v2124 = vld [vmem:[#allocation2] sm:$0xf]
        %v2125 = vld [vmem:[#allocation2 + $0x4] sm:$0xf]
        %v2126 = vld [vmem:[#allocation2 + $0x8] sm:$0xf]
        %v2127 = vld [vmem:[#allocation2 + $0xc] sm:$0xf]
        %v2128 = vld [vmem:[#allocation2 + $0x10] sm:$0xf]
        %v2129 = vld [vmem:[#allocation2 + $0x14] sm:$0xf]
        %v2130 = vld [vmem:[#allocation2 + $0x18] sm:$0xf]
        %v2131 = vld [vmem:[#allocation2 + $0x1c] sm:$0xf]
        %v2132 = vld [vmem:[#allocation2 + $0x20] sm:$0xf]
        %v2133 = vld [vmem:[#allocation2 + $0x24] sm:$0xf]
        %v2134 = vld [vmem:[#allocation2 + $0x28] sm:$0xf]
        %v2135 = vld [vmem:[#allocation2 + $0x2c] sm:$0xf]
        %v2136 = vld [vmem:[#allocation2 + $0x30] sm:$0xf]
        %v2137 = vld [vmem:[#allocation2 + $0x34] sm:$0xf]
        %v2138 = vld [vmem:[#allocation2 + $0x38] sm:$0xf]
        %v2139 = vld [vmem:[#allocation2 + $0x3c] sm:$0xf]
        %v2140 = vld [vmem:[#allocation2 + $0x40] sm:$0xf]
        %v2141 = vld [vmem:[#allocation2 + $0x44] sm:$0xf]
        %v2142 = vld [vmem:[#allocation2 + $0x48] sm:$0xf]
        %v2143 = vld [vmem:[#allocation2 + $0x4c] sm:$0xf]
        %v2144 = vld [vmem:[#allocation2 + $0x50] sm:$0xf]
        %v2145 = vld [vmem:[#allocation2 + $0x54] sm:$0xf]
        %v2146 = vld [vmem:[#allocation2 + $0x58] sm:$0xf]
        %v2147 = vld [vmem:[#allocation2 + $0x5c] sm:$0xf]
        %v2148 = vld [vmem:[#allocation2 + $0x60] sm:$0xf]
        %v2149 = vld [vmem:[#allocation2 + $0x64] sm:$0xf]
        %v2150 = vld [vmem:[#allocation2 + $0x68] sm:$0xf]
        %v2151 = vld [vmem:[#allocation2 + $0x6c] sm:$0xf]
        %v2152 = vld [vmem:[#allocation2 + $0x70] sm:$0xf]
        %v2153 = vld [vmem:[#allocation2 + $0x74] sm:$0xf]
        %v2154 = vld [vmem:[#allocation2 + $0x78] sm:$0xf]
        %v2155 = vld [vmem:[#allocation2 + $0x7c] sm:$0xf]
        %v2156 = vld [vmem:[#allocation2 + $0x80] sm:$0xf]
        %v2157 = vld [vmem:[#allocation2 + $0x84] sm:$0xf]
        %v2158 = vld [vmem:[#allocation2 + $0x88] sm:$0xf]
        %v2159 = vld [vmem:[#allocation2 + $0x8c] sm:$0xf]
        %v2160 = vld [vmem:[#allocation2 + $0x90] sm:$0xf]
        %v2161 = vld [vmem:[#allocation2 + $0x94] sm:$0xf]
        %v2162 = vld [vmem:[#allocation2 + $0x98] sm:$0xf]
        %v2163 = vld [vmem:[#allocation2 + $0x9c] sm:$0xf]
        %v2164 = vld [vmem:[#allocation2 + $0xa0] sm:$0xf]
        %v2165 = vld [vmem:[#allocation2 + $0xa4] sm:$0xf]
        %v2166 = vld [vmem:[#allocation2 + $0xa8] sm:$0xf]
        %v2167 = vld [vmem:[#allocation2 + $0xac] sm:$0xf]
        %v2168 = vld [vmem:[#allocation2 + $0xb0] sm:$0xf]
        %v2169 = vld [vmem:[#allocation2 + $0xb4] sm:$0xf]
        %v2170 = vld [vmem:[#allocation2 + $0xb8] sm:$0xf]
        %v2171 = vld [vmem:[#allocation2 + $0xbc] sm:$0xf]
        %v2172 = vld [vmem:[#allocation2 + $0xc0] sm:$0xf]
        %v2173 = vld [vmem:[#allocation2 + $0xc4] sm:$0xf]
        %v2174 = vld [vmem:[#allocation2 + $0xc8] sm:$0xf]
        %v2175 = vld [vmem:[#allocation2 + $0xcc] sm:$0xf]
        %v2176 = vld [vmem:[#allocation2 + $0xd0] sm:$0xf]
        %v2177 = vld [vmem:[#allocation2 + $0xd4] sm:$0xf]
        %v2178 = vld [vmem:[#allocation2 + $0xd8] sm:$0xf]
        %v2179 = vld [vmem:[#allocation2 + $0xdc] sm:$0xf]
        %v2180 = vld [vmem:[#allocation2 + $0xe0] sm:$0xf]
        %v2181 = vld [vmem:[#allocation2 + $0xe4] sm:$0xf]
        %v2182 = vld [vmem:[#allocation2 + $0xe8] sm:$0xf]
        %v2183 = vld [vmem:[#allocation2 + $0xec] sm:$0xf]
        %v2184 = vld [vmem:[#allocation2 + $0xf0] sm:$0xf]
        %v2185 = vld [vmem:[#allocation2 + $0xf4] sm:$0xf]
        %v2186 = vld [vmem:[#allocation2 + $0xf8] sm:$0xf]
        %v2187 = vld [vmem:[#allocation2 + $0xfc] sm:$0xf]
        %v2188 = vld [vmem:[#allocation2 + $0x100] sm:$0xf]
        %v2189 = vld [vmem:[#allocation2 + $0x104] sm:$0xf]
        %v2190 = vld [vmem:[#allocation2 + $0x108] sm:$0xf]
        %v2191 = vld [vmem:[#allocation2 + $0x10c] sm:$0xf]
        %v2192 = vld [vmem:[#allocation2 + $0x110] sm:$0xf]
        %v2193 = vld [vmem:[#allocation2 + $0x114] sm:$0xf]
        %v2194 = vld [vmem:[#allocation2 + $0x118] sm:$0xf]
        %v2195 = vld [vmem:[#allocation2 + $0x11c] sm:$0xf]
        %v2196 = vld [vmem:[#allocation2 + $0x120] sm:$0xf]
        %v2197 = vld [vmem:[#allocation2 + $0x124] sm:$0xf]
        %v2198 = vld [vmem:[#allocation2 + $0x128] sm:$0xf]
        %v2199 = vld [vmem:[#allocation2 + $0x12c] sm:$0xf]
        %v2200 = vld [vmem:[#allocation2 + $0x130] sm:$0xf]
        %v2201 = vld [vmem:[#allocation2 + $0x134] sm:$0xf]
        %v2202 = vld [vmem:[#allocation2 + $0x138] sm:$0xf]
        %v2203 = vld [vmem:[#allocation2 + $0x13c] sm:$0xf]
        %v2204 = vld [vmem:[#allocation2 + $0x140] sm:$0xf]
        %v2205 = vld [vmem:[#allocation2 + $0x144] sm:$0xf]
        %v2206 = vld [vmem:[#allocation2 + $0x148] sm:$0xf]
        %v2207 = vld [vmem:[#allocation2 + $0x14c] sm:$0xf]
        %v2208 = vld [vmem:[#allocation2 + $0x150] sm:$0xf]
        %v2209 = vld [vmem:[#allocation2 + $0x154] sm:$0xf]
        %v2210 = vld [vmem:[#allocation2 + $0x158] sm:$0xf]
        %v2211 = vld [vmem:[#allocation2 + $0x15c] sm:$0xf]
        %v2212 = vld [vmem:[#allocation2 + $0x160] sm:$0xf]
        %v2213 = vld [vmem:[#allocation2 + $0x164] sm:$0xf]
        %v2214 = vld [vmem:[#allocation2 + $0x168] sm:$0xf]
        %v2215 = vld [vmem:[#allocation2 + $0x16c] sm:$0xf]
        %v2216 = vld [vmem:[#allocation2 + $0x170] sm:$0xf]
        %v2217 = vld [vmem:[#allocation2 + $0x174] sm:$0xf]
        %v2218 = vld [vmem:[#allocation2 + $0x178] sm:$0xf]
        %v2219 = vld [vmem:[#allocation2 + $0x17c] sm:$0xf]
        %v2220 = vld [vmem:[#allocation2 + $0x180] sm:$0xf]
        %v2221 = vld [vmem:[#allocation2 + $0x184] sm:$0xf]
        %v2222 = vld [vmem:[#allocation2 + $0x188] sm:$0xf]
        %v2223 = vld [vmem:[#allocation2 + $0x18c] sm:$0xf]
        %v2224 = vld [vmem:[#allocation2 + $0x190] sm:$0xf]
        %v2225 = vld [vmem:[#allocation2 + $0x194] sm:$0xf]
        %v2226 = vld [vmem:[#allocation2 + $0x198] sm:$0xf]
        %v2227 = vld [vmem:[#allocation2 + $0x19c] sm:$0xf]
        %v2228 = vld [vmem:[#allocation2 + $0x1a0] sm:$0xf]
        %v2229 = vld [vmem:[#allocation2 + $0x1a4] sm:$0xf]
        %v2230 = vld [vmem:[#allocation2 + $0x1a8] sm:$0xf]
        %v2231 = vld [vmem:[#allocation2 + $0x1ac] sm:$0xf]
        %v2232 = vld [vmem:[#allocation2 + $0x1b0] sm:$0xf]
        %v2233 = vld [vmem:[#allocation2 + $0x1b4] sm:$0xf]
        %v2234 = vld [vmem:[#allocation2 + $0x1b8] sm:$0xf]
        %v2235 = vld [vmem:[#allocation2 + $0x1bc] sm:$0xf]
        %v2236 = vld [vmem:[#allocation2 + $0x1c0] sm:$0xf]
        %v2237 = vld [vmem:[#allocation2 + $0x1c4] sm:$0xf]
        %v2238 = vld [vmem:[#allocation2 + $0x1c8] sm:$0xf]
        %v2239 = vld [vmem:[#allocation2 + $0x1cc] sm:$0xf]
        %v2240 = vld [vmem:[#allocation2 + $0x1d0] sm:$0xf]
        %v2241 = vld [vmem:[#allocation2 + $0x1d4] sm:$0xf]
        %v2242 = vld [vmem:[#allocation2 + $0x1d8] sm:$0xf]
        %v2243 = vld [vmem:[#allocation2 + $0x1dc] sm:$0xf]
        %v2244 = vld [vmem:[#allocation2 + $0x1e0] sm:$0xf]
        %v2245 = vld [vmem:[#allocation2 + $0x1e4] sm:$0xf]
        %v2246 = vld [vmem:[#allocation2 + $0x1e8] sm:$0xf]
        %v2247 = vld [vmem:[#allocation2 + $0x1ec] sm:$0xf]
        %v2248 = vld [vmem:[#allocation2 + $0x1f0] sm:$0xf]
        %v2249 = vld [vmem:[#allocation2 + $0x1f4] sm:$0xf]
        %v2250 = vld [vmem:[#allocation2 + $0x1f8] sm:$0xf]
        %v2251 = vld [vmem:[#allocation2 + $0x1fc] sm:$0xf]
        %v2252 = vld [vmem:[%s2] sm:$0xf]
        %v2253 = vld [vmem:[%s2 + $0x4] sm:$0xf]
        %v2254 = vld [vmem:[%s2 + $0x8] sm:$0xf]
        %v2255 = vld [vmem:[%s2 + $0xc] sm:$0xf]
        %v2256 = vld [vmem:[%s3] sm:$0x1]
        %v2258 = vperm.slane %v2256, 0
        %v2388 = vunpack.c.l.b16 %v2124
        %v2389 = vunpack.c.l.b16 %v2125
        %v2390 = vunpack.c.l.b16 %v2126
        %v2391 = vunpack.c.l.b16 %v2127
        %v2392 = vunpack.c.l.b16 %v2128
        %v2393 = vunpack.c.l.b16 %v2129
        %v2394 = vunpack.c.l.b16 %v2130
        %v2395 = vunpack.c.l.b16 %v2131
        %v2396 = vunpack.c.l.b16 %v2132
        %v2397 = vunpack.c.l.b16 %v2133
        %v2398 = vunpack.c.l.b16 %v2134
        %v2399 = vunpack.c.l.b16 %v2135
        %v2400 = vunpack.c.l.b16 %v2136
        %v2401 = vunpack.c.l.b16 %v2137
        %v2402 = vunpack.c.l.b16 %v2138
        %v2403 = vunpack.c.l.b16 %v2139
        %v2404 = vunpack.c.l.b16 %v2140
        %v2405 = vunpack.c.l.b16 %v2141
        %v2406 = vunpack.c.l.b16 %v2142
        %v2407 = vunpack.c.l.b16 %v2143
        %v2408 = vunpack.c.l.b16 %v2144
        %v2409 = vunpack.c.l.b16 %v2145
        %v2410 = vunpack.c.l.b16 %v2146
        %v2411 = vunpack.c.l.b16 %v2147
        %v2412 = vunpack.c.l.b16 %v2148
        %v2413 = vunpack.c.l.b16 %v2149
        %v2414 = vunpack.c.l.b16 %v2150
        %v2415 = vunpack.c.l.b16 %v2151
        %v2416 = vunpack.c.l.b16 %v2152
        %v2417 = vunpack.c.l.b16 %v2153
        %v2418 = vunpack.c.l.b16 %v2154
        %v2419 = vunpack.c.l.b16 %v2155
        %v2420 = vunpack.c.l.b16 %v2156
        %v2421 = vunpack.c.l.b16 %v2157
        %v2422 = vunpack.c.l.b16 %v2158
        %v2423 = vunpack.c.l.b16 %v2159
        %v2424 = vunpack.c.l.b16 %v2160
        %v2425 = vunpack.c.l.b16 %v2161
        %v2426 = vunpack.c.l.b16 %v2162
        %v2427 = vunpack.c.l.b16 %v2163
        %v2428 = vunpack.c.l.b16 %v2164
        %v2429 = vunpack.c.l.b16 %v2165
        %v2430 = vunpack.c.l.b16 %v2166
        %v2431 = vunpack.c.l.b16 %v2167
        %v2432 = vunpack.c.l.b16 %v2168
        %v2433 = vunpack.c.l.b16 %v2169
        %v2434 = vunpack.c.l.b16 %v2170
        %v2435 = vunpack.c.l.b16 %v2171
        %v2436 = vunpack.c.l.b16 %v2172
        %v2437 = vunpack.c.l.b16 %v2173
        %v2438 = vunpack.c.l.b16 %v2174
        %v2439 = vunpack.c.l.b16 %v2175
        %v2440 = vunpack.c.l.b16 %v2176
        %v2441 = vunpack.c.l.b16 %v2177
        %v2442 = vunpack.c.l.b16 %v2178
        %v2443 = vunpack.c.l.b16 %v2179
        %v2444 = vunpack.c.l.b16 %v2180
        %v2445 = vunpack.c.l.b16 %v2181
        %v2446 = vunpack.c.l.b16 %v2182
        %v2447 = vunpack.c.l.b16 %v2183
        %v2448 = vunpack.c.l.b16 %v2184
        %v2449 = vunpack.c.l.b16 %v2185
        %v2450 = vunpack.c.l.b16 %v2186
        %v2451 = vunpack.c.l.b16 %v2187
        %v2452 = vunpack.c.l.b16 %v2188
        %v2453 = vunpack.c.l.b16 %v2189
        %v2454 = vunpack.c.l.b16 %v2190
        %v2455 = vunpack.c.l.b16 %v2191
        %v2456 = vunpack.c.l.b16 %v2192
        %v2457 = vunpack.c.l.b16 %v2193
        %v2458 = vunpack.c.l.b16 %v2194
        %v2459 = vunpack.c.l.b16 %v2195
        %v2460 = vunpack.c.l.b16 %v2196
        %v2461 = vunpack.c.l.b16 %v2197
        %v2462 = vunpack.c.l.b16 %v2198
        %v2463 = vunpack.c.l.b16 %v2199
        %v2464 = vunpack.c.l.b16 %v2200
        %v2465 = vunpack.c.l.b16 %v2201
        %v2466 = vunpack.c.l.b16 %v2202
        %v2467 = vunpack.c.l.b16 %v2203
        %v2468 = vunpack.c.l.b16 %v2204
        %v2469 = vunpack.c.l.b16 %v2205
        %v2470 = vunpack.c.l.b16 %v2206
        %v2471 = vunpack.c.l.b16 %v2207
        %v2472 = vunpack.c.l.b16 %v2208
        %v2473 = vunpack.c.l.b16 %v2209
        %v2474 = vunpack.c.l.b16 %v2210
        %v2475 = vunpack.c.l.b16 %v2211
        %v2476 = vunpack.c.l.b16 %v2212
        %v2477 = vunpack.c.l.b16 %v2213
        %v2478 = vunpack.c.l.b16 %v2214
        %v2479 = vunpack.c.l.b16 %v2215
        %v2480 = vunpack.c.l.b16 %v2216
        %v2481 = vunpack.c.l.b16 %v2217
        %v2482 = vunpack.c.l.b16 %v2218
        %v2483 = vunpack.c.l.b16 %v2219
        %v2484 = vunpack.c.l.b16 %v2220
        %v2485 = vunpack.c.l.b16 %v2221
        %v2486 = vunpack.c.l.b16 %v2222
        %v2487 = vunpack.c.l.b16 %v2223
        %v2488 = vunpack.c.l.b16 %v2224
        %v2489 = vunpack.c.l.b16 %v2225
        %v2490 = vunpack.c.l.b16 %v2226
        %v2491 = vunpack.c.l.b16 %v2227
        %v2492 = vunpack.c.l.b16 %v2228
        %v2493 = vunpack.c.l.b16 %v2229
        %v2494 = vunpack.c.l.b16 %v2230
        %v2495 = vunpack.c.l.b16 %v2231
        %v2496 = vunpack.c.l.b16 %v2232
        %v2497 = vunpack.c.l.b16 %v2233
        %v2498 = vunpack.c.l.b16 %v2234
        %v2499 = vunpack.c.l.b16 %v2235
        %v2500 = vunpack.c.l.b16 %v2236
        %v2501 = vunpack.c.l.b16 %v2237
        %v2502 = vunpack.c.l.b16 %v2238
        %v2503 = vunpack.c.l.b16 %v2239
        %v2504 = vunpack.c.l.b16 %v2240
        %v2505 = vunpack.c.l.b16 %v2241
        %v2506 = vunpack.c.l.b16 %v2242
        %v2507 = vunpack.c.l.b16 %v2243
        %v2508 = vunpack.c.l.b16 %v2244
        %v2509 = vunpack.c.l.b16 %v2245
        %v2510 = vunpack.c.l.b16 %v2246
        %v2511 = vunpack.c.l.b16 %v2247
        %v2512 = vunpack.c.l.b16 %v2248
        %v2513 = vunpack.c.l.b16 %v2249
        %v2514 = vunpack.c.l.b16 %v2250
        %v2515 = vunpack.c.l.b16 %v2251
        %v2516 = vpack.c.b16 %v2389, %v2388
        %v2517 = vpack.c.b16 %v2391, %v2390
        %v2518 = vpack.c.b16 %v2393, %v2392
        %v2519 = vpack.c.b16 %v2395, %v2394
        %v2520 = vpack.c.b16 %v2397, %v2396
        %v2521 = vpack.c.b16 %v2399, %v2398
        %v2522 = vpack.c.b16 %v2401, %v2400
        %v2523 = vpack.c.b16 %v2403, %v2402
        %v2524 = vpack.c.b16 %v2405, %v2404
        %v2525 = vpack.c.b16 %v2407, %v2406
        %v2526 = vpack.c.b16 %v2409, %v2408
        %v2527 = vpack.c.b16 %v2411, %v2410
        %v2528 = vpack.c.b16 %v2413, %v2412
        %v2529 = vpack.c.b16 %v2415, %v2414
        %v2530 = vpack.c.b16 %v2417, %v2416
        %v2531 = vpack.c.b16 %v2419, %v2418
        %v2532 = vpack.c.b16 %v2421, %v2420
        %v2533 = vpack.c.b16 %v2423, %v2422
        %v2534 = vpack.c.b16 %v2425, %v2424
        %v2535 = vpack.c.b16 %v2427, %v2426
        %v2536 = vpack.c.b16 %v2429, %v2428
        %v2537 = vpack.c.b16 %v2431, %v2430
        %v2538 = vpack.c.b16 %v2433, %v2432
        %v2539 = vpack.c.b16 %v2435, %v2434
        %v2540 = vpack.c.b16 %v2437, %v2436
        %v2541 = vpack.c.b16 %v2439, %v2438
        %v2542 = vpack.c.b16 %v2441, %v2440
        %v2543 = vpack.c.b16 %v2443, %v2442
        %v2544 = vpack.c.b16 %v2445, %v2444
        %v2545 = vpack.c.b16 %v2447, %v2446
        %v2546 = vpack.c.b16 %v2449, %v2448
        %v2547 = vpack.c.b16 %v2451, %v2450
        %v2548 = vpack.c.b16 %v2453, %v2452
        %v2549 = vpack.c.b16 %v2455, %v2454
        %v2550 = vpack.c.b16 %v2457, %v2456
        %v2551 = vpack.c.b16 %v2459, %v2458
        %v2552 = vpack.c.b16 %v2461, %v2460
        %v2553 = vpack.c.b16 %v2463, %v2462
        %v2554 = vpack.c.b16 %v2465, %v2464
        %v2555 = vpack.c.b16 %v2467, %v2466
        %v2556 = vpack.c.b16 %v2469, %v2468
        %v2557 = vpack.c.b16 %v2471, %v2470
        %v2558 = vpack.c.b16 %v2473, %v2472
        %v2559 = vpack.c.b16 %v2475, %v2474
        %v2560 = vpack.c.b16 %v2477, %v2476
        %v2561 = vpack.c.b16 %v2479, %v2478
        %v2562 = vpack.c.b16 %v2481, %v2480
        %v2563 = vpack.c.b16 %v2483, %v2482
        %v2564 = vpack.c.b16 %v2485, %v2484
        %v2565 = vpack.c.b16 %v2487, %v2486
        %v2566 = vpack.c.b16 %v2489, %v2488
        %v2567 = vpack.c.b16 %v2491, %v2490
        %v2568 = vpack.c.b16 %v2493, %v2492
        %v2569 = vpack.c.b16 %v2495, %v2494
        %v2570 = vpack.c.b16 %v2497, %v2496
        %v2571 = vpack.c.b16 %v2499, %v2498
        %v2572 = vpack.c.b16 %v2501, %v2500
        %v2573 = vpack.c.b16 %v2503, %v2502
        %v2574 = vpack.c.b16 %v2505, %v2504
        %v2575 = vpack.c.b16 %v2507, %v2506
        %v2576 = vpack.c.b16 %v2509, %v2508
        %v2577 = vpack.c.b16 %v2511, %v2510
        %v2578 = vpack.c.b16 %v2513, %v2512
        %v2579 = vpack.c.b16 %v2515, %v2514
        %v2584 = vunpack.c.l.b16 %v2252
        %v2585 = vunpack.c.l.b16 %v2253
        %v2586 = vunpack.c.l.b16 %v2254
        %v2587 = vunpack.c.l.b16 %v2255
        %v2588 = vpack.c.b16 %v2585, %v2584
        %v2589 = vpack.c.b16 %v2587, %v2586
        %vm2592 = vcmask 261120
        %v2594 = vsel %vm2592, %v2516, 0
        %v2597 = vsel %vm2592, %v2517, 0
        %v2600 = vsel %vm2592, %v2518, 0
        %v2603 = vsel %vm2592, %v2519, 0
        %v2606 = vsel %vm2592, %v2520, 0
        %v2609 = vsel %vm2592, %v2521, 0
        %v2612 = vsel %vm2592, %v2522, 0
        %v2615 = vsel %vm2592, %v2523, 0
        %v2618 = vsel %vm2592, %v2524, 0
        %v2621 = vsel %vm2592, %v2525, 0
        %v2624 = vsel %vm2592, %v2526, 0
        %v2627 = vsel %vm2592, %v2527, 0
        %v2630 = vsel %vm2592, %v2528, 0
        %v2633 = vsel %vm2592, %v2529, 0
        %v2636 = vsel %vm2592, %v2530, 0
        %v2639 = vsel %vm2592, %v2531, 0
        %v2642 = vsel %vm2592, %v2532, 0
        %v2645 = vsel %vm2592, %v2533, 0
        %v2648 = vsel %vm2592, %v2534, 0
        %v2651 = vsel %vm2592, %v2535, 0
        %v2654 = vsel %vm2592, %v2536, 0
        %v2657 = vsel %vm2592, %v2537, 0
        %v2660 = vsel %vm2592, %v2538, 0
        %v2663 = vsel %vm2592, %v2539, 0
        %v2666 = vsel %vm2592, %v2540, 0
        %v2669 = vsel %vm2592, %v2541, 0
        %v2672 = vsel %vm2592, %v2542, 0
        %v2675 = vsel %vm2592, %v2543, 0
        %v2678 = vsel %vm2592, %v2544, 0
        %v2681 = vsel %vm2592, %v2545, 0
        %v2684 = vsel %vm2592, %v2546, 0
        %v2687 = vsel %vm2592, %v2547, 0
        %v2690 = vsel %vm2592, %v2548, 0
        %v2693 = vsel %vm2592, %v2549, 0
        %v2696 = vsel %vm2592, %v2550, 0
        %v2699 = vsel %vm2592, %v2551, 0
        %v2702 = vsel %vm2592, %v2552, 0
        %v2705 = vsel %vm2592, %v2553, 0
        %v2708 = vsel %vm2592, %v2554, 0
        %v2711 = vsel %vm2592, %v2555, 0
        %v2714 = vsel %vm2592, %v2556, 0
        %v2717 = vsel %vm2592, %v2557, 0
        %v2720 = vsel %vm2592, %v2558, 0
        %v2723 = vsel %vm2592, %v2559, 0
        %v2726 = vsel %vm2592, %v2560, 0
        %v2729 = vsel %vm2592, %v2561, 0
        %v2732 = vsel %vm2592, %v2562, 0
        %v2735 = vsel %vm2592, %v2563, 0
        %v2738 = vsel %vm2592, %v2564, 0
        %v2741 = vsel %vm2592, %v2565, 0
        %v2744 = vsel %vm2592, %v2566, 0
        %v2747 = vsel %vm2592, %v2567, 0
        %v2750 = vsel %vm2592, %v2568, 0
        %v2753 = vsel %vm2592, %v2569, 0
        %v2756 = vsel %vm2592, %v2570, 0
        %v2759 = vsel %vm2592, %v2571, 0
        %v2762 = vsel %vm2592, %v2572, 0
        %v2765 = vsel %vm2592, %v2573, 0
        %v2768 = vsel %vm2592, %v2574, 0
        %v2771 = vsel %vm2592, %v2575, 0
        %v2774 = vsel %vm2592, %v2576, 0
        %v2777 = vsel %vm2592, %v2577, 0
        %v2780 = vsel %vm2592, %v2578, 0
        %v2783 = vsel %vm2592, %v2579, 0
        %2785 = vmatpush.bf16.msra.mxu0 0
        %2786 = vmatpush.bf16.msra.mxu0 0
        %2787 = vmatpush.bf16.msra.mxu0 0
        %2788 = vmatpush.bf16.msra.mxu0 0
        %2789 = vmatpush.bf16.msra.mxu0 0
        %2790 = vmatpush.bf16.msra.mxu0 0
        %2791 = vmatpush.bf16.msra.mxu0 %v2589
        %2792 = vmatpush.bf16.msra.mxu0 %v2588
        %2793 = vmatmul.bf16.gmra.mxu0 %v2594
        %v2794 = vpop.f32.mrf.mxu0
        %v2795 = vadd.f32 %v2258, %v2794
        %v2796 = vpop.f32.mrf.mxu0
        %v2797 = vadd.f32 %v2258, %v2796
        %2798 = vmatmul.bf16.gmra.mxu0 %v2597
        %v2799 = vpop.f32.mrf.mxu0
        %v2800 = vadd.f32 %v2258, %v2799
        %v2801 = vpop.f32.mrf.mxu0
        %v2802 = vadd.f32 %v2258, %v2801
        %2803 = vmatmul.bf16.gmra.mxu0 %v2600
        %v2804 = vpop.f32.mrf.mxu0
        %v2805 = vadd.f32 %v2258, %v2804
        %v2806 = vpop.f32.mrf.mxu0
        %v2807 = vadd.f32 %v2258, %v2806
        %2808 = vmatmul.bf16.gmra.mxu0 %v2603
        %v2809 = vpop.f32.mrf.mxu0
        %v2810 = vadd.f32 %v2258, %v2809
        %v2811 = vpop.f32.mrf.mxu0
        %v2812 = vadd.f32 %v2258, %v2811
        %2813 = vmatmul.bf16.gmra.mxu0 %v2606
        %v2814 = vpop.f32.mrf.mxu0
        %v2815 = vadd.f32 %v2258, %v2814
        %v2816 = vpop.f32.mrf.mxu0
        %v2817 = vadd.f32 %v2258, %v2816
        %2818 = vmatmul.bf16.gmra.mxu0 %v2609
        %v2819 = vpop.f32.mrf.mxu0
        %v2820 = vadd.f32 %v2258, %v2819
        %v2821 = vpop.f32.mrf.mxu0
        %v2822 = vadd.f32 %v2258, %v2821
        %2823 = vmatmul.bf16.gmra.mxu0 %v2612
        %v2824 = vpop.f32.mrf.mxu0
        %v2825 = vadd.f32 %v2258, %v2824
        %v2826 = vpop.f32.mrf.mxu0
        %v2827 = vadd.f32 %v2258, %v2826
        %2828 = vmatmul.bf16.gmra.mxu0 %v2615
        %v2829 = vpop.f32.mrf.mxu0
        %v2830 = vadd.f32 %v2258, %v2829
        %v2831 = vpop.f32.mrf.mxu0
        %v2832 = vadd.f32 %v2258, %v2831
        %2833 = vmatmul.bf16.gmra.mxu0 %v2618
        %v2834 = vpop.f32.mrf.mxu0
        %v2835 = vadd.f32 %v2258, %v2834
        %v2836 = vpop.f32.mrf.mxu0
        %v2837 = vadd.f32 %v2258, %v2836
        %2838 = vmatmul.bf16.gmra.mxu0 %v2621
        %v2839 = vpop.f32.mrf.mxu0
        %v2840 = vadd.f32 %v2258, %v2839
        %v2841 = vpop.f32.mrf.mxu0
        %v2842 = vadd.f32 %v2258, %v2841
        %2843 = vmatmul.bf16.gmra.mxu0 %v2624
        %v2844 = vpop.f32.mrf.mxu0
        %v2845 = vadd.f32 %v2258, %v2844
        %v2846 = vpop.f32.mrf.mxu0
        %v2847 = vadd.f32 %v2258, %v2846
        %2848 = vmatmul.bf16.gmra.mxu0 %v2627
        %v2849 = vpop.f32.mrf.mxu0
        %v2850 = vadd.f32 %v2258, %v2849
        %v2851 = vpop.f32.mrf.mxu0
        %v2852 = vadd.f32 %v2258, %v2851
        %2853 = vmatmul.bf16.gmra.mxu0 %v2630
        %v2854 = vpop.f32.mrf.mxu0
        %v2855 = vadd.f32 %v2258, %v2854
        %v2856 = vpop.f32.mrf.mxu0
        %v2857 = vadd.f32 %v2258, %v2856
        %2858 = vmatmul.bf16.gmra.mxu0 %v2633
        %v2859 = vpop.f32.mrf.mxu0
        %v2860 = vadd.f32 %v2258, %v2859
        %v2861 = vpop.f32.mrf.mxu0
        %v2862 = vadd.f32 %v2258, %v2861
        %2863 = vmatmul.bf16.gmra.mxu0 %v2636
        %v2864 = vpop.f32.mrf.mxu0
        %v2865 = vadd.f32 %v2258, %v2864
        %v2866 = vpop.f32.mrf.mxu0
        %v2867 = vadd.f32 %v2258, %v2866
        %2868 = vmatmul.bf16.gmra.mxu0 %v2639
        %v2869 = vpop.f32.mrf.mxu0
        %v2870 = vadd.f32 %v2258, %v2869
        %v2871 = vpop.f32.mrf.mxu0
        %v2872 = vadd.f32 %v2258, %v2871
        %2873 = vmatmul.bf16.gmra.mxu0 %v2642
        %v2874 = vpop.f32.mrf.mxu0
        %v2875 = vadd.f32 %v2258, %v2874
        %v2876 = vpop.f32.mrf.mxu0
        %v2877 = vadd.f32 %v2258, %v2876
        %2878 = vmatmul.bf16.gmra.mxu0 %v2645
        %v2879 = vpop.f32.mrf.mxu0
        %v2880 = vadd.f32 %v2258, %v2879
        %v2881 = vpop.f32.mrf.mxu0
        %v2882 = vadd.f32 %v2258, %v2881
        %2883 = vmatmul.bf16.gmra.mxu0 %v2648
        %v2884 = vpop.f32.mrf.mxu0
        %v2885 = vadd.f32 %v2258, %v2884
        %v2886 = vpop.f32.mrf.mxu0
        %v2887 = vadd.f32 %v2258, %v2886
        %2888 = vmatmul.bf16.gmra.mxu0 %v2651
        %v2889 = vpop.f32.mrf.mxu0
        %v2890 = vadd.f32 %v2258, %v2889
        %v2891 = vpop.f32.mrf.mxu0
        %v2892 = vadd.f32 %v2258, %v2891
        %2893 = vmatmul.bf16.gmra.mxu0 %v2654
        %v2894 = vpop.f32.mrf.mxu0
        %v2895 = vadd.f32 %v2258, %v2894
        %v2896 = vpop.f32.mrf.mxu0
        %v2897 = vadd.f32 %v2258, %v2896
        %2898 = vmatmul.bf16.gmra.mxu0 %v2657
        %v2899 = vpop.f32.mrf.mxu0
        %v2900 = vadd.f32 %v2258, %v2899
        %v2901 = vpop.f32.mrf.mxu0
        %v2902 = vadd.f32 %v2258, %v2901
        %2903 = vmatmul.bf16.gmra.mxu0 %v2660
        %v2904 = vpop.f32.mrf.mxu0
        %v2905 = vadd.f32 %v2258, %v2904
        %v2906 = vpop.f32.mrf.mxu0
        %v2907 = vadd.f32 %v2258, %v2906
        %2908 = vmatmul.bf16.gmra.mxu0 %v2663
        %v2909 = vpop.f32.mrf.mxu0
        %v2910 = vadd.f32 %v2258, %v2909
        %v2911 = vpop.f32.mrf.mxu0
        %v2912 = vadd.f32 %v2258, %v2911
        %2913 = vmatmul.bf16.gmra.mxu0 %v2666
        %v2914 = vpop.f32.mrf.mxu0
        %v2915 = vadd.f32 %v2258, %v2914
        %v2916 = vpop.f32.mrf.mxu0
        %v2917 = vadd.f32 %v2258, %v2916
        %2918 = vmatmul.bf16.gmra.mxu0 %v2669
        %v2919 = vpop.f32.mrf.mxu0
        %v2920 = vadd.f32 %v2258, %v2919
        %v2921 = vpop.f32.mrf.mxu0
        %v2922 = vadd.f32 %v2258, %v2921
        %2923 = vmatmul.bf16.gmra.mxu0 %v2672
        %v2924 = vpop.f32.mrf.mxu0
        %v2925 = vadd.f32 %v2258, %v2924
        %v2926 = vpop.f32.mrf.mxu0
        %v2927 = vadd.f32 %v2258, %v2926
        %2928 = vmatmul.bf16.gmra.mxu0 %v2675
        %v2929 = vpop.f32.mrf.mxu0
        %v2930 = vadd.f32 %v2258, %v2929
        %v2931 = vpop.f32.mrf.mxu0
        %v2932 = vadd.f32 %v2258, %v2931
        %2933 = vmatmul.bf16.gmra.mxu0 %v2678
        %v2934 = vpop.f32.mrf.mxu0
        %v2935 = vadd.f32 %v2258, %v2934
        %v2936 = vpop.f32.mrf.mxu0
        %v2937 = vadd.f32 %v2258, %v2936
        %2938 = vmatmul.bf16.gmra.mxu0 %v2681
        %v2939 = vpop.f32.mrf.mxu0
        %v2940 = vadd.f32 %v2258, %v2939
        %v2941 = vpop.f32.mrf.mxu0
        %v2942 = vadd.f32 %v2258, %v2941
        %2943 = vmatmul.bf16.gmra.mxu0 %v2684
        %v2944 = vpop.f32.mrf.mxu0
        %v2945 = vadd.f32 %v2258, %v2944
        %v2946 = vpop.f32.mrf.mxu0
        %v2947 = vadd.f32 %v2258, %v2946
        %2948 = vmatmul.bf16.gmra.mxu0 %v2687
        %v2949 = vpop.f32.mrf.mxu0
        %v2950 = vadd.f32 %v2258, %v2949
        %v2951 = vpop.f32.mrf.mxu0
        %v2952 = vadd.f32 %v2258, %v2951
        %2953 = vmatmul.bf16.gmra.mxu0 %v2690
        %v2954 = vpop.f32.mrf.mxu0
        %v2955 = vadd.f32 %v2258, %v2954
        %v2956 = vpop.f32.mrf.mxu0
        %v2957 = vadd.f32 %v2258, %v2956
        %2958 = vmatmul.bf16.gmra.mxu0 %v2693
        %v2959 = vpop.f32.mrf.mxu0
        %v2960 = vadd.f32 %v2258, %v2959
        %v2961 = vpop.f32.mrf.mxu0
        %v2962 = vadd.f32 %v2258, %v2961
        %2963 = vmatmul.bf16.gmra.mxu0 %v2696
        %v2964 = vpop.f32.mrf.mxu0
        %v2965 = vadd.f32 %v2258, %v2964
        %v2966 = vpop.f32.mrf.mxu0
        %v2967 = vadd.f32 %v2258, %v2966
        %2968 = vmatmul.bf16.gmra.mxu0 %v2699
        %v2969 = vpop.f32.mrf.mxu0
        %v2970 = vadd.f32 %v2258, %v2969
        %v2971 = vpop.f32.mrf.mxu0
        %v2972 = vadd.f32 %v2258, %v2971
        %2973 = vmatmul.bf16.gmra.mxu0 %v2702
        %v2974 = vpop.f32.mrf.mxu0
        %v2975 = vadd.f32 %v2258, %v2974
        %v2976 = vpop.f32.mrf.mxu0
        %v2977 = vadd.f32 %v2258, %v2976
        %2978 = vmatmul.bf16.gmra.mxu0 %v2705
        %v2979 = vpop.f32.mrf.mxu0
        %v2980 = vadd.f32 %v2258, %v2979
        %v2981 = vpop.f32.mrf.mxu0
        %v2982 = vadd.f32 %v2258, %v2981
        %2983 = vmatmul.bf16.gmra.mxu0 %v2708
        %v2984 = vpop.f32.mrf.mxu0
        %v2985 = vadd.f32 %v2258, %v2984
        %v2986 = vpop.f32.mrf.mxu0
        %v2987 = vadd.f32 %v2258, %v2986
        %2988 = vmatmul.bf16.gmra.mxu0 %v2711
        %v2989 = vpop.f32.mrf.mxu0
        %v2990 = vadd.f32 %v2258, %v2989
        %v2991 = vpop.f32.mrf.mxu0
        %v2992 = vadd.f32 %v2258, %v2991
        %2993 = vmatmul.bf16.gmra.mxu0 %v2714
        %v2994 = vpop.f32.mrf.mxu0
        %v2995 = vadd.f32 %v2258, %v2994
        %v2996 = vpop.f32.mrf.mxu0
        %v2997 = vadd.f32 %v2258, %v2996
        %2998 = vmatmul.bf16.gmra.mxu0 %v2717
        %v2999 = vpop.f32.mrf.mxu0
        %v3000 = vadd.f32 %v2258, %v2999
        %v3001 = vpop.f32.mrf.mxu0
        %v3002 = vadd.f32 %v2258, %v3001
        %3003 = vmatmul.bf16.gmra.mxu0 %v2720
        %v3004 = vpop.f32.mrf.mxu0
        %v3005 = vadd.f32 %v2258, %v3004
        %v3006 = vpop.f32.mrf.mxu0
        %v3007 = vadd.f32 %v2258, %v3006
        %3008 = vmatmul.bf16.gmra.mxu0 %v2723
        %v3009 = vpop.f32.mrf.mxu0
        %v3010 = vadd.f32 %v2258, %v3009
        %v3011 = vpop.f32.mrf.mxu0
        %v3012 = vadd.f32 %v2258, %v3011
        %3013 = vmatmul.bf16.gmra.mxu0 %v2726
        %v3014 = vpop.f32.mrf.mxu0
        %v3015 = vadd.f32 %v2258, %v3014
        %v3016 = vpop.f32.mrf.mxu0
        %v3017 = vadd.f32 %v2258, %v3016
        %3018 = vmatmul.bf16.gmra.mxu0 %v2729
        %v3019 = vpop.f32.mrf.mxu0
        %v3020 = vadd.f32 %v2258, %v3019
        %v3021 = vpop.f32.mrf.mxu0
        %v3022 = vadd.f32 %v2258, %v3021
        %3023 = vmatmul.bf16.gmra.mxu0 %v2732
        %v3024 = vpop.f32.mrf.mxu0
        %v3025 = vadd.f32 %v2258, %v3024
        %v3026 = vpop.f32.mrf.mxu0
        %v3027 = vadd.f32 %v2258, %v3026
        %3028 = vmatmul.bf16.gmra.mxu0 %v2735
        %v3029 = vpop.f32.mrf.mxu0
        %v3030 = vadd.f32 %v2258, %v3029
        %v3031 = vpop.f32.mrf.mxu0
        %v3032 = vadd.f32 %v2258, %v3031
        %3033 = vmatmul.bf16.gmra.mxu0 %v2738
        %v3034 = vpop.f32.mrf.mxu0
        %v3035 = vadd.f32 %v2258, %v3034
        %v3036 = vpop.f32.mrf.mxu0
        %v3037 = vadd.f32 %v2258, %v3036
        %3038 = vmatmul.bf16.gmra.mxu0 %v2741
        %v3039 = vpop.f32.mrf.mxu0
        %v3040 = vadd.f32 %v2258, %v3039
        %v3041 = vpop.f32.mrf.mxu0
        %v3042 = vadd.f32 %v2258, %v3041
        %3043 = vmatmul.bf16.gmra.mxu0 %v2744
        %v3044 = vpop.f32.mrf.mxu0
        %v3045 = vadd.f32 %v2258, %v3044
        %v3046 = vpop.f32.mrf.mxu0
        %v3047 = vadd.f32 %v2258, %v3046
        %3048 = vmatmul.bf16.gmra.mxu0 %v2747
        %v3049 = vpop.f32.mrf.mxu0
        %v3050 = vadd.f32 %v2258, %v3049
        %v3051 = vpop.f32.mrf.mxu0
        %v3052 = vadd.f32 %v2258, %v3051
        %3053 = vmatmul.bf16.gmra.mxu0 %v2750
        %v3054 = vpop.f32.mrf.mxu0
        %v3055 = vadd.f32 %v2258, %v3054
        %v3056 = vpop.f32.mrf.mxu0
        %v3057 = vadd.f32 %v2258, %v3056
        %3058 = vmatmul.bf16.gmra.mxu0 %v2753
        %v3059 = vpop.f32.mrf.mxu0
        %v3060 = vadd.f32 %v2258, %v3059
        %v3061 = vpop.f32.mrf.mxu0
        %v3062 = vadd.f32 %v2258, %v3061
        %3063 = vmatmul.bf16.gmra.mxu0 %v2756
        %v3064 = vpop.f32.mrf.mxu0
        %v3065 = vadd.f32 %v2258, %v3064
        %v3066 = vpop.f32.mrf.mxu0
        %v3067 = vadd.f32 %v2258, %v3066
        %3068 = vmatmul.bf16.gmra.mxu0 %v2759
        %v3069 = vpop.f32.mrf.mxu0
        %v3070 = vadd.f32 %v2258, %v3069
        %v3071 = vpop.f32.mrf.mxu0
        %v3072 = vadd.f32 %v2258, %v3071
        %3073 = vmatmul.bf16.gmra.mxu0 %v2762
        %v3074 = vpop.f32.mrf.mxu0
        %v3075 = vadd.f32 %v2258, %v3074
        %v3076 = vpop.f32.mrf.mxu0
        %v3077 = vadd.f32 %v2258, %v3076
        %3078 = vmatmul.bf16.gmra.mxu0 %v2765
        %v3079 = vpop.f32.mrf.mxu0
        %v3080 = vadd.f32 %v2258, %v3079
        %v3081 = vpop.f32.mrf.mxu0
        %v3082 = vadd.f32 %v2258, %v3081
        %3083 = vmatmul.bf16.gmra.mxu0 %v2768
        %v3084 = vpop.f32.mrf.mxu0
        %v3085 = vadd.f32 %v2258, %v3084
        %v3086 = vpop.f32.mrf.mxu0
        %v3087 = vadd.f32 %v2258, %v3086
        %3088 = vmatmul.bf16.gmra.mxu0 %v2771
        %v3089 = vpop.f32.mrf.mxu0
        %v3090 = vadd.f32 %v2258, %v3089
        %v3091 = vpop.f32.mrf.mxu0
        %v3092 = vadd.f32 %v2258, %v3091
        %3093 = vmatmul.bf16.gmra.mxu0 %v2774
        %v3094 = vpop.f32.mrf.mxu0
        %v3095 = vadd.f32 %v2258, %v3094
        %v3096 = vpop.f32.mrf.mxu0
        %v3097 = vadd.f32 %v2258, %v3096
        %3098 = vmatmul.bf16.gmra.mxu0 %v2777
        %v3099 = vpop.f32.mrf.mxu0
        %v3100 = vadd.f32 %v2258, %v3099
        %v3101 = vpop.f32.mrf.mxu0
        %v3102 = vadd.f32 %v2258, %v3101
        %3103 = vmatmul.bf16.gmra.mxu0 %v2780
        %v3104 = vpop.f32.mrf.mxu0
        %v3105 = vadd.f32 %v2258, %v3104
        %v3106 = vpop.f32.mrf.mxu0
        %v3107 = vadd.f32 %v2258, %v3106
        %3108 = vmatmul.bf16.gmra.mxu0 %v2783
        %v3109 = vpop.f32.mrf.mxu0
        %v3110 = vadd.f32 %v2258, %v3109
        %v3111 = vpop.f32.mrf.mxu0
        %v3112 = vadd.f32 %v2258, %v3111
        %3113 = vdwg.mxu0
        %v3114 = vtanh.pop %v2795
        %v3115 = vtanh.pop %v2797
        %v3116 = vtanh.pop %v2800
        %v3117 = vtanh.pop %v2802
        %v3118 = vtanh.pop %v2805
        %v3119 = vtanh.pop %v2807
        %v3120 = vtanh.pop %v2810
        %v3121 = vtanh.pop %v2812
        %v3122 = vtanh.pop %v2815
        %v3123 = vtanh.pop %v2817
        %v3124 = vtanh.pop %v2820
        %v3125 = vtanh.pop %v2822
        %v3126 = vtanh.pop %v2825
        %v3127 = vtanh.pop %v2827
        %v3128 = vtanh.pop %v2830
        %v3129 = vtanh.pop %v2832
        %v3130 = vtanh.pop %v2835
        %v3131 = vtanh.pop %v2837
        %v3132 = vtanh.pop %v2840
        %v3133 = vtanh.pop %v2842
        %v3134 = vtanh.pop %v2845
        %v3135 = vtanh.pop %v2847
        %v3136 = vtanh.pop %v2850
        %v3137 = vtanh.pop %v2852
        %v3138 = vtanh.pop %v2855
        %v3139 = vtanh.pop %v2857
        %v3140 = vtanh.pop %v2860
        %v3141 = vtanh.pop %v2862
        %v3142 = vtanh.pop %v2865
        %v3143 = vtanh.pop %v2867
        %v3144 = vtanh.pop %v2870
        %v3145 = vtanh.pop %v2872
        %v3146 = vtanh.pop %v2875
        %v3147 = vtanh.pop %v2877
        %v3148 = vtanh.pop %v2880
        %v3149 = vtanh.pop %v2882
        %v3150 = vtanh.pop %v2885
        %v3151 = vtanh.pop %v2887
        %v3152 = vtanh.pop %v2890
        %v3153 = vtanh.pop %v2892
        %v3154 = vtanh.pop %v2895
        %v3155 = vtanh.pop %v2897
        %v3156 = vtanh.pop %v2900
        %v3157 = vtanh.pop %v2902
        %v3158 = vtanh.pop %v2905
        %v3159 = vtanh.pop %v2907
        %v3160 = vtanh.pop %v2910
        %v3161 = vtanh.pop %v2912
        %v3162 = vtanh.pop %v2915
        %v3163 = vtanh.pop %v2917
        %v3164 = vtanh.pop %v2920
        %v3165 = vtanh.pop %v2922
        %v3166 = vtanh.pop %v2925
        %v3167 = vtanh.pop %v2927
        %v3168 = vtanh.pop %v2930
        %v3169 = vtanh.pop %v2932
        %v3170 = vtanh.pop %v2935
        %v3171 = vtanh.pop %v2937
        %v3172 = vtanh.pop %v2940
        %v3173 = vtanh.pop %v2942
        %v3174 = vtanh.pop %v2945
        %v3175 = vtanh.pop %v2947
        %v3176 = vtanh.pop %v2950
        %v3177 = vtanh.pop %v2952
        %v3178 = vtanh.pop %v2955
        %v3179 = vtanh.pop %v2957
        %v3180 = vtanh.pop %v2960
        %v3181 = vtanh.pop %v2962
        %v3182 = vtanh.pop %v2965
        %v3183 = vtanh.pop %v2967
        %v3184 = vtanh.pop %v2970
        %v3185 = vtanh.pop %v2972
        %v3186 = vtanh.pop %v2975
        %v3187 = vtanh.pop %v2977
        %v3188 = vtanh.pop %v2980
        %v3189 = vtanh.pop %v2982
        %v3190 = vtanh.pop %v2985
        %v3191 = vtanh.pop %v2987
        %v3192 = vtanh.pop %v2990
        %v3193 = vtanh.pop %v2992
        %v3194 = vtanh.pop %v2995
        %v3195 = vtanh.pop %v2997
        %v3196 = vtanh.pop %v3000
        %v3197 = vtanh.pop %v3002
        %v3198 = vtanh.pop %v3005
        %v3199 = vtanh.pop %v3007
        %v3200 = vtanh.pop %v3010
        %v3201 = vtanh.pop %v3012
        %v3202 = vtanh.pop %v3015
        %v3203 = vtanh.pop %v3017
        %v3204 = vtanh.pop %v3020
        %v3205 = vtanh.pop %v3022
        %v3206 = vtanh.pop %v3025
        %v3207 = vtanh.pop %v3027
        %v3208 = vtanh.pop %v3030
        %v3209 = vtanh.pop %v3032
        %v3210 = vtanh.pop %v3035
        %v3211 = vtanh.pop %v3037
        %v3212 = vtanh.pop %v3040
        %v3213 = vtanh.pop %v3042
        %v3214 = vtanh.pop %v3045
        %v3215 = vtanh.pop %v3047
        %v3216 = vtanh.pop %v3050
        %v3217 = vtanh.pop %v3052
        %v3218 = vtanh.pop %v3055
        %v3219 = vtanh.pop %v3057
        %v3220 = vtanh.pop %v3060
        %v3221 = vtanh.pop %v3062
        %v3222 = vtanh.pop %v3065
        %v3223 = vtanh.pop %v3067
        %v3224 = vtanh.pop %v3070
        %v3225 = vtanh.pop %v3072
        %v3226 = vtanh.pop %v3075
        %v3227 = vtanh.pop %v3077
        %v3228 = vtanh.pop %v3080
        %v3229 = vtanh.pop %v3082
        %v3230 = vtanh.pop %v3085
        %v3231 = vtanh.pop %v3087
        %v3232 = vtanh.pop %v3090
        %v3233 = vtanh.pop %v3092
        %v3234 = vtanh.pop %v3095
        %v3235 = vtanh.pop %v3097
        %v3236 = vtanh.pop %v3100
        %v3237 = vtanh.pop %v3102
        %v3238 = vtanh.pop %v3105
        %v3239 = vtanh.pop %v3107
        %v3240 = vtanh.pop %v3110
        %v3241 = vtanh.pop %v3112
        %v3242 = vpack.c.bf16 %v3115, %v3114
        %v3243 = vpack.c.bf16 %v3117, %v3116
        %v3244 = vpack.c.bf16 %v3119, %v3118
        %v3245 = vpack.c.bf16 %v3121, %v3120
        %v3246 = vpack.c.bf16 %v3123, %v3122
        %v3247 = vpack.c.bf16 %v3125, %v3124
        %v3248 = vpack.c.bf16 %v3127, %v3126
        %v3249 = vpack.c.bf16 %v3129, %v3128
        %v3250 = vpack.c.bf16 %v3131, %v3130
        %v3251 = vpack.c.bf16 %v3133, %v3132
        %v3252 = vpack.c.bf16 %v3135, %v3134
        %v3253 = vpack.c.bf16 %v3137, %v3136
        %v3254 = vpack.c.bf16 %v3139, %v3138
        %v3255 = vpack.c.bf16 %v3141, %v3140
        %v3256 = vpack.c.bf16 %v3143, %v3142
        %v3257 = vpack.c.bf16 %v3145, %v3144
        %v3258 = vpack.c.bf16 %v3147, %v3146
        %v3259 = vpack.c.bf16 %v3149, %v3148
        %v3260 = vpack.c.bf16 %v3151, %v3150
        %v3261 = vpack.c.bf16 %v3153, %v3152
        %v3262 = vpack.c.bf16 %v3155, %v3154
        %v3263 = vpack.c.bf16 %v3157, %v3156
        %v3264 = vpack.c.bf16 %v3159, %v3158
        %v3265 = vpack.c.bf16 %v3161, %v3160
        %v3266 = vpack.c.bf16 %v3163, %v3162
        %v3267 = vpack.c.bf16 %v3165, %v3164
        %v3268 = vpack.c.bf16 %v3167, %v3166
        %v3269 = vpack.c.bf16 %v3169, %v3168
        %v3270 = vpack.c.bf16 %v3171, %v3170
        %v3271 = vpack.c.bf16 %v3173, %v3172
        %v3272 = vpack.c.bf16 %v3175, %v3174
        %v3273 = vpack.c.bf16 %v3177, %v3176
        %v3274 = vpack.c.bf16 %v3179, %v3178
        %v3275 = vpack.c.bf16 %v3181, %v3180
        %v3276 = vpack.c.bf16 %v3183, %v3182
        %v3277 = vpack.c.bf16 %v3185, %v3184
        %v3278 = vpack.c.bf16 %v3187, %v3186
        %v3279 = vpack.c.bf16 %v3189, %v3188
        %v3280 = vpack.c.bf16 %v3191, %v3190
        %v3281 = vpack.c.bf16 %v3193, %v3192
        %v3282 = vpack.c.bf16 %v3195, %v3194
        %v3283 = vpack.c.bf16 %v3197, %v3196
        %v3284 = vpack.c.bf16 %v3199, %v3198
        %v3285 = vpack.c.bf16 %v3201, %v3200
        %v3286 = vpack.c.bf16 %v3203, %v3202
        %v3287 = vpack.c.bf16 %v3205, %v3204
        %v3288 = vpack.c.bf16 %v3207, %v3206
        %v3289 = vpack.c.bf16 %v3209, %v3208
        %v3290 = vpack.c.bf16 %v3211, %v3210
        %v3291 = vpack.c.bf16 %v3213, %v3212
        %v3292 = vpack.c.bf16 %v3215, %v3214
        %v3293 = vpack.c.bf16 %v3217, %v3216
        %v3294 = vpack.c.bf16 %v3219, %v3218
        %v3295 = vpack.c.bf16 %v3221, %v3220
        %v3296 = vpack.c.bf16 %v3223, %v3222
        %v3297 = vpack.c.bf16 %v3225, %v3224
        %v3298 = vpack.c.bf16 %v3227, %v3226
        %v3299 = vpack.c.bf16 %v3229, %v3228
        %v3300 = vpack.c.bf16 %v3231, %v3230
        %v3301 = vpack.c.bf16 %v3233, %v3232
        %v3302 = vpack.c.bf16 %v3235, %v3234
        %v3303 = vpack.c.bf16 %v3237, %v3236
        %v3304 = vpack.c.bf16 %v3239, %v3238
        %v3305 = vpack.c.bf16 %v3241, %v3240
        %v3306 = vld [vmem:[%s4] sm:$0xf]
        %v3307 = vld [vmem:[%s4 + $0x4] sm:$0xf]
        %v3308 = vld [vmem:[%s4 + $0x8] sm:$0xf]
        %v3309 = vld [vmem:[%s4 + $0xc] sm:$0xf]
        %v3310 = vld [vmem:[%s5] sm:$0x1]
        %v3312 = vperm.slane %v3310, 0
        %v3318 = vunpack.c.l.b16 %v3306
        %v3319 = vunpack.c.l.b16 %v3307
        %v3320 = vunpack.c.l.b16 %v3308
        %v3321 = vunpack.c.l.b16 %v3309
        %v3322 = vpack.c.b16 %v3319, %v3318
        %v3323 = vpack.c.b16 %v3321, %v3320
        %v3327 = vsel %vm2592, %v3242, 0
        %v3330 = vsel %vm2592, %v3243, 0
        %v3333 = vsel %vm2592, %v3244, 0
        %v3336 = vsel %vm2592, %v3245, 0
        %v3339 = vsel %vm2592, %v3246, 0
        %v3342 = vsel %vm2592, %v3247, 0
        %v3345 = vsel %vm2592, %v3248, 0
        %v3348 = vsel %vm2592, %v3249, 0
        %v3351 = vsel %vm2592, %v3250, 0
        %v3354 = vsel %vm2592, %v3251, 0
        %v3357 = vsel %vm2592, %v3252, 0
        %v3360 = vsel %vm2592, %v3253, 0
        %v3363 = vsel %vm2592, %v3254, 0
        %v3366 = vsel %vm2592, %v3255, 0
        %v3369 = vsel %vm2592, %v3256, 0
        %v3372 = vsel %vm2592, %v3257, 0
        %v3375 = vsel %vm2592, %v3258, 0
        %v3378 = vsel %vm2592, %v3259, 0
        %v3381 = vsel %vm2592, %v3260, 0
        %v3384 = vsel %vm2592, %v3261, 0
        %v3387 = vsel %vm2592, %v3262, 0
        %v3390 = vsel %vm2592, %v3263, 0
        %v3393 = vsel %vm2592, %v3264, 0
        %v3396 = vsel %vm2592, %v3265, 0
        %v3399 = vsel %vm2592, %v3266, 0
        %v3402 = vsel %vm2592, %v3267, 0
        %v3405 = vsel %vm2592, %v3268, 0
        %v3408 = vsel %vm2592, %v3269, 0
        %v3411 = vsel %vm2592, %v3270, 0
        %v3414 = vsel %vm2592, %v3271, 0
        %v3417 = vsel %vm2592, %v3272, 0
        %v3420 = vsel %vm2592, %v3273, 0
        %v3423 = vsel %vm2592, %v3274, 0
        %v3426 = vsel %vm2592, %v3275, 0
        %v3429 = vsel %vm2592, %v3276, 0
        %v3432 = vsel %vm2592, %v3277, 0
        %v3435 = vsel %vm2592, %v3278, 0
        %v3438 = vsel %vm2592, %v3279, 0
        %v3441 = vsel %vm2592, %v3280, 0
        %v3444 = vsel %vm2592, %v3281, 0
        %v3447 = vsel %vm2592, %v3282, 0
        %v3450 = vsel %vm2592, %v3283, 0
        %v3453 = vsel %vm2592, %v3284, 0
        %v3456 = vsel %vm2592, %v3285, 0
        %v3459 = vsel %vm2592, %v3286, 0
        %v3462 = vsel %vm2592, %v3287, 0
        %v3465 = vsel %vm2592, %v3288, 0
        %v3468 = vsel %vm2592, %v3289, 0
        %v3471 = vsel %vm2592, %v3290, 0
        %v3474 = vsel %vm2592, %v3291, 0
        %v3477 = vsel %vm2592, %v3292, 0
        %v3480 = vsel %vm2592, %v3293, 0
        %v3483 = vsel %vm2592, %v3294, 0
        %v3486 = vsel %vm2592, %v3295, 0
        %v3489 = vsel %vm2592, %v3296, 0
        %v3492 = vsel %vm2592, %v3297, 0
        %v3495 = vsel %vm2592, %v3298, 0
        %v3498 = vsel %vm2592, %v3299, 0
        %v3501 = vsel %vm2592, %v3300, 0
        %v3504 = vsel %vm2592, %v3301, 0
        %v3507 = vsel %vm2592, %v3302, 0
        %v3510 = vsel %vm2592, %v3303, 0
        %v3513 = vsel %vm2592, %v3304, 0
        %v3516 = vsel %vm2592, %v3305, 0
        %3518 = vmatpush.bf16.msra.mxu0 0
        %3519 = vmatpush.bf16.msra.mxu0 0
        %3520 = vmatpush.bf16.msra.mxu0 0
        %3521 = vmatpush.bf16.msra.mxu0 0
        %3522 = vmatpush.bf16.msra.mxu0 0
        %3523 = vmatpush.bf16.msra.mxu0 0
        %3524 = vmatpush.bf16.msra.mxu0 %v3323
        %3525 = vmatpush.bf16.msra.mxu0 %v3322
        %3526 = vmatmul.bf16.gmra.mxu0 %v3327
        %v3527 = vpop.f32.mrf.mxu0
        %v3528 = vadd.f32 %v3312, %v3527
        %v3529 = vpop.f32.mrf.mxu0
        %v3530 = vadd.f32 %v3312, %v3529
        %3531 = vmatmul.bf16.gmra.mxu0 %v3330
        %v3532 = vpop.f32.mrf.mxu0
        %v3533 = vadd.f32 %v3312, %v3532
        %v3534 = vpop.f32.mrf.mxu0
        %v3535 = vadd.f32 %v3312, %v3534
        %3536 = vmatmul.bf16.gmra.mxu0 %v3333
        %v3537 = vpop.f32.mrf.mxu0
        %v3538 = vadd.f32 %v3312, %v3537
        %v3539 = vpop.f32.mrf.mxu0
        %v3540 = vadd.f32 %v3312, %v3539
        %3541 = vmatmul.bf16.gmra.mxu0 %v3336
        %v3542 = vpop.f32.mrf.mxu0
        %v3543 = vadd.f32 %v3312, %v3542
        %v3544 = vpop.f32.mrf.mxu0
        %v3545 = vadd.f32 %v3312, %v3544
        %3546 = vmatmul.bf16.gmra.mxu0 %v3339
        %v3547 = vpop.f32.mrf.mxu0
        %v3548 = vadd.f32 %v3312, %v3547
        %v3549 = vpop.f32.mrf.mxu0
        %v3550 = vadd.f32 %v3312, %v3549
        %3551 = vmatmul.bf16.gmra.mxu0 %v3342
        %v3552 = vpop.f32.mrf.mxu0
        %v3553 = vadd.f32 %v3312, %v3552
        %v3554 = vpop.f32.mrf.mxu0
        %v3555 = vadd.f32 %v3312, %v3554
        %3556 = vmatmul.bf16.gmra.mxu0 %v3345
        %v3557 = vpop.f32.mrf.mxu0
        %v3558 = vadd.f32 %v3312, %v3557
        %v3559 = vpop.f32.mrf.mxu0
        %v3560 = vadd.f32 %v3312, %v3559
        %3561 = vmatmul.bf16.gmra.mxu0 %v3348
        %v3562 = vpop.f32.mrf.mxu0
        %v3563 = vadd.f32 %v3312, %v3562
        %v3564 = vpop.f32.mrf.mxu0
        %v3565 = vadd.f32 %v3312, %v3564
        %3566 = vmatmul.bf16.gmra.mxu0 %v3351
        %v3567 = vpop.f32.mrf.mxu0
        %v3568 = vadd.f32 %v3312, %v3567
        %v3569 = vpop.f32.mrf.mxu0
        %v3570 = vadd.f32 %v3312, %v3569
        %3571 = vmatmul.bf16.gmra.mxu0 %v3354
        %v3572 = vpop.f32.mrf.mxu0
        %v3573 = vadd.f32 %v3312, %v3572
        %v3574 = vpop.f32.mrf.mxu0
        %v3575 = vadd.f32 %v3312, %v3574
        %3576 = vmatmul.bf16.gmra.mxu0 %v3357
        %v3577 = vpop.f32.mrf.mxu0
        %v3578 = vadd.f32 %v3312, %v3577
        %v3579 = vpop.f32.mrf.mxu0
        %v3580 = vadd.f32 %v3312, %v3579
        %3581 = vmatmul.bf16.gmra.mxu0 %v3360
        %v3582 = vpop.f32.mrf.mxu0
        %v3583 = vadd.f32 %v3312, %v3582
        %v3584 = vpop.f32.mrf.mxu0
        %v3585 = vadd.f32 %v3312, %v3584
        %3586 = vmatmul.bf16.gmra.mxu0 %v3363
        %v3587 = vpop.f32.mrf.mxu0
        %v3588 = vadd.f32 %v3312, %v3587
        %v3589 = vpop.f32.mrf.mxu0
        %v3590 = vadd.f32 %v3312, %v3589
        %3591 = vmatmul.bf16.gmra.mxu0 %v3366
        %v3592 = vpop.f32.mrf.mxu0
        %v3593 = vadd.f32 %v3312, %v3592
        %v3594 = vpop.f32.mrf.mxu0
        %v3595 = vadd.f32 %v3312, %v3594
        %3596 = vmatmul.bf16.gmra.mxu0 %v3369
        %v3597 = vpop.f32.mrf.mxu0
        %v3598 = vadd.f32 %v3312, %v3597
        %v3599 = vpop.f32.mrf.mxu0
        %v3600 = vadd.f32 %v3312, %v3599
        %3601 = vmatmul.bf16.gmra.mxu0 %v3372
        %v3602 = vpop.f32.mrf.mxu0
        %v3603 = vadd.f32 %v3312, %v3602
        %v3604 = vpop.f32.mrf.mxu0
        %v3605 = vadd.f32 %v3312, %v3604
        %3606 = vmatmul.bf16.gmra.mxu0 %v3375
        %v3607 = vpop.f32.mrf.mxu0
        %v3608 = vadd.f32 %v3312, %v3607
        %v3609 = vpop.f32.mrf.mxu0
        %v3610 = vadd.f32 %v3312, %v3609
        %3611 = vmatmul.bf16.gmra.mxu0 %v3378
        %v3612 = vpop.f32.mrf.mxu0
        %v3613 = vadd.f32 %v3312, %v3612
        %v3614 = vpop.f32.mrf.mxu0
        %v3615 = vadd.f32 %v3312, %v3614
        %3616 = vmatmul.bf16.gmra.mxu0 %v3381
        %v3617 = vpop.f32.mrf.mxu0
        %v3618 = vadd.f32 %v3312, %v3617
        %v3619 = vpop.f32.mrf.mxu0
        %v3620 = vadd.f32 %v3312, %v3619
        %3621 = vmatmul.bf16.gmra.mxu0 %v3384
        %v3622 = vpop.f32.mrf.mxu0
        %v3623 = vadd.f32 %v3312, %v3622
        %v3624 = vpop.f32.mrf.mxu0
        %v3625 = vadd.f32 %v3312, %v3624
        %3626 = vmatmul.bf16.gmra.mxu0 %v3387
        %v3627 = vpop.f32.mrf.mxu0
        %v3628 = vadd.f32 %v3312, %v3627
        %v3629 = vpop.f32.mrf.mxu0
        %v3630 = vadd.f32 %v3312, %v3629
        %3631 = vmatmul.bf16.gmra.mxu0 %v3390
        %v3632 = vpop.f32.mrf.mxu0
        %v3633 = vadd.f32 %v3312, %v3632
        %v3634 = vpop.f32.mrf.mxu0
        %v3635 = vadd.f32 %v3312, %v3634
        %3636 = vmatmul.bf16.gmra.mxu0 %v3393
        %v3637 = vpop.f32.mrf.mxu0
        %v3638 = vadd.f32 %v3312, %v3637
        %v3639 = vpop.f32.mrf.mxu0
        %v3640 = vadd.f32 %v3312, %v3639
        %3641 = vmatmul.bf16.gmra.mxu0 %v3396
        %v3642 = vpop.f32.mrf.mxu0
        %v3643 = vadd.f32 %v3312, %v3642
        %v3644 = vpop.f32.mrf.mxu0
        %v3645 = vadd.f32 %v3312, %v3644
        %3646 = vmatmul.bf16.gmra.mxu0 %v3399
        %v3647 = vpop.f32.mrf.mxu0
        %v3648 = vadd.f32 %v3312, %v3647
        %v3649 = vpop.f32.mrf.mxu0
        %v3650 = vadd.f32 %v3312, %v3649
        %3651 = vmatmul.bf16.gmra.mxu0 %v3402
        %v3652 = vpop.f32.mrf.mxu0
        %v3653 = vadd.f32 %v3312, %v3652
        %v3654 = vpop.f32.mrf.mxu0
        %v3655 = vadd.f32 %v3312, %v3654
        %3656 = vmatmul.bf16.gmra.mxu0 %v3405
        %v3657 = vpop.f32.mrf.mxu0
        %v3658 = vadd.f32 %v3312, %v3657
        %v3659 = vpop.f32.mrf.mxu0
        %v3660 = vadd.f32 %v3312, %v3659
        %3661 = vmatmul.bf16.gmra.mxu0 %v3408
        %v3662 = vpop.f32.mrf.mxu0
        %v3663 = vadd.f32 %v3312, %v3662
        %v3664 = vpop.f32.mrf.mxu0
        %v3665 = vadd.f32 %v3312, %v3664
        %3666 = vmatmul.bf16.gmra.mxu0 %v3411
        %v3667 = vpop.f32.mrf.mxu0
        %v3668 = vadd.f32 %v3312, %v3667
        %v3669 = vpop.f32.mrf.mxu0
        %v3670 = vadd.f32 %v3312, %v3669
        %3671 = vmatmul.bf16.gmra.mxu0 %v3414
        %v3672 = vpop.f32.mrf.mxu0
        %v3673 = vadd.f32 %v3312, %v3672
        %v3674 = vpop.f32.mrf.mxu0
        %v3675 = vadd.f32 %v3312, %v3674
        %3676 = vmatmul.bf16.gmra.mxu0 %v3417
        %v3677 = vpop.f32.mrf.mxu0
        %v3678 = vadd.f32 %v3312, %v3677
        %v3679 = vpop.f32.mrf.mxu0
        %v3680 = vadd.f32 %v3312, %v3679
        %3681 = vmatmul.bf16.gmra.mxu0 %v3420
        %v3682 = vpop.f32.mrf.mxu0
        %v3683 = vadd.f32 %v3312, %v3682
        %v3684 = vpop.f32.mrf.mxu0
        %v3685 = vadd.f32 %v3312, %v3684
        %3686 = vmatmul.bf16.gmra.mxu0 %v3423
        %v3687 = vpop.f32.mrf.mxu0
        %v3688 = vadd.f32 %v3312, %v3687
        %v3689 = vpop.f32.mrf.mxu0
        %v3690 = vadd.f32 %v3312, %v3689
        %3691 = vmatmul.bf16.gmra.mxu0 %v3426
        %v3692 = vpop.f32.mrf.mxu0
        %v3693 = vadd.f32 %v3312, %v3692
        %v3694 = vpop.f32.mrf.mxu0
        %v3695 = vadd.f32 %v3312, %v3694
        %3696 = vmatmul.bf16.gmra.mxu0 %v3429
        %v3697 = vpop.f32.mrf.mxu0
        %v3698 = vadd.f32 %v3312, %v3697
        %v3699 = vpop.f32.mrf.mxu0
        %v3700 = vadd.f32 %v3312, %v3699
        %3701 = vmatmul.bf16.gmra.mxu0 %v3432
        %v3702 = vpop.f32.mrf.mxu0
        %v3703 = vadd.f32 %v3312, %v3702
        %v3704 = vpop.f32.mrf.mxu0
        %v3705 = vadd.f32 %v3312, %v3704
        %3706 = vmatmul.bf16.gmra.mxu0 %v3435
        %v3707 = vpop.f32.mrf.mxu0
        %v3708 = vadd.f32 %v3312, %v3707
        %v3709 = vpop.f32.mrf.mxu0
        %v3710 = vadd.f32 %v3312, %v3709
        %3711 = vmatmul.bf16.gmra.mxu0 %v3438
        %v3712 = vpop.f32.mrf.mxu0
        %v3713 = vadd.f32 %v3312, %v3712
        %v3714 = vpop.f32.mrf.mxu0
        %v3715 = vadd.f32 %v3312, %v3714
        %3716 = vmatmul.bf16.gmra.mxu0 %v3441
        %v3717 = vpop.f32.mrf.mxu0
        %v3718 = vadd.f32 %v3312, %v3717
        %v3719 = vpop.f32.mrf.mxu0
        %v3720 = vadd.f32 %v3312, %v3719
        %3721 = vmatmul.bf16.gmra.mxu0 %v3444
        %v3722 = vpop.f32.mrf.mxu0
        %v3723 = vadd.f32 %v3312, %v3722
        %v3724 = vpop.f32.mrf.mxu0
        %v3725 = vadd.f32 %v3312, %v3724
        %3726 = vmatmul.bf16.gmra.mxu0 %v3447
        %v3727 = vpop.f32.mrf.mxu0
        %v3728 = vadd.f32 %v3312, %v3727
        %v3729 = vpop.f32.mrf.mxu0
        %v3730 = vadd.f32 %v3312, %v3729
        %3731 = vmatmul.bf16.gmra.mxu0 %v3450
        %v3732 = vpop.f32.mrf.mxu0
        %v3733 = vadd.f32 %v3312, %v3732
        %v3734 = vpop.f32.mrf.mxu0
        %v3735 = vadd.f32 %v3312, %v3734
        %3736 = vmatmul.bf16.gmra.mxu0 %v3453
        %v3737 = vpop.f32.mrf.mxu0
        %v3738 = vadd.f32 %v3312, %v3737
        %v3739 = vpop.f32.mrf.mxu0
        %v3740 = vadd.f32 %v3312, %v3739
        %3741 = vmatmul.bf16.gmra.mxu0 %v3456
        %v3742 = vpop.f32.mrf.mxu0
        %v3743 = vadd.f32 %v3312, %v3742
        %v3744 = vpop.f32.mrf.mxu0
        %v3745 = vadd.f32 %v3312, %v3744
        %3746 = vmatmul.bf16.gmra.mxu0 %v3459
        %v3747 = vpop.f32.mrf.mxu0
        %v3748 = vadd.f32 %v3312, %v3747
        %v3749 = vpop.f32.mrf.mxu0
        %v3750 = vadd.f32 %v3312, %v3749
        %3751 = vmatmul.bf16.gmra.mxu0 %v3462
        %v3752 = vpop.f32.mrf.mxu0
        %v3753 = vadd.f32 %v3312, %v3752
        %v3754 = vpop.f32.mrf.mxu0
        %v3755 = vadd.f32 %v3312, %v3754
        %3756 = vmatmul.bf16.gmra.mxu0 %v3465
        %v3757 = vpop.f32.mrf.mxu0
        %v3758 = vadd.f32 %v3312, %v3757
        %v3759 = vpop.f32.mrf.mxu0
        %v3760 = vadd.f32 %v3312, %v3759
        %3761 = vmatmul.bf16.gmra.mxu0 %v3468
        %v3762 = vpop.f32.mrf.mxu0
        %v3763 = vadd.f32 %v3312, %v3762
        %v3764 = vpop.f32.mrf.mxu0
        %v3765 = vadd.f32 %v3312, %v3764
        %3766 = vmatmul.bf16.gmra.mxu0 %v3471
        %v3767 = vpop.f32.mrf.mxu0
        %v3768 = vadd.f32 %v3312, %v3767
        %v3769 = vpop.f32.mrf.mxu0
        %v3770 = vadd.f32 %v3312, %v3769
        %3771 = vmatmul.bf16.gmra.mxu0 %v3474
        %v3772 = vpop.f32.mrf.mxu0
        %v3773 = vadd.f32 %v3312, %v3772
        %v3774 = vpop.f32.mrf.mxu0
        %v3775 = vadd.f32 %v3312, %v3774
        %3776 = vmatmul.bf16.gmra.mxu0 %v3477
        %v3777 = vpop.f32.mrf.mxu0
        %v3778 = vadd.f32 %v3312, %v3777
        %v3779 = vpop.f32.mrf.mxu0
        %v3780 = vadd.f32 %v3312, %v3779
        %3781 = vmatmul.bf16.gmra.mxu0 %v3480
        %v3782 = vpop.f32.mrf.mxu0
        %v3783 = vadd.f32 %v3312, %v3782
        %v3784 = vpop.f32.mrf.mxu0
        %v3785 = vadd.f32 %v3312, %v3784
        %3786 = vmatmul.bf16.gmra.mxu0 %v3483
        %v3787 = vpop.f32.mrf.mxu0
        %v3788 = vadd.f32 %v3312, %v3787
        %v3789 = vpop.f32.mrf.mxu0
        %v3790 = vadd.f32 %v3312, %v3789
        %3791 = vmatmul.bf16.gmra.mxu0 %v3486
        %v3792 = vpop.f32.mrf.mxu0
        %v3793 = vadd.f32 %v3312, %v3792
        %v3794 = vpop.f32.mrf.mxu0
        %v3795 = vadd.f32 %v3312, %v3794
        %3796 = vmatmul.bf16.gmra.mxu0 %v3489
        %v3797 = vpop.f32.mrf.mxu0
        %v3798 = vadd.f32 %v3312, %v3797
        %v3799 = vpop.f32.mrf.mxu0
        %v3800 = vadd.f32 %v3312, %v3799
        %3801 = vmatmul.bf16.gmra.mxu0 %v3492
        %v3802 = vpop.f32.mrf.mxu0
        %v3803 = vadd.f32 %v3312, %v3802
        %v3804 = vpop.f32.mrf.mxu0
        %v3805 = vadd.f32 %v3312, %v3804
        %3806 = vmatmul.bf16.gmra.mxu0 %v3495
        %v3807 = vpop.f32.mrf.mxu0
        %v3808 = vadd.f32 %v3312, %v3807
        %v3809 = vpop.f32.mrf.mxu0
        %v3810 = vadd.f32 %v3312, %v3809
        %3811 = vmatmul.bf16.gmra.mxu0 %v3498
        %v3812 = vpop.f32.mrf.mxu0
        %v3813 = vadd.f32 %v3312, %v3812
        %v3814 = vpop.f32.mrf.mxu0
        %v3815 = vadd.f32 %v3312, %v3814
        %3816 = vmatmul.bf16.gmra.mxu0 %v3501
        %v3817 = vpop.f32.mrf.mxu0
        %v3818 = vadd.f32 %v3312, %v3817
        %v3819 = vpop.f32.mrf.mxu0
        %v3820 = vadd.f32 %v3312, %v3819
        %3821 = vmatmul.bf16.gmra.mxu0 %v3504
        %v3822 = vpop.f32.mrf.mxu0
        %v3823 = vadd.f32 %v3312, %v3822
        %v3824 = vpop.f32.mrf.mxu0
        %v3825 = vadd.f32 %v3312, %v3824
        %3826 = vmatmul.bf16.gmra.mxu0 %v3507
        %v3827 = vpop.f32.mrf.mxu0
        %v3828 = vadd.f32 %v3312, %v3827
        %v3829 = vpop.f32.mrf.mxu0
        %v3830 = vadd.f32 %v3312, %v3829
        %3831 = vmatmul.bf16.gmra.mxu0 %v3510
        %v3832 = vpop.f32.mrf.mxu0
        %v3833 = vadd.f32 %v3312, %v3832
        %v3834 = vpop.f32.mrf.mxu0
        %v3835 = vadd.f32 %v3312, %v3834
        %3836 = vmatmul.bf16.gmra.mxu0 %v3513
        %v3837 = vpop.f32.mrf.mxu0
        %v3838 = vadd.f32 %v3312, %v3837
        %v3839 = vpop.f32.mrf.mxu0
        %v3840 = vadd.f32 %v3312, %v3839
        %3841 = vmatmul.bf16.gmra.mxu0 %v3516
        %v3842 = vpop.f32.mrf.mxu0
        %v3843 = vadd.f32 %v3312, %v3842
        %v3844 = vpop.f32.mrf.mxu0
        %v3845 = vadd.f32 %v3312, %v3844
        %3846 = vdwg.mxu0
        %3847 = vst [vmem:[%s287] sm:$0xff] %v3528
        %3848 = vst [vmem:[%s287 + $0x8] sm:$0xff] %v3530
        %3849 = vst [vmem:[%s287 + $0x10] sm:$0xff] %v3533
        %3850 = vst [vmem:[%s287 + $0x18] sm:$0xff] %v3535
        %3851 = vst [vmem:[%s287 + $0x20] sm:$0xff] %v3538
        %3852 = vst [vmem:[%s287 + $0x28] sm:$0xff] %v3540
        %3853 = vst [vmem:[%s287 + $0x30] sm:$0xff] %v3543
        %3854 = vst [vmem:[%s287 + $0x38] sm:$0xff] %v3545
        %3855 = vst [vmem:[%s287 + $0x40] sm:$0xff] %v3548
        %3856 = vst [vmem:[%s287 + $0x48] sm:$0xff] %v3550
        %3857 = vst [vmem:[%s287 + $0x50] sm:$0xff] %v3553
        %3858 = vst [vmem:[%s287 + $0x58] sm:$0xff] %v3555
        %3859 = vst [vmem:[%s287 + $0x60] sm:$0xff] %v3558
        %3860 = vst [vmem:[%s287 + $0x68] sm:$0xff] %v3560
        %3861 = vst [vmem:[%s287 + $0x70] sm:$0xff] %v3563
        %3862 = vst [vmem:[%s287 + $0x78] sm:$0xff] %v3565
        %3863 = vst [vmem:[%s287 + $0x80] sm:$0xff] %v3568
        %3864 = vst [vmem:[%s287 + $0x88] sm:$0xff] %v3570
        %3865 = vst [vmem:[%s287 + $0x90] sm:$0xff] %v3573
        %3866 = vst [vmem:[%s287 + $0x98] sm:$0xff] %v3575
        %3867 = vst [vmem:[%s287 + $0xa0] sm:$0xff] %v3578
        %3868 = vst [vmem:[%s287 + $0xa8] sm:$0xff] %v3580
        %3869 = vst [vmem:[%s287 + $0xb0] sm:$0xff] %v3583
        %3870 = vst [vmem:[%s287 + $0xb8] sm:$0xff] %v3585
        %3871 = vst [vmem:[%s287 + $0xc0] sm:$0xff] %v3588
        %3872 = vst [vmem:[%s287 + $0xc8] sm:$0xff] %v3590
        %3873 = vst [vmem:[%s287 + $0xd0] sm:$0xff] %v3593
        %3874 = vst [vmem:[%s287 + $0xd8] sm:$0xff] %v3595
        %3875 = vst [vmem:[%s287 + $0xe0] sm:$0xff] %v3598
        %3876 = vst [vmem:[%s287 + $0xe8] sm:$0xff] %v3600
        %3877 = vst [vmem:[%s287 + $0xf0] sm:$0xff] %v3603
        %3878 = vst [vmem:[%s287 + $0xf8] sm:$0xff] %v3605
        %3879 = vst [vmem:[%s287 + $0x100] sm:$0xff] %v3608
        %3880 = vst [vmem:[%s287 + $0x108] sm:$0xff] %v3610
        %3881 = vst [vmem:[%s287 + $0x110] sm:$0xff] %v3613
        %3882 = vst [vmem:[%s287 + $0x118] sm:$0xff] %v3615
        %3883 = vst [vmem:[%s287 + $0x120] sm:$0xff] %v3618
        %3884 = vst [vmem:[%s287 + $0x128] sm:$0xff] %v3620
        %3885 = vst [vmem:[%s287 + $0x130] sm:$0xff] %v3623
        %3886 = vst [vmem:[%s287 + $0x138] sm:$0xff] %v3625
        %3887 = vst [vmem:[%s287 + $0x140] sm:$0xff] %v3628
        %3888 = vst [vmem:[%s287 + $0x148] sm:$0xff] %v3630
        %3889 = vst [vmem:[%s287 + $0x150] sm:$0xff] %v3633
        %3890 = vst [vmem:[%s287 + $0x158] sm:$0xff] %v3635
        %3891 = vst [vmem:[%s287 + $0x160] sm:$0xff] %v3638
        %3892 = vst [vmem:[%s287 + $0x168] sm:$0xff] %v3640
        %3893 = vst [vmem:[%s287 + $0x170] sm:$0xff] %v3643
        %3894 = vst [vmem:[%s287 + $0x178] sm:$0xff] %v3645
        %3895 = vst [vmem:[%s287 + $0x180] sm:$0xff] %v3648
        %3896 = vst [vmem:[%s287 + $0x188] sm:$0xff] %v3650
        %3897 = vst [vmem:[%s287 + $0x190] sm:$0xff] %v3653
        %3898 = vst [vmem:[%s287 + $0x198] sm:$0xff] %v3655
        %3899 = vst [vmem:[%s287 + $0x1a0] sm:$0xff] %v3658
        %3900 = vst [vmem:[%s287 + $0x1a8] sm:$0xff] %v3660
        %3901 = vst [vmem:[%s287 + $0x1b0] sm:$0xff] %v3663
        %3902 = vst [vmem:[%s287 + $0x1b8] sm:$0xff] %v3665
        %3903 = vst [vmem:[%s287 + $0x1c0] sm:$0xff] %v3668
        %3904 = vst [vmem:[%s287 + $0x1c8] sm:$0xff] %v3670
        %3905 = vst [vmem:[%s287 + $0x1d0] sm:$0xff] %v3673
        %3906 = vst [vmem:[%s287 + $0x1d8] sm:$0xff] %v3675
        %3907 = vst [vmem:[%s287 + $0x1e0] sm:$0xff] %v3678
        %3908 = vst [vmem:[%s287 + $0x1e8] sm:$0xff] %v3680
        %3909 = vst [vmem:[%s287 + $0x1f0] sm:$0xff] %v3683
        %3910 = vst [vmem:[%s287 + $0x1f8] sm:$0xff] %v3685
        %3911 = vst [vmem:[%s287 + $0x200] sm:$0xff] %v3688
        %3912 = vst [vmem:[%s287 + $0x208] sm:$0xff] %v3690
        %3913 = vst [vmem:[%s287 + $0x210] sm:$0xff] %v3693
        %3914 = vst [vmem:[%s287 + $0x218] sm:$0xff] %v3695
        %3915 = vst [vmem:[%s287 + $0x220] sm:$0xff] %v3698
        %3916 = vst [vmem:[%s287 + $0x228] sm:$0xff] %v3700
        %3917 = vst [vmem:[%s287 + $0x230] sm:$0xff] %v3703
        %3918 = vst [vmem:[%s287 + $0x238] sm:$0xff] %v3705
        %3919 = vst [vmem:[%s287 + $0x240] sm:$0xff] %v3708
        %3920 = vst [vmem:[%s287 + $0x248] sm:$0xff] %v3710
        %3921 = vst [vmem:[%s287 + $0x250] sm:$0xff] %v3713
        %3922 = vst [vmem:[%s287 + $0x258] sm:$0xff] %v3715
        %3923 = vst [vmem:[%s287 + $0x260] sm:$0xff] %v3718
        %3924 = vst [vmem:[%s287 + $0x268] sm:$0xff] %v3720
        %3925 = vst [vmem:[%s287 + $0x270] sm:$0xff] %v3723
        %3926 = vst [vmem:[%s287 + $0x278] sm:$0xff] %v3725
        %3927 = vst [vmem:[%s287 + $0x280] sm:$0xff] %v3728
        %3928 = vst [vmem:[%s287 + $0x288] sm:$0xff] %v3730
        %3929 = vst [vmem:[%s287 + $0x290] sm:$0xff] %v3733
        %3930 = vst [vmem:[%s287 + $0x298] sm:$0xff] %v3735
        %3931 = vst [vmem:[%s287 + $0x2a0] sm:$0xff] %v3738
        %3932 = vst [vmem:[%s287 + $0x2a8] sm:$0xff] %v3740
        %3933 = vst [vmem:[%s287 + $0x2b0] sm:$0xff] %v3743
        %3934 = vst [vmem:[%s287 + $0x2b8] sm:$0xff] %v3745
        %3935 = vst [vmem:[%s287 + $0x2c0] sm:$0xff] %v3748
        %3936 = vst [vmem:[%s287 + $0x2c8] sm:$0xff] %v3750
        %3937 = vst [vmem:[%s287 + $0x2d0] sm:$0xff] %v3753
        %3938 = vst [vmem:[%s287 + $0x2d8] sm:$0xff] %v3755
        %3939 = vst [vmem:[%s287 + $0x2e0] sm:$0xff] %v3758
        %3940 = vst [vmem:[%s287 + $0x2e8] sm:$0xff] %v3760
        %3941 = vst [vmem:[%s287 + $0x2f0] sm:$0xff] %v3763
        %3942 = vst [vmem:[%s287 + $0x2f8] sm:$0xff] %v3765
        %3943 = vst [vmem:[%s287 + $0x300] sm:$0xff] %v3768
        %3944 = vst [vmem:[%s287 + $0x308] sm:$0xff] %v3770
        %3945 = vst [vmem:[%s287 + $0x310] sm:$0xff] %v3773
        %3946 = vst [vmem:[%s287 + $0x318] sm:$0xff] %v3775
        %3947 = vst [vmem:[%s287 + $0x320] sm:$0xff] %v3778
        %3948 = vst [vmem:[%s287 + $0x328] sm:$0xff] %v3780
        %3949 = vst [vmem:[%s287 + $0x330] sm:$0xff] %v3783
        %3950 = vst [vmem:[%s287 + $0x338] sm:$0xff] %v3785
        %3951 = vst [vmem:[%s287 + $0x340] sm:$0xff] %v3788
        %3952 = vst [vmem:[%s287 + $0x348] sm:$0xff] %v3790
        %3953 = vst [vmem:[%s287 + $0x350] sm:$0xff] %v3793
        %3954 = vst [vmem:[%s287 + $0x358] sm:$0xff] %v3795
        %3955 = vst [vmem:[%s287 + $0x360] sm:$0xff] %v3798
        %3956 = vst [vmem:[%s287 + $0x368] sm:$0xff] %v3800
        %3957 = vst [vmem:[%s287 + $0x370] sm:$0xff] %v3803
        %3958 = vst [vmem:[%s287 + $0x378] sm:$0xff] %v3805
        %3959 = vst [vmem:[%s287 + $0x380] sm:$0xff] %v3808
        %3960 = vst [vmem:[%s287 + $0x388] sm:$0xff] %v3810
        %3961 = vst [vmem:[%s287 + $0x390] sm:$0xff] %v3813
        %3962 = vst [vmem:[%s287 + $0x398] sm:$0xff] %v3815
        %3963 = vst [vmem:[%s287 + $0x3a0] sm:$0xff] %v3818
        %3964 = vst [vmem:[%s287 + $0x3a8] sm:$0xff] %v3820
        %3965 = vst [vmem:[%s287 + $0x3b0] sm:$0xff] %v3823
        %3966 = vst [vmem:[%s287 + $0x3b8] sm:$0xff] %v3825
        %3967 = vst [vmem:[%s287 + $0x3c0] sm:$0xff] %v3828
        %3968 = vst [vmem:[%s287 + $0x3c8] sm:$0xff] %v3830
        %3969 = vst [vmem:[%s287 + $0x3d0] sm:$0xff] %v3833
        %3970 = vst [vmem:[%s287 + $0x3d8] sm:$0xff] %v3835
        %3971 = vst [vmem:[%s287 + $0x3e0] sm:$0xff] %v3838
        %3972 = vst [vmem:[%s287 + $0x3e8] sm:$0xff] %v3840
        %3973 = vst [vmem:[%s287 + $0x3f0] sm:$0xff] %v3843
        %3974 = vst [vmem:[%s287 + $0x3f8] sm:$0xff] %v3845
        %s3975 = smul.u32 128, %s23
        %p3976 = scmp.lt.s32.totalorder %s3975, 255
        %s3977 = scalar_select %p3976, %s3975, 255
        %s3978 = smul.addr %s3977, 8
        %s3979 = scalar_lea.vmem %s6, %s3978
        %s3980 = sand.u32 %s188, 1
        %s3981 = scalar_lea.sflag [#allocation5], %s3980
        %s3982 = sand.u32 %s188, 1
        %s3983 = smul.addr %s3982, 8
        %s3984 = scalar_lea.vmem [#allocation4], %s3983
        // Predicated region
        $region45: #{masked_language_model_forward.1} parent=43 // pred_check
          %p3985 = pneg %p172
        $region46: #{masked_language_model_forward.1} parent=43 // pred_check_branch
          %3987 = sbr.rel (%p3985) target = $region48
        $region47: #{masked_language_model_forward.1} parent=43 // pred_region
          %s3988 = smul.u32 128, %s23
        $region48: #{masked_language_model_forward.1} parent=43 // pred_fallthru
          _
        // Predicated region
        $region49: #{masked_language_model_forward.1} parent=43 // pred_check
          %p3989 = pneg %p198
        $region50: #{masked_language_model_forward.1} parent=43 // pred_check_branch
          %3991 = sbr.rel (%p3989) target = $region52
        $region51: #{masked_language_model_forward.1} parent=43 // pred_region
          %3993 = vsyncadd %s3981, 0
          %s3994 = smul.addr %s23, 8
          %s3995 = scalar_lea.hbm %s7, %s3994
          %s3997 = sshll.u32 %s3984, 4
          %s3998 = int_to_ptr.vmem [resolvable:$true] %s3997
          %s3999 = sshll.u32 %s3995, 4
          %s4000 = int_to_ptr.hbm [resolvable:$true] %s3999
          %4002 = dma.vmem_to_hbm [thread:$0]  %s3998, 128, %s4000, %s3981
        $region52: #{masked_language_model_forward.1} parent=43 // pred_fallthru
          _
      $region44: #{masked_language_model_forward.1} parent=5 // pred_fallthru
        _
      %p4003 = scmp.le.s32.totalorder 2, %s18
      // Predicated region
      $region53: #{masked_language_model_forward.1} parent=5 // pred_check
        %p4004 = pneg %p4003
      $region54: #{masked_language_model_forward.1} parent=5 // pred_check_branch
        %4006 = sbr.rel (%p4004) target = $region56
      $region55: #{masked_language_model_forward.1} parent=5 // pred_region
        %s4007 = ssub.s32 %s18, 2
        // Predicated region
        $region57: #{masked_language_model_forward.1} parent=55 // pred_check
          %p4008 = pneg %p178
        $region58: #{masked_language_model_forward.1} parent=55 // pred_check_branch
          %4010 = sbr.rel (%p4008) target = $region60
        $region59: #{masked_language_model_forward.1} parent=55 // pred_region
          %s4011 = smul.u32 128, %s24
          %p4012 = scmp.lt.s32.totalorder %s4011, 255
          %s4013 = scalar_select %p4012, %s4011, 255
          %s4014 = smul.addr %s4013, 8
          %s4015 = scalar_lea.vmem %s6, %s4014
        $region60: #{masked_language_model_forward.1} parent=55 // pred_fallthru
          _
        // Predicated region
        $region61: #{masked_language_model_forward.1} parent=55 // pred_check
          %p4016 = pneg %p204
        $region62: #{masked_language_model_forward.1} parent=55 // pred_check_branch
          %4018 = sbr.rel (%p4016) target = $region64
        $region63: #{masked_language_model_forward.1} parent=55 // pred_region
          %s4019 = sand.u32 %s189, 1
          %s4020 = scalar_lea.sflag [#allocation5], %s4019
          %s4021 = sand.u32 %s189, 1
          %s4022 = smul.addr %s4021, 8
          %s4023 = scalar_lea.vmem [#allocation4], %s4022
          %4025 = dma.done %s4020, 128
        $region64: #{masked_language_model_forward.1} parent=55 // pred_fallthru
          _
      $region56: #{masked_language_model_forward.1} parent=5 // pred_fallthru
        _
    $region6: #{masked_language_model_forward.1} parent=1 // loop_footer
      %s22 = sadd.s32 1, %s18
    $region7: #{masked_language_model_forward.1} parent=1 // loop_footer_branch
      %17 = sbr.rel target = $region3
    $region8: #{masked_language_model_forward.1} parent=1 // loop_exit
      _
    %4026 = vsyncpa [#allocation5], 1
    %s4027 = scalar_lea.sflag [#allocation5], 1
    %4028 = vsyncpa %s4027, 1

</llo_original>
